<compile_context>
chip_gen: v6e
topology: v6e:2x2x1
jax: 0.10.0
libtpu: 0.0.40
codegen_flags: <defaults>
</compile_context>

<pallas_src>
import numpy as np
import jax
import jax.numpy as jnp
from jax.experimental import pallas as pl
from jax.experimental.pallas import tpu as pltpu

NEG_SLOPE = 0.2


def _leaky(x):
    return jnp.where(x > 0, x, NEG_SLOPE * x)


# ---------------------------------------------------------------------------
# Fused kernel, grid=(2,) over conv1-channel groups (4 channels per group)
#   g==0 : Linear(8,27)+LReLU -> Linear(27,1536 padded)+LReLU  (MXU)
#          scatter 12 aligned chunks -> x1 (12,128), p = Uh @ x1 (MXU)
#   each g: rc = p_bf16 @ Vf_group_bf16  (one wide MXU matmul, conv1-width +
#           width-upsample folded host-side), per-channel a1 = leaky(conv1),
#           conv2 taps accumulated into 3 dw-partial sums (VPU, f32)
#   g==last: combine partials, + bias, sigmoid, crop last col, * -8
# ---------------------------------------------------------------------------
def nndc_kernel(x_ref, w1_ref, b1_ref, w2_ref, b2_ref, uh_ref, vf_ref,
                cb1_ref, cw2_ref, cb2_ref, o_ref,
                x1_s, p_s, rc_s, a1_s, acc0_s, acc1_s, acc2_s):
    g = pl.program_id(0)

    # ---- first step: MLP + height upsample, zero the conv2 accumulators ----
    @pl.when(g == 0)
    def _():
        h1 = _leaky(jnp.dot(x_ref[...], w1_ref[...],
                            preferred_element_type=jnp.float32) + b1_ref[...])   # (1,27)
        z = _leaky(jnp.dot(h1, w2_ref[...],
                           preferred_element_type=jnp.float32) + b2_ref[...])    # (1,1536)
        # (1,876)->(12,73) view: w2/b2 are zero-padded so every chunk is a
        # 128-aligned, full-vreg slice; pad lanes are exactly 0 (leaky(0)=0).
        for r in range(12):
            x1_s[r:r + 1, :] = z[:, 128 * r:128 * (r + 1)]
        # height upsample as one small MXU matmul
        p = jnp.dot(uh_ref[...], x1_s[...], preferred_element_type=jnp.float32)  # (36,128)
        p_s[...] = p.astype(jnp.bfloat16)
        acc0_s[...] = jnp.zeros_like(acc0_s)
        acc1_s[...] = jnp.zeros_like(acc1_s)
        acc2_s[...] = jnp.zeros_like(acc2_s)

    # ---- one wide bf16 MXU matmul for the whole channel group --------------
    # vf_ref block: (128, 4*768); rows 73..127 are zero (pad), columns are
    # 4 channels x (3 dh-blocks of 256 lanes, conv1 width taps folded in).
    rc_s[...] = jnp.dot(p_s[...], vf_ref[...],
                        preferred_element_type=jnp.float32)                      # (36,3072)

    acc0 = acc0_s[...]
    acc1 = acc1_s[...]
    acc2 = acc2_s[...]

    for cl in range(4):                       # local channel within the group
        c = g * 4 + cl                        # global conv1 channel (traced)
        base = cl * 768
        # conv1 = sum over dh of the dh-shifted rc blocks (Ref slices -> loads)
        a1_s[...] = _leaky(rc_s[0:34, base:base + 256]
                           + rc_s[1:35, base + 256:base + 512]
                           + rc_s[2:36, base + 512:base + 768]
                           + cb1_ref[c])                                          # (34,256)
        for dh in range(3):
            rows = a1_s[dh:dh + 32, :]                                            # (32,256)
            k = c * 9 + dh * 3
            acc0 = acc0 + cw2_ref[k + 0] * rows
            acc1 = acc1 + cw2_ref[k + 1] * rows
            acc2 = acc2 + cw2_ref[k + 2] * rows

    acc0_s[...] = acc0
    acc1_s[...] = acc1
    acc2_s[...] = acc2

    # ---- last step: combine dw-partials, sigmoid, crop, scale --------------
    @pl.when(g == pl.num_programs(0) - 1)
    def _():
        conv2 = acc0[:, 0:214] + acc1[:, 1:215] + acc2[:, 2:216]                  # (32,214)
        y = jax.nn.sigmoid(conv2 + cb2_ref[0])
        o_ref[0, 0, :, :] = y * (-8.0)


# ------------------------------- wrapper -----------------------------------
def nndc_forward(x, params):
    def _full(shape):
        return pl.BlockSpec(shape, lambda g: (0,) * len(shape))

    smem = pl.BlockSpec(memory_space=pltpu.MemorySpace.SMEM)

    return pl.pallas_call(
        nndc_kernel,
        grid=(2,),
        out_shape=jax.ShapeDtypeStruct((1, 1, 32, 214), jnp.float32),
        in_specs=[
            _full((1, 8)),                                   # x
            _full((8, 27)),                                  # w1
            _full((1, 27)),                                  # b1
            _full((27, 1536)),                               # w2 (zero-padded)
            _full((1, 1536)),                                # b2 (zero-padded)
            _full((36, 12)),                                 # Uh
            pl.BlockSpec((128, 3072), lambda g: (g, 0)),     # Vf (bf16), pipelined
            smem,                                            # cb1 (8,)
            smem,                                            # cw2_flat (72,)
            smem,                                            # cb2 (1,)
        ],
        out_specs=pl.BlockSpec((1, 1, 32, 214), lambda g: (0, 0, 0, 0)),
        scratch_shapes=[
            pltpu.VMEM((12, 128), jnp.float32),              # x1
            pltpu.VMEM((36, 128), jnp.bfloat16),             # p (bf16 MXU operand)
            pltpu.VMEM((36, 3072), jnp.float32),             # rc
            pltpu.VMEM((34, 256), jnp.float32),              # a1
            pltpu.VMEM((32, 256), jnp.float32),              # acc dw=0
            pltpu.VMEM((32, 256), jnp.float32),              # acc dw=1
            pltpu.VMEM((32, 256), jnp.float32),              # acc dw=2
        ],
        compiler_params=pltpu.CompilerParams(
            dimension_semantics=("arbitrary",)),
        cost_estimate=pl.CostEstimate(
            flops=60_000_000, transcendentals=7_000, bytes_accessed=2_000_000),
    )(x, params["w1"], params["b1"], params["w2p"], params["b2p"],
      params["Uh"], params["Vf"],
      params["cb1"], params["cw2_flat"], params["cb2"])


# ------------------------ parameter construction ----------------------------
def bilinear_upsample_matrix(n_in, scale):
    """Matrix M (n_in*scale, n_in) matching
    torch.nn.Upsample(scale_factor=scale, mode='bilinear', align_corners=False)."""
    n_out = n_in * scale
    M = np.zeros((n_out, n_in), dtype=np.float32)
    for o in range(n_out):
        src = (o + 0.5) / scale - 0.5
        src = max(src, 0.0)
        i0 = min(int(np.floor(src)), n_in - 1)
        i1 = min(i0 + 1, n_in - 1)
        l1 = src - i0
        M[o, i0] += np.float32(1.0 - l1)
        M[o, i1] += np.float32(l1)
    return M


def make_params(key):
    ks = jax.random.split(key, 8)

    def uni(k, shape, fan_in):
        bound = 1.0 / np.sqrt(fan_in)
        return jax.random.uniform(k, shape, jnp.float32, -bound, bound)

    # base module parameters (layouts already transposed/squeezed for TPU)
    w1 = uni(ks[0], (8, 27), 8)            # Linear(8,27) weight^T
    b1 = uni(ks[1], (1, 27), 8)
    w2 = uni(ks[2], (27, 876), 27)         # Linear(27,876) weight^T
    b2 = uni(ks[3], (1, 876), 27)
    cw1 = uni(ks[4], (8, 3, 3), 1 * 9)     # Conv2d(1,8,3) weight (8,1,3,3) squeezed
    cb1 = uni(ks[5], (8,), 1 * 9)
    cw2 = uni(ks[6], (8, 3, 3), 8 * 9)     # Conv2d(8,1,3) weight (1,8,3,3) squeezed
    cb2 = uni(ks[7], (1,), 8 * 9)

    Uh = bilinear_upsample_matrix(12, 3)            # (36,12)
    UwT = bilinear_upsample_matrix(73, 3).T         # (73,219)

    # Zero-pad w2/b2 columns 876 -> 12*128 so every row-chunk of z starts at a
    # 128-aligned lane and is a full-vreg slice (pad entries are exactly 0).
    w2_np = np.asarray(w2)
    b2_np = np.asarray(b2)
    w2p = np.zeros((27, 12 * 128), np.float32)
    b2p = np.zeros((1, 12 * 128), np.float32)
    for r in range(12):
        w2p[:, 128 * r:128 * r + 73] = w2_np[:, 73 * r:73 * r + 73]
        b2p[:, 128 * r:128 * r + 73] = b2_np[:, 73 * r:73 * r + 73]

    # Fold conv1's width taps into the width-upsample matrix (host side, once):
    #   Vf[c, k, 256*dh + j] = sum_dw cw1[c,dh,dw] * UwT[k, j+dw], j in [0,217)
    # Pad the contraction dim 73 -> 128 with zero rows, concatenate 4 channels
    # along the last dim per group, stack the 2 groups, cast to bf16.
    cw1_np = np.asarray(cw1)
    vf = np.zeros((8, 128, 3, 256), np.float32)
    for c in range(8):
        for dh in range(3):
            v = np.zeros((73, 217), np.float32)
            for dw in range(3):
                v += cw1_np[c, dh, dw] * UwT[:, dw:dw + 217]
            vf[c, :73, dh, :217] = v
    vf = vf.reshape(8, 128, 768)
    vf_groups = np.concatenate(
        [np.concatenate([vf[g * 4 + c] for c in range(4)], axis=1)   # (128,3072)
         for g in range(2)], axis=0)                                  # (256,3072)

    return {
        "w1": w1, "b1": b1,
        "w2p": jnp.asarray(w2p), "b2p": jnp.asarray(b2p),
        "Uh": jnp.asarray(Uh),
        "Vf": jnp.asarray(vf_groups, dtype=jnp.bfloat16),
        "cb1": cb1,
        "cw2_flat": jnp.asarray(np.asarray(cw2).reshape(-1)),
        "cb2": cb2,
        # unfolded originals, kept for the pure-numpy reference check
        "w2": w2, "b2": b2,
        "UwT": jnp.asarray(UwT),
        "cw1": cw1, "cw2": cw2,
    }


# ------------------------ pure numpy (f64) reference -------------------------
def nndc_reference_f64(x, params):
    f64 = lambda a: np.asarray(a, dtype=np.float64)

    def leaky(v):
        return np.where(v > 0, v, NEG_SLOPE * v)

    xn = f64(x)
    h1 = leaky(xn @ f64(params["w1"]) + f64(params["b1"]))
    h2 = leaky(h1 @ f64(params["w2"]) + f64(params["b2"]))
    x1 = h2.reshape(12, 73)
    up = f64(params["Uh"]) @ x1 @ f64(params["UwT"])                 # (36,219)

    cw1 = f64(params["cw1"]); cb1 = f64(params["cb1"])
    a1 = np.zeros((8, 34, 217))
    for c in range(8):
        acc = np.zeros((34, 217))
        for dh in range(3):
            for dw in range(3):
                acc += cw1[c, dh, dw] * up[dh:dh + 34, dw:dw + 217]
        a1[c] = leaky(acc + cb1[c])

    cw2 = f64(params["cw2"]); cb2 = f64(params["cb2"])
    y = np.zeros((32, 215))
    for c in range(8):
        for dh in range(3):
            for dw in range(3):
                y += cw2[c, dh, dw] * a1[c, dh:dh + 32, dw:dw + 215]
    y = 1.0 / (1.0 + np.exp(-(y + cb2[0])))
    return (y[:, :214] * -8.0).reshape(1, 1, 32, 214)


if __name__ == "__main__":
    root = jax.random.PRNGKey(0)
    k_x, k_p = jax.random.split(root)

    # nn.Linear(8,...) + .view((1,1,12,73)) implies x has shape (1, 8)
    x = jax.random.normal(k_x, (1, 8), dtype=jnp.float32)
    params = make_params(k_p)

    fwd = jax.jit(nndc_forward)
    out = jax.block_until_ready(fwd(x, params))

    assert out.shape == (1, 1, 32, 214), out.shape
    assert bool(jnp.all(jnp.isfinite(out)))
    # sigmoid output scaled by -8 -> values in (-8, 0)
    assert bool(jnp.all(out <= 0.0)) and bool(jnp.all(out >= -8.0))

    # numerical check against a float64 numpy reference (tolerance covers the
    # bf16 MXU operands; expected max diff ~1e-2)
    ref = nndc_reference_f64(np.asarray(x), params)
    max_diff = float(np.max(np.abs(np.asarray(out, dtype=np.float64) - ref)))
    assert max_diff < 5e-2, f"max abs diff vs reference: {max_diff}"

    print("KERNEL_OK")
</pallas_src>

<mosaic_0001>
module attributes {stable_mosaic.version = 11 : i64} {
  func.func @nndc_kernel(%arg0: i32, %arg1: memref<1x8xf32, #tpu.memory_space<vmem>>, %arg2: memref<8x27xf32, #tpu.memory_space<vmem>>, %arg3: memref<1x27xf32, #tpu.memory_space<vmem>>, %arg4: memref<27x1536xf32, #tpu.memory_space<vmem>>, %arg5: memref<1x1536xf32, #tpu.memory_space<vmem>>, %arg6: memref<36x12xf32, #tpu.memory_space<vmem>>, %arg7: memref<128x3072xbf16, #tpu.memory_space<vmem>>, %arg8: memref<8xf32, #tpu.memory_space<smem>>, %arg9: memref<72xf32, #tpu.memory_space<smem>>, %arg10: memref<1xf32, #tpu.memory_space<smem>>, %arg11: memref<1x1x32x214xf32, #tpu.memory_space<vmem>>, %arg12: memref<12x128xf32, #tpu.memory_space<vmem>>, %arg13: memref<36x128xbf16, #tpu.memory_space<vmem>>, %arg14: memref<36x3072xf32, #tpu.memory_space<vmem>>, %arg15: memref<34x256xf32, #tpu.memory_space<vmem>>, %arg16: memref<32x256xf32, #tpu.memory_space<vmem>>, %arg17: memref<32x256xf32, #tpu.memory_space<vmem>>, %arg18: memref<32x256xf32, #tpu.memory_space<vmem>>) attributes {dimension_semantics = [#tpu.dimension_semantics<arbitrary>], iteration_bounds = array<i64: 2>, scalar_prefetch = 0 : i64, scratch_operands = 7 : i64, tpu.core_type = #tpu.core_type<tc>, window_params = [{pipeline_mode = #tpu.pipeline_mode<synchronous>, transform_indices = @transform_0, window_bounds = array<i64: 1, 8>}, {pipeline_mode = #tpu.pipeline_mode<synchronous>, transform_indices = @transform_1, window_bounds = array<i64: 8, 27>}, {pipeline_mode = #tpu.pipeline_mode<synchronous>, transform_indices = @transform_2, window_bounds = array<i64: 1, 27>}, {pipeline_mode = #tpu.pipeline_mode<synchronous>, transform_indices = @transform_3, window_bounds = array<i64: 27, 1536>}, {pipeline_mode = #tpu.pipeline_mode<synchronous>, transform_indices = @transform_4, window_bounds = array<i64: 1, 1536>}, {pipeline_mode = #tpu.pipeline_mode<synchronous>, transform_indices = @transform_5, window_bounds = array<i64: 36, 12>}, {transform_indices = @transform_6, window_bounds = array<i64: 128, 3072>}, {transform_indices = @transform_7, window_bounds = array<i64: 8>}, {transform_indices = @transform_8, window_bounds = array<i64: 72>}, {transform_indices = @transform_9, window_bounds = array<i64: 1>}, {pipeline_mode = #tpu.pipeline_mode<synchronous>, transform_indices = @transform_10, window_bounds = array<i64: 1, 1, 32, 214>}]} {
    %c0_i32 = arith.constant 0 : i32
    %0 = arith.cmpi eq, %arg0, %c0_i32 : i32
    %1 = arith.extui %0 : i1 to i32
    %c0_i32_0 = arith.constant 0 : i32
    %2 = arith.cmpi ne, %1, %c0_i32_0 : i32
    scf.if %2 {
      %c0_133 = arith.constant 0 : index
      %c0_134 = arith.constant 0 : index
      %336 = vector.load %arg1[%c0_133, %c0_134] : memref<1x8xf32, #tpu.memory_space<vmem>>, vector<1x8xf32>
      %c0_135 = arith.constant 0 : index
      %c0_136 = arith.constant 0 : index
      %337 = vector.load %arg2[%c0_135, %c0_136] : memref<8x27xf32, #tpu.memory_space<vmem>>, vector<8x27xf32>
      %cst_137 = arith.constant dense<0.000000e+00> : vector<1x27xf32>
      %338 = tpu.matmul %336, %337, %cst_137 {dimension_numbers = #tpu.dot_dimension_numbers<[1], [0], [0], [1], [0, 0, 1, 1], [], []>} : vector<1x8xf32>, vector<8x27xf32>, vector<1x27xf32> -> vector<1x27xf32>
      %c0_138 = arith.constant 0 : index
      %c0_139 = arith.constant 0 : index
      %339 = vector.load %arg3[%c0_138, %c0_139] : memref<1x27xf32, #tpu.memory_space<vmem>>, vector<1x27xf32>
      %340 = arith.addf %338, %339 : vector<1x27xf32>
      %cst_140 = arith.constant 0.000000e+00 : f32
      %341 = vector.broadcast %cst_140 : f32 to vector<1x27xf32>
      %342 = arith.cmpf ogt, %340, %341 : vector<1x27xf32>
      %cst_141 = arith.constant 2.000000e-01 : f32
      %343 = vector.broadcast %cst_141 : f32 to vector<1x27xf32>
      %344 = arith.mulf %343, %340 : vector<1x27xf32>
      %345 = arith.select %342, %340, %344 : vector<1x27xi1>, vector<1x27xf32>
      %c0_142 = arith.constant 0 : index
      %c0_143 = arith.constant 0 : index
      %346 = vector.load %arg4[%c0_142, %c0_143] : memref<27x1536xf32, #tpu.memory_space<vmem>>, vector<27x1536xf32>
      %cst_144 = arith.constant dense<0.000000e+00> : vector<1x1536xf32>
      %347 = tpu.matmul %345, %346, %cst_144 {dimension_numbers = #tpu.dot_dimension_numbers<[1], [0], [0], [1], [0, 0, 1, 1], [], []>} : vector<1x27xf32>, vector<27x1536xf32>, vector<1x1536xf32> -> vector<1x1536xf32>
      %c0_145 = arith.constant 0 : index
      %c0_146 = arith.constant 0 : index
      %348 = vector.load %arg5[%c0_145, %c0_146] : memref<1x1536xf32, #tpu.memory_space<vmem>>, vector<1x1536xf32>
      %349 = arith.addf %347, %348 : vector<1x1536xf32>
      %cst_147 = arith.constant 0.000000e+00 : f32
      %350 = vector.broadcast %cst_147 : f32 to vector<1x1536xf32>
      %351 = arith.cmpf ogt, %349, %350 : vector<1x1536xf32>
      %cst_148 = arith.constant 2.000000e-01 : f32
      %352 = vector.broadcast %cst_148 : f32 to vector<1x1536xf32>
      %353 = arith.mulf %352, %349 : vector<1x1536xf32>
      %354 = arith.select %351, %349, %353 : vector<1x1536xi1>, vector<1x1536xf32>
      %355 = vector.extract_strided_slice %354 {offsets = [0, 0], sizes = [1, 128], strides = [1, 1]} : vector<1x1536xf32> to vector<1x128xf32>
      %c0_149 = arith.constant 0 : index
      %c0_150 = arith.constant 0 : index
      %356 = vector.load %arg12[%c0_149, %c0_150] : memref<12x128xf32, #tpu.memory_space<vmem>>, vector<1x128xf32>
      tpu.vector_store %arg12[%c0_149, %c0_150], %355 {strides = array<i32>} : memref<12x128xf32, #tpu.memory_space<vmem>>, vector<1x128xf32>,
      %357 = vector.extract_strided_slice %354 {offsets = [0, 128], sizes = [1, 128], strides = [1, 1]} : vector<1x1536xf32> to vector<1x128xf32>
      %c1_151 = arith.constant 1 : index
      %c0_152 = arith.constant 0 : index
      %358 = vector.load %arg12[%c1_151, %c0_152] : memref<12x128xf32, #tpu.memory_space<vmem>>, vector<1x128xf32>
      tpu.vector_store %arg12[%c1_151, %c0_152], %357 {strides = array<i32>} : memref<12x128xf32, #tpu.memory_space<vmem>>, vector<1x128xf32>,
      %359 = vector.extract_strided_slice %354 {offsets = [0, 256], sizes = [1, 128], strides = [1, 1]} : vector<1x1536xf32> to vector<1x128xf32>
      %c2_153 = arith.constant 2 : index
      %c0_154 = arith.constant 0 : index
      %360 = vector.load %arg12[%c2_153, %c0_154] : memref<12x128xf32, #tpu.memory_space<vmem>>, vector<1x128xf32>
      tpu.vector_store %arg12[%c2_153, %c0_154], %359 {strides = array<i32>} : memref<12x128xf32, #tpu.memory_space<vmem>>, vector<1x128xf32>,
      %361 = vector.extract_strided_slice %354 {offsets = [0, 384], sizes = [1, 128], strides = [1, 1]} : vector<1x1536xf32> to vector<1x128xf32>
      %c3 = arith.constant 3 : index
      %c0_155 = arith.constant 0 : index
      %362 = vector.load %arg12[%c3, %c0_155] : memref<12x128xf32, #tpu.memory_space<vmem>>, vector<1x128xf32>
      tpu.vector_store %arg12[%c3, %c0_155], %361 {strides = array<i32>} : memref<12x128xf32, #tpu.memory_space<vmem>>, vector<1x128xf32>,
      %363 = vector.extract_strided_slice %354 {offsets = [0, 512], sizes = [1, 128], strides = [1, 1]} : vector<1x1536xf32> to vector<1x128xf32>
      %c4 = arith.constant 4 : index
      %c0_156 = arith.constant 0 : index
      %364 = vector.load %arg12[%c4, %c0_156] : memref<12x128xf32, #tpu.memory_space<vmem>>, vector<1x128xf32>
      tpu.vector_store %arg12[%c4, %c0_156], %363 {strides = array<i32>} : memref<12x128xf32, #tpu.memory_space<vmem>>, vector<1x128xf32>,
      %365 = vector.extract_strided_slice %354 {offsets = [0, 640], sizes = [1, 128], strides = [1, 1]} : vector<1x1536xf32> to vector<1x128xf32>
      %c5 = arith.constant 5 : index
      %c0_157 = arith.constant 0 : index
      %366 = vector.load %arg12[%c5, %c0_157] : memref<12x128xf32, #tpu.memory_space<vmem>>, vector<1x128xf32>
      tpu.vector_store %arg12[%c5, %c0_157], %365 {strides = array<i32>} : memref<12x128xf32, #tpu.memory_space<vmem>>, vector<1x128xf32>,
      %367 = vector.extract_strided_slice %354 {offsets = [0, 768], sizes = [1, 128], strides = [1, 1]} : vector<1x1536xf32> to vector<1x128xf32>
      %c6 = arith.constant 6 : index
      %c0_158 = arith.constant 0 : index
      %368 = vector.load %arg12[%c6, %c0_158] : memref<12x128xf32, #tpu.memory_space<vmem>>, vector<1x128xf32>
      tpu.vector_store %arg12[%c6, %c0_158], %367 {strides = array<i32>} : memref<12x128xf32, #tpu.memory_space<vmem>>, vector<1x128xf32>,
      %369 = vector.extract_strided_slice %354 {offsets = [0, 896], sizes = [1, 128], strides = [1, 1]} : vector<1x1536xf32> to vector<1x128xf32>
      %c7 = arith.constant 7 : index
      %c0_159 = arith.constant 0 : index
      %370 = vector.load %arg12[%c7, %c0_159] : memref<12x128xf32, #tpu.memory_space<vmem>>, vector<1x128xf32>
      tpu.vector_store %arg12[%c7, %c0_159], %369 {strides = array<i32>} : memref<12x128xf32, #tpu.memory_space<vmem>>, vector<1x128xf32>,
      %371 = vector.extract_strided_slice %354 {offsets = [0, 1024], sizes = [1, 128], strides = [1, 1]} : vector<1x1536xf32> to vector<1x128xf32>
      %c8 = arith.constant 8 : index
      %c0_160 = arith.constant 0 : index
      %372 = vector.load %arg12[%c8, %c0_160] : memref<12x128xf32, #tpu.memory_space<vmem>>, vector<1x128xf32>
      tpu.vector_store %arg12[%c8, %c0_160], %371 {strides = array<i32>} : memref<12x128xf32, #tpu.memory_space<vmem>>, vector<1x128xf32>,
      %373 = vector.extract_strided_slice %354 {offsets = [0, 1152], sizes = [1, 128], strides = [1, 1]} : vector<1x1536xf32> to vector<1x128xf32>
      %c9 = arith.constant 9 : index
      %c0_161 = arith.constant 0 : index
      %374 = vector.load %arg12[%c9, %c0_161] : memref<12x128xf32, #tpu.memory_space<vmem>>, vector<1x128xf32>
      tpu.vector_store %arg12[%c9, %c0_161], %373 {strides = array<i32>} : memref<12x128xf32, #tpu.memory_space<vmem>>, vector<1x128xf32>,
      %375 = vector.extract_strided_slice %354 {offsets = [0, 1280], sizes = [1, 128], strides = [1, 1]} : vector<1x1536xf32> to vector<1x128xf32>
      %c10 = arith.constant 10 : index
      %c0_162 = arith.constant 0 : index
      %376 = vector.load %arg12[%c10, %c0_162] : memref<12x128xf32, #tpu.memory_space<vmem>>, vector<1x128xf32>
      tpu.vector_store %arg12[%c10, %c0_162], %375 {strides = array<i32>} : memref<12x128xf32, #tpu.memory_space<vmem>>, vector<1x128xf32>,
      %377 = vector.extract_strided_slice %354 {offsets = [0, 1408], sizes = [1, 128], strides = [1, 1]} : vector<1x1536xf32> to vector<1x128xf32>
      %c11 = arith.constant 11 : index
      %c0_163 = arith.constant 0 : index
      %378 = vector.load %arg12[%c11, %c0_163] : memref<12x128xf32, #tpu.memory_space<vmem>>, vector<1x128xf32>
      tpu.vector_store %arg12[%c11, %c0_163], %377 {strides = array<i32>} : memref<12x128xf32, #tpu.memory_space<vmem>>, vector<1x128xf32>,
      %c0_164 = arith.constant 0 : index
      %c0_165 = arith.constant 0 : index
      %379 = vector.load %arg6[%c0_164, %c0_165] : memref<36x12xf32, #tpu.memory_space<vmem>>, vector<36x12xf32>
      %c0_166 = arith.constant 0 : index
      %c0_167 = arith.constant 0 : index
      %380 = vector.load %arg12[%c0_166, %c0_167] : memref<12x128xf32, #tpu.memory_space<vmem>>, vector<12x128xf32>
      %cst_168 = arith.constant dense<0.000000e+00> : vector<36x128xf32>
      %381 = tpu.matmul %379, %380, %cst_168 {dimension_numbers = #tpu.dot_dimension_numbers<[1], [0], [0], [1], [0, 0, 1, 1], [], []>} : vector<36x12xf32>, vector<12x128xf32>, vector<36x128xf32> -> vector<36x128xf32>
      %382 = arith.truncf %381 : vector<36x128xf32> to vector<36x128xbf16>
      %c0_169 = arith.constant 0 : index
      %c0_170 = arith.constant 0 : index
      %383 = vector.load %arg13[%c0_169, %c0_170] : memref<36x128xbf16, #tpu.memory_space<vmem>>, vector<36x128xbf16>
      tpu.vector_store %arg13[%c0_169, %c0_170], %382 {strides = array<i32>} : memref<36x128xbf16, #tpu.memory_space<vmem>>, vector<36x128xbf16>,
      %cst_171 = arith.constant 0.000000e+00 : f32
      %384 = vector.broadcast %cst_171 : f32 to vector<32x256xf32>
      %c0_172 = arith.constant 0 : index
      %c0_173 = arith.constant 0 : index
      %385 = vector.load %arg16[%c0_172, %c0_173] : memref<32x256xf32, #tpu.memory_space<vmem>>, vector<32x256xf32>
      tpu.vector_store %arg16[%c0_172, %c0_173], %384 {strides = array<i32>} : memref<32x256xf32, #tpu.memory_space<vmem>>, vector<32x256xf32>,
      %cst_174 = arith.constant 0.000000e+00 : f32
      %386 = vector.broadcast %cst_174 : f32 to vector<32x256xf32>
      %c0_175 = arith.constant 0 : index
      %c0_176 = arith.constant 0 : index
      %387 = vector.load %arg17[%c0_175, %c0_176] : memref<32x256xf32, #tpu.memory_space<vmem>>, vector<32x256xf32>
      tpu.vector_store %arg17[%c0_175, %c0_176], %386 {strides = array<i32>} : memref<32x256xf32, #tpu.memory_space<vmem>>, vector<32x256xf32>,
      %cst_177 = arith.constant 0.000000e+00 : f32
      %388 = vector.broadcast %cst_177 : f32 to vector<32x256xf32>
      %c0_178 = arith.constant 0 : index
      %c0_179 = arith.constant 0 : index
      %389 = vector.load %arg18[%c0_178, %c0_179] : memref<32x256xf32, #tpu.memory_space<vmem>>, vector<32x256xf32>
      tpu.vector_store %arg18[%c0_178, %c0_179], %388 {strides = array<i32>} : memref<32x256xf32, #tpu.memory_space<vmem>>, vector<32x256xf32>,
    } else {
    }
    %c0 = arith.constant 0 : index
    %c0_1 = arith.constant 0 : index
    %3 = vector.load %arg13[%c0, %c0_1] : memref<36x128xbf16, #tpu.memory_space<vmem>>, vector<36x128xbf16>
    %c0_2 = arith.constant 0 : index
    %c0_3 = arith.constant 0 : index
    %4 = vector.load %arg7[%c0_2, %c0_3] : memref<128x3072xbf16, #tpu.memory_space<vmem>>, vector<128x3072xbf16>
    %cst = arith.constant dense<0.000000e+00> : vector<36x3072xf32>
    %5 = tpu.matmul %3, %4, %cst {dimension_numbers = #tpu.dot_dimension_numbers<[1], [0], [0], [1], [0, 0, 1, 1], [], []>} : vector<36x128xbf16>, vector<128x3072xbf16>, vector<36x3072xf32> -> vector<36x3072xf32>
    %c0_4 = arith.constant 0 : index
    %c0_5 = arith.constant 0 : index
    %6 = vector.load %arg14[%c0_4, %c0_5] : memref<36x3072xf32, #tpu.memory_space<vmem>>, vector<36x3072xf32>
    tpu.vector_store %arg14[%c0_4, %c0_5], %5 {strides = array<i32>} : memref<36x3072xf32, #tpu.memory_space<vmem>>, vector<36x3072xf32>,
    %c0_6 = arith.constant 0 : index
    %c0_7 = arith.constant 0 : index
    %7 = vector.load %arg16[%c0_6, %c0_7] : memref<32x256xf32, #tpu.memory_space<vmem>>, vector<32x256xf32>
    %c0_8 = arith.constant 0 : index
    %c0_9 = arith.constant 0 : index
    %8 = vector.load %arg17[%c0_8, %c0_9] : memref<32x256xf32, #tpu.memory_space<vmem>>, vector<32x256xf32>
    %c0_10 = arith.constant 0 : index
    %c0_11 = arith.constant 0 : index
    %9 = vector.load %arg18[%c0_10, %c0_11] : memref<32x256xf32, #tpu.memory_space<vmem>>, vector<32x256xf32>
    %c4_i32 = arith.constant 4 : i32
    %10 = arith.muli %arg0, %c4_i32 : i32
    %c0_i32_12 = arith.constant 0 : i32
    %11 = arith.addi %10, %c0_i32_12 : i32
    %c0_13 = arith.constant 0 : index
    %c0_14 = arith.constant 0 : index
    %12 = vector.load %arg14[%c0_13, %c0_14] : memref<36x3072xf32, #tpu.memory_space<vmem>>, vector<34x256xf32>
    %c1 = arith.constant 1 : index
    %c256 = arith.constant 256 : index
    %13 = vector.load %arg14[%c1, %c256] : memref<36x3072xf32, #tpu.memory_space<vmem>>, vector<34x256xf32>
    %14 = arith.addf %12, %13 : vector<34x256xf32>
    %c2 = arith.constant 2 : index
    %c512 = arith.constant 512 : index
    %15 = vector.load %arg14[%c2, %c512] : memref<36x3072xf32, #tpu.memory_space<vmem>>, vector<34x256xf32>
    %16 = arith.addf %14, %15 : vector<34x256xf32>
    %17 = arith.index_cast %11 : i32 to index
    %18 = memref.load %arg8[%17] : memref<8xf32, #tpu.memory_space<smem>>
    %19 = vector.broadcast %18 : f32 to vector<34x256xf32>
    %20 = arith.addf %16, %19 : vector<34x256xf32>
    %cst_15 = arith.constant 0.000000e+00 : f32
    %21 = vector.broadcast %cst_15 : f32 to vector<34x256xf32>
    %22 = arith.cmpf ogt, %20, %21 : vector<34x256xf32>
    %cst_16 = arith.constant 2.000000e-01 : f32
    %23 = vector.broadcast %cst_16 : f32 to vector<34x256xf32>
    %24 = arith.mulf %23, %20 : vector<34x256xf32>
    %25 = arith.select %22, %20, %24 : vector<34x256xi1>, vector<34x256xf32>
    %c0_17 = arith.constant 0 : index
    %c0_18 = arith.constant 0 : index
    %26 = vector.load %arg15[%c0_17, %c0_18] : memref<34x256xf32, #tpu.memory_space<vmem>>, vector<34x256xf32>
    tpu.vector_store %arg15[%c0_17, %c0_18], %25 {strides = array<i32>} : memref<34x256xf32, #tpu.memory_space<vmem>>, vector<34x256xf32>,
    %c0_19 = arith.constant 0 : index
    %c0_20 = arith.constant 0 : index
    %27 = vector.load %arg15[%c0_19, %c0_20] : memref<34x256xf32, #tpu.memory_space<vmem>>, vector<32x256xf32>
    %c9_i32 = arith.constant 9 : i32
    %28 = arith.muli %11, %c9_i32 : i32
    %c0_i32_21 = arith.constant 0 : i32
    %29 = arith.addi %28, %c0_i32_21 : i32
    %c0_i32_22 = arith.constant 0 : i32
    %30 = arith.addi %29, %c0_i32_22 : i32
    %31 = arith.index_cast %30 : i32 to index
    %32 = memref.load %arg9[%31] : memref<72xf32, #tpu.memory_space<smem>>
    %33 = vector.broadcast %32 : f32 to vector<32x256xf32>
    %34 = arith.mulf %33, %27 : vector<32x256xf32>
    %35 = arith.addf %7, %34 : vector<32x256xf32>
    %c1_i32 = arith.constant 1 : i32
    %36 = arith.addi %29, %c1_i32 : i32
    %37 = arith.index_cast %36 : i32 to index
    %38 = memref.load %arg9[%37] : memref<72xf32, #tpu.memory_space<smem>>
    %39 = vector.broadcast %38 : f32 to vector<32x256xf32>
    %40 = arith.mulf %39, %27 : vector<32x256xf32>
    %41 = arith.addf %8, %40 : vector<32x256xf32>
    %c2_i32 = arith.constant 2 : i32
    %42 = arith.addi %29, %c2_i32 : i32
    %43 = arith.index_cast %42 : i32 to index
    %44 = memref.load %arg9[%43] : memref<72xf32, #tpu.memory_space<smem>>
    %45 = vector.broadcast %44 : f32 to vector<32x256xf32>
    %46 = arith.mulf %45, %27 : vector<32x256xf32>
    %47 = arith.addf %9, %46 : vector<32x256xf32>
    %c1_23 = arith.constant 1 : index
    %c0_24 = arith.constant 0 : index
    %48 = vector.load %arg15[%c1_23, %c0_24] : memref<34x256xf32, #tpu.memory_space<vmem>>, vector<32x256xf32>
    %c9_i32_25 = arith.constant 9 : i32
    %49 = arith.muli %11, %c9_i32_25 : i32
    %c3_i32 = arith.constant 3 : i32
    %50 = arith.addi %49, %c3_i32 : i32
    %c0_i32_26 = arith.constant 0 : i32
    %51 = arith.addi %50, %c0_i32_26 : i32
    %52 = arith.index_cast %51 : i32 to index
    %53 = memref.load %arg9[%52] : memref<72xf32, #tpu.memory_space<smem>>
    %54 = vector.broadcast %53 : f32 to vector<32x256xf32>
    %55 = arith.mulf %54, %48 : vector<32x256xf32>
    %56 = arith.addf %35, %55 : vector<32x256xf32>
    %c1_i32_27 = arith.constant 1 : i32
    %57 = arith.addi %50, %c1_i32_27 : i32
    %58 = arith.index_cast %57 : i32 to index
    %59 = memref.load %arg9[%58] : memref<72xf32, #tpu.memory_space<smem>>
    %60 = vector.broadcast %59 : f32 to vector<32x256xf32>
    %61 = arith.mulf %60, %48 : vector<32x256xf32>
    %62 = arith.addf %41, %61 : vector<32x256xf32>
    %c2_i32_28 = arith.constant 2 : i32
    %63 = arith.addi %50, %c2_i32_28 : i32
    %64 = arith.index_cast %63 : i32 to index
    %65 = memref.load %arg9[%64] : memref<72xf32, #tpu.memory_space<smem>>
    %66 = vector.broadcast %65 : f32 to vector<32x256xf32>
    %67 = arith.mulf %66, %48 : vector<32x256xf32>
    %68 = arith.addf %47, %67 : vector<32x256xf32>
    %c2_29 = arith.constant 2 : index
    %c0_30 = arith.constant 0 : index
    %69 = vector.load %arg15[%c2_29, %c0_30] : memref<34x256xf32, #tpu.memory_space<vmem>>, vector<32x256xf32>
    %c9_i32_31 = arith.constant 9 : i32
    %70 = arith.muli %11, %c9_i32_31 : i32
    %c6_i32 = arith.constant 6 : i32
    %71 = arith.addi %70, %c6_i32 : i32
    %c0_i32_32 = arith.constant 0 : i32
    %72 = arith.addi %71, %c0_i32_32 : i32
    %73 = arith.index_cast %72 : i32 to index
    %74 = memref.load %arg9[%73] : memref<72xf32, #tpu.memory_space<smem>>
    %75 = vector.broadcast %74 : f32 to vector<32x256xf32>
    %76 = arith.mulf %75, %69 : vector<32x256xf32>
    %77 = arith.addf %56, %76 : vector<32x256xf32>
    %c1_i32_33 = arith.constant 1 : i32
    %78 = arith.addi %71, %c1_i32_33 : i32
    %79 = arith.index_cast %78 : i32 to index
    %80 = memref.load %arg9[%79] : memref<72xf32, #tpu.memory_space<smem>>
    %81 = vector.broadcast %80 : f32 to vector<32x256xf32>
    %82 = arith.mulf %81, %69 : vector<32x256xf32>
    %83 = arith.addf %62, %82 : vector<32x256xf32>
    %c2_i32_34 = arith.constant 2 : i32
    %84 = arith.addi %71, %c2_i32_34 : i32
    %85 = arith.index_cast %84 : i32 to index
    %86 = memref.load %arg9[%85] : memref<72xf32, #tpu.memory_space<smem>>
    %87 = vector.broadcast %86 : f32 to vector<32x256xf32>
    %88 = arith.mulf %87, %69 : vector<32x256xf32>
    %89 = arith.addf %68, %88 : vector<32x256xf32>
    %c4_i32_35 = arith.constant 4 : i32
    %90 = arith.muli %arg0, %c4_i32_35 : i32
    %c1_i32_36 = arith.constant 1 : i32
    %91 = arith.addi %90, %c1_i32_36 : i32
    %c0_37 = arith.constant 0 : index
    %c768 = arith.constant 768 : index
    %92 = vector.load %arg14[%c0_37, %c768] : memref<36x3072xf32, #tpu.memory_space<vmem>>, vector<34x256xf32>
    %c1_38 = arith.constant 1 : index
    %c1024 = arith.constant 1024 : index
    %93 = vector.load %arg14[%c1_38, %c1024] : memref<36x3072xf32, #tpu.memory_space<vmem>>, vector<34x256xf32>
    %94 = arith.addf %92, %93 : vector<34x256xf32>
    %c2_39 = arith.constant 2 : index
    %c1280 = arith.constant 1280 : index
    %95 = vector.load %arg14[%c2_39, %c1280] : memref<36x3072xf32, #tpu.memory_space<vmem>>, vector<34x256xf32>
    %96 = arith.addf %94, %95 : vector<34x256xf32>
    %97 = arith.index_cast %91 : i32 to index
    %98 = memref.load %arg8[%97] : memref<8xf32, #tpu.memory_space<smem>>
    %99 = vector.broadcast %98 : f32 to vector<34x256xf32>
    %100 = arith.addf %96, %99 : vector<34x256xf32>
    %cst_40 = arith.constant 0.000000e+00 : f32
    %101 = vector.broadcast %cst_40 : f32 to vector<34x256xf32>
    %102 = arith.cmpf ogt, %100, %101 : vector<34x256xf32>
    %cst_41 = arith.constant 2.000000e-01 : f32
    %103 = vector.broadcast %cst_41 : f32 to vector<34x256xf32>
    %104 = arith.mulf %103, %100 : vector<34x256xf32>
    %105 = arith.select %102, %100, %104 : vector<34x256xi1>, vector<34x256xf32>
    %c0_42 = arith.constant 0 : index
    %c0_43 = arith.constant 0 : index
    %106 = vector.load %arg15[%c0_42, %c0_43] : memref<34x256xf32, #tpu.memory_space<vmem>>, vector<34x256xf32>
    tpu.vector_store %arg15[%c0_42, %c0_43], %105 {strides = array<i32>} : memref<34x256xf32, #tpu.memory_space<vmem>>, vector<34x256xf32>,
    %c0_44 = arith.constant 0 : index
    %c0_45 = arith.constant 0 : index
    %107 = vector.load %arg15[%c0_44, %c0_45] : memref<34x256xf32, #tpu.memory_space<vmem>>, vector<32x256xf32>
    %c9_i32_46 = arith.constant 9 : i32
    %108 = arith.muli %91, %c9_i32_46 : i32
    %c0_i32_47 = arith.constant 0 : i32
    %109 = arith.addi %108, %c0_i32_47 : i32
    %c0_i32_48 = arith.constant 0 : i32
    %110 = arith.addi %109, %c0_i32_48 : i32
    %111 = arith.index_cast %110 : i32 to index
    %112 = memref.load %arg9[%111] : memref<72xf32, #tpu.memory_space<smem>>
    %113 = vector.broadcast %112 : f32 to vector<32x256xf32>
    %114 = arith.mulf %113, %107 : vector<32x256xf32>
    %115 = arith.addf %77, %114 : vector<32x256xf32>
    %c1_i32_49 = arith.constant 1 : i32
    %116 = arith.addi %109, %c1_i32_49 : i32
    %117 = arith.index_cast %116 : i32 to index
    %118 = memref.load %arg9[%117] : memref<72xf32, #tpu.memory_space<smem>>
    %119 = vector.broadcast %118 : f32 to vector<32x256xf32>
    %120 = arith.mulf %119, %107 : vector<32x256xf32>
    %121 = arith.addf %83, %120 : vector<32x256xf32>
    %c2_i32_50 = arith.constant 2 : i32
    %122 = arith.addi %109, %c2_i32_50 : i32
    %123 = arith.index_cast %122 : i32 to index
    %124 = memref.load %arg9[%123] : memref<72xf32, #tpu.memory_space<smem>>
    %125 = vector.broadcast %124 : f32 to vector<32x256xf32>
    %126 = arith.mulf %125, %107 : vector<32x256xf32>
    %127 = arith.addf %89, %126 : vector<32x256xf32>
    %c1_51 = arith.constant 1 : index
    %c0_52 = arith.constant 0 : index
    %128 = vector.load %arg15[%c1_51, %c0_52] : memref<34x256xf32, #tpu.memory_space<vmem>>, vector<32x256xf32>
    %c9_i32_53 = arith.constant 9 : i32
    %129 = arith.muli %91, %c9_i32_53 : i32
    %c3_i32_54 = arith.constant 3 : i32
    %130 = arith.addi %129, %c3_i32_54 : i32
    %c0_i32_55 = arith.constant 0 : i32
    %131 = arith.addi %130, %c0_i32_55 : i32
    %132 = arith.index_cast %131 : i32 to index
    %133 = memref.load %arg9[%132] : memref<72xf32, #tpu.memory_space<smem>>
    %134 = vector.broadcast %133 : f32 to vector<32x256xf32>
    %135 = arith.mulf %134, %128 : vector<32x256xf32>
    %136 = arith.addf %115, %135 : vector<32x256xf32>
    %c1_i32_56 = arith.constant 1 : i32
    %137 = arith.addi %130, %c1_i32_56 : i32
    %138 = arith.index_cast %137 : i32 to index
    %139 = memref.load %arg9[%138] : memref<72xf32, #tpu.memory_space<smem>>
    %140 = vector.broadcast %139 : f32 to vector<32x256xf32>
    %141 = arith.mulf %140, %128 : vector<32x256xf32>
    %142 = arith.addf %121, %141 : vector<32x256xf32>
    %c2_i32_57 = arith.constant 2 : i32
    %143 = arith.addi %130, %c2_i32_57 : i32
    %144 = arith.index_cast %143 : i32 to index
    %145 = memref.load %arg9[%144] : memref<72xf32, #tpu.memory_space<smem>>
    %146 = vector.broadcast %145 : f32 to vector<32x256xf32>
    %147 = arith.mulf %146, %128 : vector<32x256xf32>
    %148 = arith.addf %127, %147 : vector<32x256xf32>
    %c2_58 = arith.constant 2 : index
    %c0_59 = arith.constant 0 : index
    %149 = vector.load %arg15[%c2_58, %c0_59] : memref<34x256xf32, #tpu.memory_space<vmem>>, vector<32x256xf32>
    %c9_i32_60 = arith.constant 9 : i32
    %150 = arith.muli %91, %c9_i32_60 : i32
    %c6_i32_61 = arith.constant 6 : i32
    %151 = arith.addi %150, %c6_i32_61 : i32
    %c0_i32_62 = arith.constant 0 : i32
    %152 = arith.addi %151, %c0_i32_62 : i32
    %153 = arith.index_cast %152 : i32 to index
    %154 = memref.load %arg9[%153] : memref<72xf32, #tpu.memory_space<smem>>
    %155 = vector.broadcast %154 : f32 to vector<32x256xf32>
    %156 = arith.mulf %155, %149 : vector<32x256xf32>
    %157 = arith.addf %136, %156 : vector<32x256xf32>
    %c1_i32_63 = arith.constant 1 : i32
    %158 = arith.addi %151, %c1_i32_63 : i32
    %159 = arith.index_cast %158 : i32 to index
    %160 = memref.load %arg9[%159] : memref<72xf32, #tpu.memory_space<smem>>
    %161 = vector.broadcast %160 : f32 to vector<32x256xf32>
    %162 = arith.mulf %161, %149 : vector<32x256xf32>
    %163 = arith.addf %142, %162 : vector<32x256xf32>
    %c2_i32_64 = arith.constant 2 : i32
    %164 = arith.addi %151, %c2_i32_64 : i32
    %165 = arith.index_cast %164 : i32 to index
    %166 = memref.load %arg9[%165] : memref<72xf32, #tpu.memory_space<smem>>
    %167 = vector.broadcast %166 : f32 to vector<32x256xf32>
    %168 = arith.mulf %167, %149 : vector<32x256xf32>
    %169 = arith.addf %148, %168 : vector<32x256xf32>
    %c4_i32_65 = arith.constant 4 : i32
    %170 = arith.muli %arg0, %c4_i32_65 : i32
    %c2_i32_66 = arith.constant 2 : i32
    %171 = arith.addi %170, %c2_i32_66 : i32
    %c0_67 = arith.constant 0 : index
    %c1536 = arith.constant 1536 : index
    %172 = vector.load %arg14[%c0_67, %c1536] : memref<36x3072xf32, #tpu.memory_space<vmem>>, vector<34x256xf32>
    %c1_68 = arith.constant 1 : index
    %c1792 = arith.constant 1792 : index
    %173 = vector.load %arg14[%c1_68, %c1792] : memref<36x3072xf32, #tpu.memory_space<vmem>>, vector<34x256xf32>
    %174 = arith.addf %172, %173 : vector<34x256xf32>
    %c2_69 = arith.constant 2 : index
    %c2048 = arith.constant 2048 : index
    %175 = vector.load %arg14[%c2_69, %c2048] : memref<36x3072xf32, #tpu.memory_space<vmem>>, vector<34x256xf32>
    %176 = arith.addf %174, %175 : vector<34x256xf32>
    %177 = arith.index_cast %171 : i32 to index
    %178 = memref.load %arg8[%177] : memref<8xf32, #tpu.memory_space<smem>>
    %179 = vector.broadcast %178 : f32 to vector<34x256xf32>
    %180 = arith.addf %176, %179 : vector<34x256xf32>
    %cst_70 = arith.constant 0.000000e+00 : f32
    %181 = vector.broadcast %cst_70 : f32 to vector<34x256xf32>
    %182 = arith.cmpf ogt, %180, %181 : vector<34x256xf32>
    %cst_71 = arith.constant 2.000000e-01 : f32
    %183 = vector.broadcast %cst_71 : f32 to vector<34x256xf32>
    %184 = arith.mulf %183, %180 : vector<34x256xf32>
    %185 = arith.select %182, %180, %184 : vector<34x256xi1>, vector<34x256xf32>
    %c0_72 = arith.constant 0 : index
    %c0_73 = arith.constant 0 : index
    %186 = vector.load %arg15[%c0_72, %c0_73] : memref<34x256xf32, #tpu.memory_space<vmem>>, vector<34x256xf32>
    tpu.vector_store %arg15[%c0_72, %c0_73], %185 {strides = array<i32>} : memref<34x256xf32, #tpu.memory_space<vmem>>, vector<34x256xf32>,
    %c0_74 = arith.constant 0 : index
    %c0_75 = arith.constant 0 : index
    %187 = vector.load %arg15[%c0_74, %c0_75] : memref<34x256xf32, #tpu.memory_space<vmem>>, vector<32x256xf32>
    %c9_i32_76 = arith.constant 9 : i32
    %188 = arith.muli %171, %c9_i32_76 : i32
    %c0_i32_77 = arith.constant 0 : i32
    %189 = arith.addi %188, %c0_i32_77 : i32
    %c0_i32_78 = arith.constant 0 : i32
    %190 = arith.addi %189, %c0_i32_78 : i32
    %191 = arith.index_cast %190 : i32 to index
    %192 = memref.load %arg9[%191] : memref<72xf32, #tpu.memory_space<smem>>
    %193 = vector.broadcast %192 : f32 to vector<32x256xf32>
    %194 = arith.mulf %193, %187 : vector<32x256xf32>
    %195 = arith.addf %157, %194 : vector<32x256xf32>
    %c1_i32_79 = arith.constant 1 : i32
    %196 = arith.addi %189, %c1_i32_79 : i32
    %197 = arith.index_cast %196 : i32 to index
    %198 = memref.load %arg9[%197] : memref<72xf32, #tpu.memory_space<smem>>
    %199 = vector.broadcast %198 : f32 to vector<32x256xf32>
    %200 = arith.mulf %199, %187 : vector<32x256xf32>
    %201 = arith.addf %163, %200 : vector<32x256xf32>
    %c2_i32_80 = arith.constant 2 : i32
    %202 = arith.addi %189, %c2_i32_80 : i32
    %203 = arith.index_cast %202 : i32 to index
    %204 = memref.load %arg9[%203] : memref<72xf32, #tpu.memory_space<smem>>
    %205 = vector.broadcast %204 : f32 to vector<32x256xf32>
    %206 = arith.mulf %205, %187 : vector<32x256xf32>
    %207 = arith.addf %169, %206 : vector<32x256xf32>
    %c1_81 = arith.constant 1 : index
    %c0_82 = arith.constant 0 : index
    %208 = vector.load %arg15[%c1_81, %c0_82] : memref<34x256xf32, #tpu.memory_space<vmem>>, vector<32x256xf32>
    %c9_i32_83 = arith.constant 9 : i32
    %209 = arith.muli %171, %c9_i32_83 : i32
    %c3_i32_84 = arith.constant 3 : i32
    %210 = arith.addi %209, %c3_i32_84 : i32
    %c0_i32_85 = arith.constant 0 : i32
    %211 = arith.addi %210, %c0_i32_85 : i32
    %212 = arith.index_cast %211 : i32 to index
    %213 = memref.load %arg9[%212] : memref<72xf32, #tpu.memory_space<smem>>
    %214 = vector.broadcast %213 : f32 to vector<32x256xf32>
    %215 = arith.mulf %214, %208 : vector<32x256xf32>
    %216 = arith.addf %195, %215 : vector<32x256xf32>
    %c1_i32_86 = arith.constant 1 : i32
    %217 = arith.addi %210, %c1_i32_86 : i32
    %218 = arith.index_cast %217 : i32 to index
    %219 = memref.load %arg9[%218] : memref<72xf32, #tpu.memory_space<smem>>
    %220 = vector.broadcast %219 : f32 to vector<32x256xf32>
    %221 = arith.mulf %220, %208 : vector<32x256xf32>
    %222 = arith.addf %201, %221 : vector<32x256xf32>
    %c2_i32_87 = arith.constant 2 : i32
    %223 = arith.addi %210, %c2_i32_87 : i32
    %224 = arith.index_cast %223 : i32 to index
    %225 = memref.load %arg9[%224] : memref<72xf32, #tpu.memory_space<smem>>
    %226 = vector.broadcast %225 : f32 to vector<32x256xf32>
    %227 = arith.mulf %226, %208 : vector<32x256xf32>
    %228 = arith.addf %207, %227 : vector<32x256xf32>
    %c2_88 = arith.constant 2 : index
    %c0_89 = arith.constant 0 : index
    %229 = vector.load %arg15[%c2_88, %c0_89] : memref<34x256xf32, #tpu.memory_space<vmem>>, vector<32x256xf32>
    %c9_i32_90 = arith.constant 9 : i32
    %230 = arith.muli %171, %c9_i32_90 : i32
    %c6_i32_91 = arith.constant 6 : i32
    %231 = arith.addi %230, %c6_i32_91 : i32
    %c0_i32_92 = arith.constant 0 : i32
    %232 = arith.addi %231, %c0_i32_92 : i32
    %233 = arith.index_cast %232 : i32 to index
    %234 = memref.load %arg9[%233] : memref<72xf32, #tpu.memory_space<smem>>
    %235 = vector.broadcast %234 : f32 to vector<32x256xf32>
    %236 = arith.mulf %235, %229 : vector<32x256xf32>
    %237 = arith.addf %216, %236 : vector<32x256xf32>
    %c1_i32_93 = arith.constant 1 : i32
    %238 = arith.addi %231, %c1_i32_93 : i32
    %239 = arith.index_cast %238 : i32 to index
    %240 = memref.load %arg9[%239] : memref<72xf32, #tpu.memory_space<smem>>
    %241 = vector.broadcast %240 : f32 to vector<32x256xf32>
    %242 = arith.mulf %241, %229 : vector<32x256xf32>
    %243 = arith.addf %222, %242 : vector<32x256xf32>
    %c2_i32_94 = arith.constant 2 : i32
    %244 = arith.addi %231, %c2_i32_94 : i32
    %245 = arith.index_cast %244 : i32 to index
    %246 = memref.load %arg9[%245] : memref<72xf32, #tpu.memory_space<smem>>
    %247 = vector.broadcast %246 : f32 to vector<32x256xf32>
    %248 = arith.mulf %247, %229 : vector<32x256xf32>
    %249 = arith.addf %228, %248 : vector<32x256xf32>
    %c4_i32_95 = arith.constant 4 : i32
    %250 = arith.muli %arg0, %c4_i32_95 : i32
    %c3_i32_96 = arith.constant 3 : i32
    %251 = arith.addi %250, %c3_i32_96 : i32
    %c0_97 = arith.constant 0 : index
    %c2304 = arith.constant 2304 : index
    %252 = vector.load %arg14[%c0_97, %c2304] : memref<36x3072xf32, #tpu.memory_space<vmem>>, vector<34x256xf32>
    %c1_98 = arith.constant 1 : index
    %c2560 = arith.constant 2560 : index
    %253 = vector.load %arg14[%c1_98, %c2560] : memref<36x3072xf32, #tpu.memory_space<vmem>>, vector<34x256xf32>
    %254 = arith.addf %252, %253 : vector<34x256xf32>
    %c2_99 = arith.constant 2 : index
    %c2816 = arith.constant 2816 : index
    %255 = vector.load %arg14[%c2_99, %c2816] : memref<36x3072xf32, #tpu.memory_space<vmem>>, vector<34x256xf32>
    %256 = arith.addf %254, %255 : vector<34x256xf32>
    %257 = arith.index_cast %251 : i32 to index
    %258 = memref.load %arg8[%257] : memref<8xf32, #tpu.memory_space<smem>>
    %259 = vector.broadcast %258 : f32 to vector<34x256xf32>
    %260 = arith.addf %256, %259 : vector<34x256xf32>
    %cst_100 = arith.constant 0.000000e+00 : f32
    %261 = vector.broadcast %cst_100 : f32 to vector<34x256xf32>
    %262 = arith.cmpf ogt, %260, %261 : vector<34x256xf32>
    %cst_101 = arith.constant 2.000000e-01 : f32
    %263 = vector.broadcast %cst_101 : f32 to vector<34x256xf32>
    %264 = arith.mulf %263, %260 : vector<34x256xf32>
    %265 = arith.select %262, %260, %264 : vector<34x256xi1>, vector<34x256xf32>
    %c0_102 = arith.constant 0 : index
    %c0_103 = arith.constant 0 : index
    %266 = vector.load %arg15[%c0_102, %c0_103] : memref<34x256xf32, #tpu.memory_space<vmem>>, vector<34x256xf32>
    tpu.vector_store %arg15[%c0_102, %c0_103], %265 {strides = array<i32>} : memref<34x256xf32, #tpu.memory_space<vmem>>, vector<34x256xf32>,
    %c0_104 = arith.constant 0 : index
    %c0_105 = arith.constant 0 : index
    %267 = vector.load %arg15[%c0_104, %c0_105] : memref<34x256xf32, #tpu.memory_space<vmem>>, vector<32x256xf32>
    %c9_i32_106 = arith.constant 9 : i32
    %268 = arith.muli %251, %c9_i32_106 : i32
    %c0_i32_107 = arith.constant 0 : i32
    %269 = arith.addi %268, %c0_i32_107 : i32
    %c0_i32_108 = arith.constant 0 : i32
    %270 = arith.addi %269, %c0_i32_108 : i32
    %271 = arith.index_cast %270 : i32 to index
    %272 = memref.load %arg9[%271] : memref<72xf32, #tpu.memory_space<smem>>
    %273 = vector.broadcast %272 : f32 to vector<32x256xf32>
    %274 = arith.mulf %273, %267 : vector<32x256xf32>
    %275 = arith.addf %237, %274 : vector<32x256xf32>
    %c1_i32_109 = arith.constant 1 : i32
    %276 = arith.addi %269, %c1_i32_109 : i32
    %277 = arith.index_cast %276 : i32 to index
    %278 = memref.load %arg9[%277] : memref<72xf32, #tpu.memory_space<smem>>
    %279 = vector.broadcast %278 : f32 to vector<32x256xf32>
    %280 = arith.mulf %279, %267 : vector<32x256xf32>
    %281 = arith.addf %243, %280 : vector<32x256xf32>
    %c2_i32_110 = arith.constant 2 : i32
    %282 = arith.addi %269, %c2_i32_110 : i32
    %283 = arith.index_cast %282 : i32 to index
    %284 = memref.load %arg9[%283] : memref<72xf32, #tpu.memory_space<smem>>
    %285 = vector.broadcast %284 : f32 to vector<32x256xf32>
    %286 = arith.mulf %285, %267 : vector<32x256xf32>
    %287 = arith.addf %249, %286 : vector<32x256xf32>
    %c1_111 = arith.constant 1 : index
    %c0_112 = arith.constant 0 : index
    %288 = vector.load %arg15[%c1_111, %c0_112] : memref<34x256xf32, #tpu.memory_space<vmem>>, vector<32x256xf32>
    %c9_i32_113 = arith.constant 9 : i32
    %289 = arith.muli %251, %c9_i32_113 : i32
    %c3_i32_114 = arith.constant 3 : i32
    %290 = arith.addi %289, %c3_i32_114 : i32
    %c0_i32_115 = arith.constant 0 : i32
    %291 = arith.addi %290, %c0_i32_115 : i32
    %292 = arith.index_cast %291 : i32 to index
    %293 = memref.load %arg9[%292] : memref<72xf32, #tpu.memory_space<smem>>
    %294 = vector.broadcast %293 : f32 to vector<32x256xf32>
    %295 = arith.mulf %294, %288 : vector<32x256xf32>
    %296 = arith.addf %275, %295 : vector<32x256xf32>
    %c1_i32_116 = arith.constant 1 : i32
    %297 = arith.addi %290, %c1_i32_116 : i32
    %298 = arith.index_cast %297 : i32 to index
    %299 = memref.load %arg9[%298] : memref<72xf32, #tpu.memory_space<smem>>
    %300 = vector.broadcast %299 : f32 to vector<32x256xf32>
    %301 = arith.mulf %300, %288 : vector<32x256xf32>
    %302 = arith.addf %281, %301 : vector<32x256xf32>
    %c2_i32_117 = arith.constant 2 : i32
    %303 = arith.addi %290, %c2_i32_117 : i32
    %304 = arith.index_cast %303 : i32 to index
    %305 = memref.load %arg9[%304] : memref<72xf32, #tpu.memory_space<smem>>
    %306 = vector.broadcast %305 : f32 to vector<32x256xf32>
    %307 = arith.mulf %306, %288 : vector<32x256xf32>
    %308 = arith.addf %287, %307 : vector<32x256xf32>
    %c2_118 = arith.constant 2 : index
    %c0_119 = arith.constant 0 : index
    %309 = vector.load %arg15[%c2_118, %c0_119] : memref<34x256xf32, #tpu.memory_space<vmem>>, vector<32x256xf32>
    %c9_i32_120 = arith.constant 9 : i32
    %310 = arith.muli %251, %c9_i32_120 : i32
    %c6_i32_121 = arith.constant 6 : i32
    %311 = arith.addi %310, %c6_i32_121 : i32
    %c0_i32_122 = arith.constant 0 : i32
    %312 = arith.addi %311, %c0_i32_122 : i32
    %313 = arith.index_cast %312 : i32 to index
    %314 = memref.load %arg9[%313] : memref<72xf32, #tpu.memory_space<smem>>
    %315 = vector.broadcast %314 : f32 to vector<32x256xf32>
    %316 = arith.mulf %315, %309 : vector<32x256xf32>
    %317 = arith.addf %296, %316 : vector<32x256xf32>
    %c1_i32_123 = arith.constant 1 : i32
    %318 = arith.addi %311, %c1_i32_123 : i32
    %319 = arith.index_cast %318 : i32 to index
    %320 = memref.load %arg9[%319] : memref<72xf32, #tpu.memory_space<smem>>
    %321 = vector.broadcast %320 : f32 to vector<32x256xf32>
    %322 = arith.mulf %321, %309 : vector<32x256xf32>
    %323 = arith.addf %302, %322 : vector<32x256xf32>
    %c2_i32_124 = arith.constant 2 : i32
    %324 = arith.addi %311, %c2_i32_124 : i32
    %325 = arith.index_cast %324 : i32 to index
    %326 = memref.load %arg9[%325] : memref<72xf32, #tpu.memory_space<smem>>
    %327 = vector.broadcast %326 : f32 to vector<32x256xf32>
    %328 = arith.mulf %327, %309 : vector<32x256xf32>
    %329 = arith.addf %308, %328 : vector<32x256xf32>
    %c0_125 = arith.constant 0 : index
    %c0_126 = arith.constant 0 : index
    %330 = vector.load %arg16[%c0_125, %c0_126] : memref<32x256xf32, #tpu.memory_space<vmem>>, vector<32x256xf32>
    tpu.vector_store %arg16[%c0_125, %c0_126], %317 {strides = array<i32>} : memref<32x256xf32, #tpu.memory_space<vmem>>, vector<32x256xf32>,
    %c0_127 = arith.constant 0 : index
    %c0_128 = arith.constant 0 : index
    %331 = vector.load %arg17[%c0_127, %c0_128] : memref<32x256xf32, #tpu.memory_space<vmem>>, vector<32x256xf32>
    tpu.vector_store %arg17[%c0_127, %c0_128], %323 {strides = array<i32>} : memref<32x256xf32, #tpu.memory_space<vmem>>, vector<32x256xf32>,
    %c0_129 = arith.constant 0 : index
    %c0_130 = arith.constant 0 : index
    %332 = vector.load %arg18[%c0_129, %c0_130] : memref<32x256xf32, #tpu.memory_space<vmem>>, vector<32x256xf32>
    tpu.vector_store %arg18[%c0_129, %c0_130], %329 {strides = array<i32>} : memref<32x256xf32, #tpu.memory_space<vmem>>, vector<32x256xf32>,
    %c1_i32_131 = arith.constant 1 : i32
    %333 = arith.cmpi eq, %arg0, %c1_i32_131 : i32
    %334 = arith.extui %333 : i1 to i32
    %c0_i32_132 = arith.constant 0 : i32
    %335 = arith.cmpi ne, %334, %c0_i32_132 : i32
    scf.if %335 {
      %336 = vector.extract_strided_slice %317 {offsets = [0, 0], sizes = [32, 214], strides = [1, 1]} : vector<32x256xf32> to vector<32x214xf32>
      %337 = vector.extract_strided_slice %323 {offsets = [0, 1], sizes = [32, 214], strides = [1, 1]} : vector<32x256xf32> to vector<32x214xf32>
      %338 = arith.addf %336, %337 : vector<32x214xf32>
      %339 = vector.extract_strided_slice %329 {offsets = [0, 2], sizes = [32, 214], strides = [1, 1]} : vector<32x256xf32> to vector<32x214xf32>
      %340 = arith.addf %338, %339 : vector<32x214xf32>
      %c0_133 = arith.constant 0 : index
      %341 = memref.load %arg10[%c0_133] : memref<1xf32, #tpu.memory_space<smem>>
      %342 = vector.broadcast %341 : f32 to vector<32x214xf32>
      %343 = arith.addf %340, %342 : vector<32x214xf32>
      %344 = arith.negf %343 : vector<32x214xf32>
      %345 = math.exp %344 : vector<32x214xf32>
      %cst_134 = arith.constant 1.000000e+00 : f32
      %346 = vector.broadcast %cst_134 : f32 to vector<32x214xf32>
      %347 = arith.addf %346, %345 : vector<32x214xf32>
      %348 = arith.divf %346, %347 : vector<32x214xf32>
      %cst_135 = arith.constant -8.000000e+00 : f32
      %349 = vector.broadcast %cst_135 : f32 to vector<32x214xf32>
      %350 = arith.mulf %348, %349 : vector<32x214xf32>
      %c0_136 = arith.constant 0 : index
      %c0_137 = arith.constant 0 : index
      %c0_138 = arith.constant 0 : index
      %c0_139 = arith.constant 0 : index
      %351 = vector.load %arg11[%c0_136, %c0_137, %c0_138, %c0_139] : memref<1x1x32x214xf32, #tpu.memory_space<vmem>>, vector<1x1x32x214xf32>
      %352 = vector.shape_cast %351 : vector<1x1x32x214xf32> to vector<32x214xf32>
      %353 = vector.shape_cast %350 : vector<32x214xf32> to vector<1x1x32x214xf32>
      tpu.vector_store %arg11[%c0_136, %c0_137, %c0_138, %c0_139], %353 {strides = array<i32>} : memref<1x1x32x214xf32, #tpu.memory_space<vmem>>, vector<1x1x32x214xf32>,
    } else {
    }
    return
  }
  func.func @transform_0(%arg0: i32) -> (i32, i32) {
    %c0_i32 = arith.constant 0 : i32
    %c0_i32_0 = arith.constant 0 : i32
    %c0_i32_1 = arith.constant 0 : i32
    return %c0_i32, %c0_i32_0 : i32, i32
  }
  func.func @transform_1(%arg0: i32) -> (i32, i32) {
    %c0_i32 = arith.constant 0 : i32
    %c0_i32_0 = arith.constant 0 : i32
    %c0_i32_1 = arith.constant 0 : i32
    return %c0_i32, %c0_i32_0 : i32, i32
  }
  func.func @transform_2(%arg0: i32) -> (i32, i32) {
    %c0_i32 = arith.constant 0 : i32
    %c0_i32_0 = arith.constant 0 : i32
    %c0_i32_1 = arith.constant 0 : i32
    return %c0_i32, %c0_i32_0 : i32, i32
  }
  func.func @transform_3(%arg0: i32) -> (i32, i32) {
    %c0_i32 = arith.constant 0 : i32
    %c0_i32_0 = arith.constant 0 : i32
    %c0_i32_1 = arith.constant 0 : i32
    return %c0_i32, %c0_i32_0 : i32, i32
  }
  func.func @transform_4(%arg0: i32) -> (i32, i32) {
    %c0_i32 = arith.constant 0 : i32
    %c0_i32_0 = arith.constant 0 : i32
    %c0_i32_1 = arith.constant 0 : i32
    return %c0_i32, %c0_i32_0 : i32, i32
  }
  func.func @transform_5(%arg0: i32) -> (i32, i32) {
    %c0_i32 = arith.constant 0 : i32
    %c0_i32_0 = arith.constant 0 : i32
    %c0_i32_1 = arith.constant 0 : i32
    return %c0_i32, %c0_i32_0 : i32, i32
  }
  func.func @transform_6(%arg0: i32) -> (i32, i32) {
    %c0_i32 = arith.constant 0 : i32
    %c0_i32_0 = arith.constant 0 : i32
    return %arg0, %c0_i32 : i32, i32
  }
  func.func @transform_7(%arg0: i32) -> i32 {
    %c0_i32 = arith.constant 0 : i32
    %c0_i32_0 = arith.constant 0 : i32
    return %c0_i32 : i32
  }
  func.func @transform_8(%arg0: i32) -> i32 {
    %c0_i32 = arith.constant 0 : i32
    %c0_i32_0 = arith.constant 0 : i32
    return %c0_i32 : i32
  }
  func.func @transform_9(%arg0: i32) -> i32 {
    %c0_i32 = arith.constant 0 : i32
    %c0_i32_0 = arith.constant 0 : i32
    return %c0_i32 : i32
  }
  func.func @transform_10(%arg0: i32) -> (i32, i32, i32, i32) {
    %c0_i32 = arith.constant 0 : i32
    %c0_i32_0 = arith.constant 0 : i32
    %c0_i32_1 = arith.constant 0 : i32
    %c0_i32_2 = arith.constant 0 : i32
    %c0_i32_3 = arith.constant 0 : i32
    return %c0_i32, %c0_i32_0, %c0_i32_1, %c0_i32_2 : i32, i32, i32, i32
  }
}

</mosaic_0001>

<llo_original>
// kernel: nndc_forward.1
$region0: #{nndc_forward.1}
  #allocation0 [shape = 'u32[]', space=smem, size = 0x4, offset = 0x4, fixed_abs, tag = 'smem constant byte address 0x4 - core index']
  #allocation1 [shape = 'u32[144,128]{1,0:T(1,128)}', space=vmem, size = 0x12000, scoped, tag = 'internal scratch']
  #allocation2 [shape = 'f32[12,128]{1,0:T(8,128)}', space=vmem, size = 0x2000, scoped, tag = 'scratch operand']
  #allocation3 [shape = 'bf16[36,128]{1,0:T(8,128)(2,1)}', space=vmem, size = 0x2800, scoped, tag = 'scratch operand']
  #allocation4 [shape = 'f32[36,3072]{1,0:T(8,128)}', space=vmem, size = 0x78000, scoped, tag = 'scratch operand']
  #allocation5 [shape = 'f32[34,256]{1,0:T(8,128)}', space=vmem, size = 0xa000, scoped, tag = 'scratch operand']
  #allocation6 [shape = 'f32[32,256]{1,0:T(8,128)}', space=vmem, size = 0x8000, scoped, tag = 'scratch operand']
  #allocation7 [shape = 'f32[32,256]{1,0:T(8,128)}', space=vmem, size = 0x8000, scoped, tag = 'scratch operand']
  #allocation8 [shape = 'f32[32,256]{1,0:T(8,128)}', space=vmem, size = 0x8000, scoped, tag = 'scratch operand']
  #allocation9 [shape = 'f32[1]{0:T(128)S(6)}', space=smem, size = 0x200, scoped, tag = 'scoped memory for nndc_forward.1']
  %s0 = inlined_call_operand.hbm [shape: f32[1,8], index: 0, kind: input, shape index: {}]
  %s1 = inlined_call_operand.hbm [shape: f32[8,27], index: 1, kind: input, shape index: {}]
  %s2 = inlined_call_operand.hbm [shape: f32[1,27], index: 2, kind: input, shape index: {}]
  %s3 = inlined_call_operand.hbm [shape: f32[27,1536], index: 3, kind: input, shape index: {}]
  %s4 = inlined_call_operand.hbm [shape: f32[1,1536], index: 4, kind: input, shape index: {}]
  %s5 = inlined_call_operand.vmem [shape: f32[36,12], index: 5, kind: input, shape index: {}]
  %s6 = inlined_call_operand.hbm [shape: bf16[256,3072], index: 6, kind: input, shape index: {}]
  %s7 = inlined_call_operand.hbm [shape: f32[8], index: 7, kind: input, shape index: {}]
  %s8 = inlined_call_operand.hbm [shape: f32[72], index: 8, kind: input, shape index: {}]
  %s9 = inlined_call_operand.<no memory space> [shape: f32[1], index: 9, kind: input, shape index: {}]
  %s10 = inlined_call_operand.hbm [shape: f32[1,1,32,214], index: 10, kind: output, shape index: {}]
  %s11 = sld [smem:[#allocation0]]
  $region113: #{nndc_forward.1} parent=0
    _
  %s13 = ssub.s32 1, %s11
  %s14 = scalar_select 0, %s13, %s11
  %15 = sst [smem:[#allocation9]] %s9
  $region1: #{nndc_forward.1} parent=0
    #allocation10 [shape = 'u8[512]{0}', space=vmem, size = 0x400, scoped, tag = 'input window, operand 0, single buffered']
    #allocation11 [shape = 's32[2]{0}', space=sflag, size = 0x8, scoped, tag = 'scoped memory for nndc_forward.1']
    #allocation12 [shape = 's32[2]{0}', space=sflag, size = 0x8, scoped, tag = 'scoped memory for nndc_forward.1']
    #allocation13 [shape = 's32[2]{0}', space=sflag, size = 0x8, scoped, tag = 'scoped memory for nndc_forward.1']
    #allocation14 [shape = 'u8[4096]{0}', space=vmem, size = 0x1000, scoped, tag = 'input window, operand 1, single buffered']
    #allocation15 [shape = 's32[1]{0}', space=sflag, size = 0x4, scoped, tag = 'scoped memory for nndc_forward.1']
    #allocation16 [shape = 'u8[512]{0}', space=vmem, size = 0x400, scoped, tag = 'input window, operand 2, single buffered']
    #allocation17 [shape = 'u8[196608]{0}', space=vmem, size = 0x30000, scoped, tag = 'input window, operand 3, single buffered']
    #allocation18 [shape = 's32[1]{0}', space=sflag, size = 0x4, scoped, tag = 'scoped memory for nndc_forward.1']
    #allocation19 [shape = 'u8[6144]{0}', space=vmem, size = 0x1800, scoped, tag = 'input window, operand 4, single buffered']
    #allocation20 [shape = 'u8[1572864]{0}', space=vmem, size = 0x180000, scoped, tag = 'input window, operand 6']
    #allocation21 [shape = 's32[2]{0}', space=sflag, size = 0x8, scoped, tag = 'scoped memory for nndc_forward.1']
    #allocation22 [shape = 'u8[512]{0}', space=smem, size = 0x200, scoped, tag = 'input window, operand 7, single buffered']
    #allocation23 [shape = 'u8[512]{0}', space=smem, size = 0x200, scoped, tag = 'input window, operand 8, single buffered']
    #allocation24 [shape = 's32[1]{0}', space=sflag, size = 0x4, scoped, tag = 'scoped memory for nndc_forward.1']
    #allocation25 [shape = 'u8[32768]{0}', space=vmem, size = 0x8000, scoped, tag = 'output window, operand 0, single buffered']
    %16 = vsyncpa [#allocation11], 0
    %17 = vsyncpa [#allocation15], 0
    %18 = vsyncpa [#allocation18], 0
    %19 = vsyncpa [#allocation21], 0
    %s20 = scalar_lea.sflag [#allocation21], 1
    %21 = vsyncpa %s20, 0
    %22 = vsyncpa [#allocation13], 0
    %23 = vsyncpa [#allocation24], 0
    %24 = vsyncpa [#allocation12], 0
    loop: start=0, step=1, limit=4
    $region2: #{nndc_forward.1} parent=1 // loop_pre_header
      _
    $region3: #{nndc_forward.1} parent=1 // loop_header
      %s26 = sphi 0, %s30
      %p27 = scmp.ge.s32.totalorder %s26, 4
      %s34 = sphi 0, %s34
      %s36 = sphi 0, %s34
      %s37 = sphi 0, %s36
      %s51 = sphi 0, %s37
      %s55 = sphi 0, %s55
      %s57 = sphi 0, %s55
      %s58 = sphi 0, %s57
      %s72 = sphi 0, %s58
      %s76 = sphi 0, %s76
      %s78 = sphi 0, %s76
      %s79 = sphi 0, %s78
      %s93 = sphi 0, %s79
      %s97 = sphi 0, %s97
      %s99 = sphi 0, %s97
      %s100 = sphi 0, %s99
      %s114 = sphi 0, %s100
      %s118 = sphi 0, %s118
      %s120 = sphi 0, %s118
      %s121 = sphi 0, %s120
      %s135 = sphi 0, %s121
      %s139 = sphi 0, %s139
      %s141 = sphi 0, %s139
      %s142 = sphi 0, %s141
      %s156 = sphi 0, %s142
      %s162 = sphi 0, %s164
      %s165 = sphi 0, %s162
      %s166 = sphi 0, %s165
      %s182 = sphi 0, %s166
      %s186 = sphi 0, %s186
      %s188 = sphi 0, %s186
      %s189 = sphi 0, %s188
      %s203 = sphi 0, %s189
      %s207 = sphi 0, %s207
      %s209 = sphi 0, %s207
      %s210 = sphi 0, %s209
      %s224 = sphi 0, %s210
      %s228 = sphi 0, %s228
      %s230 = sphi 0, %s228
      %s231 = sphi 0, %s230
      %s245 = sphi 0, %s231
      %s249 = sphi 0, %s249
      %s251 = sphi 0, %s249
      %s252 = sphi 0, %s251
      %s266 = sphi 0, %s252
    $region4: #{nndc_forward.1} parent=1 // loop_header_branch
      %29 = sbr.rel (%p27) target = $region8
    $region5: #{nndc_forward.1} parent=1 // loop_body
      %s31 = ssub.s32 %s26, 1
      %s32 = ssub.s32 %s26, 2
      %s33 = sadd.s32 %s26, 1
      %s35 = sadd.s32 %s34, 1
      %p38 = scmp.eq.s32.totalorder %s26, 1
      %p39 = scmp.ne.s32.totalorder %s34, %s36
      %p40 = scmp.eq.s32.totalorder %s26, 0
      %p41 = por %p39, %p40
      %p42 = scmp.ne.s32.totalorder %s34, %s36
      %p43 = scmp.eq.s32.totalorder %s31, 1
      %p44 = por %p42, %p43
      %p45 = scmp.ne.s32.totalorder %s36, %s37
      %p46 = scmp.eq.s32.totalorder %s31, 0
      %p47 = por %p45, %p46
      %p48 = scmp.ne.s32.totalorder %s36, %s37
      %p49 = scmp.eq.s32.totalorder %s32, 1
      %p50 = por %p48, %p49
      %p52 = scmp.ne.s32.totalorder %s37, %s51
      %p53 = scmp.eq.s32.totalorder %s32, 0
      %p54 = por %p52, %p53
      %s56 = sadd.s32 %s55, 1
      %p59 = scmp.eq.s32.totalorder %s26, 1
      %p60 = scmp.ne.s32.totalorder %s55, %s57
      %p61 = scmp.eq.s32.totalorder %s26, 0
      %p62 = por %p60, %p61
      %p63 = scmp.ne.s32.totalorder %s55, %s57
      %p64 = scmp.eq.s32.totalorder %s31, 1
      %p65 = por %p63, %p64
      %p66 = scmp.ne.s32.totalorder %s57, %s58
      %p67 = scmp.eq.s32.totalorder %s31, 0
      %p68 = por %p66, %p67
      %p69 = scmp.ne.s32.totalorder %s57, %s58
      %p70 = scmp.eq.s32.totalorder %s32, 1
      %p71 = por %p69, %p70
      %p73 = scmp.ne.s32.totalorder %s58, %s72
      %p74 = scmp.eq.s32.totalorder %s32, 0
      %p75 = por %p73, %p74
      %s77 = sadd.s32 %s76, 1
      %p80 = scmp.eq.s32.totalorder %s26, 1
      %p81 = scmp.ne.s32.totalorder %s76, %s78
      %p82 = scmp.eq.s32.totalorder %s26, 0
      %p83 = por %p81, %p82
      %p84 = scmp.ne.s32.totalorder %s76, %s78
      %p85 = scmp.eq.s32.totalorder %s31, 1
      %p86 = por %p84, %p85
      %p87 = scmp.ne.s32.totalorder %s78, %s79
      %p88 = scmp.eq.s32.totalorder %s31, 0
      %p89 = por %p87, %p88
      %p90 = scmp.ne.s32.totalorder %s78, %s79
      %p91 = scmp.eq.s32.totalorder %s32, 1
      %p92 = por %p90, %p91
      %p94 = scmp.ne.s32.totalorder %s79, %s93
      %p95 = scmp.eq.s32.totalorder %s32, 0
      %p96 = por %p94, %p95
      %s98 = sadd.s32 %s97, 1
      %p101 = scmp.eq.s32.totalorder %s26, 1
      %p102 = scmp.ne.s32.totalorder %s97, %s99
      %p103 = scmp.eq.s32.totalorder %s26, 0
      %p104 = por %p102, %p103
      %p105 = scmp.ne.s32.totalorder %s97, %s99
      %p106 = scmp.eq.s32.totalorder %s31, 1
      %p107 = por %p105, %p106
      %p108 = scmp.ne.s32.totalorder %s99, %s100
      %p109 = scmp.eq.s32.totalorder %s31, 0
      %p110 = por %p108, %p109
      %p111 = scmp.ne.s32.totalorder %s99, %s100
      %p112 = scmp.eq.s32.totalorder %s32, 1
      %p113 = por %p111, %p112
      %p115 = scmp.ne.s32.totalorder %s100, %s114
      %p116 = scmp.eq.s32.totalorder %s32, 0
      %p117 = por %p115, %p116
      %s119 = sadd.s32 %s118, 1
      %p122 = scmp.eq.s32.totalorder %s26, 1
      %p123 = scmp.ne.s32.totalorder %s118, %s120
      %p124 = scmp.eq.s32.totalorder %s26, 0
      %p125 = por %p123, %p124
      %p126 = scmp.ne.s32.totalorder %s118, %s120
      %p127 = scmp.eq.s32.totalorder %s31, 1
      %p128 = por %p126, %p127
      %p129 = scmp.ne.s32.totalorder %s120, %s121
      %p130 = scmp.eq.s32.totalorder %s31, 0
      %p131 = por %p129, %p130
      %p132 = scmp.ne.s32.totalorder %s120, %s121
      %p133 = scmp.eq.s32.totalorder %s32, 1
      %p134 = por %p132, %p133
      %p136 = scmp.ne.s32.totalorder %s121, %s135
      %p137 = scmp.eq.s32.totalorder %s32, 0
      %p138 = por %p136, %p137
      %s140 = sadd.s32 %s139, 1
      %p143 = scmp.eq.s32.totalorder %s26, 1
      %p144 = scmp.ne.s32.totalorder %s139, %s141
      %p145 = scmp.eq.s32.totalorder %s26, 0
      %p146 = por %p144, %p145
      %p147 = scmp.ne.s32.totalorder %s139, %s141
      %p148 = scmp.eq.s32.totalorder %s31, 1
      %p149 = por %p147, %p148
      %p150 = scmp.ne.s32.totalorder %s141, %s142
      %p151 = scmp.eq.s32.totalorder %s31, 0
      %p152 = por %p150, %p151
      %p153 = scmp.ne.s32.totalorder %s141, %s142
      %p154 = scmp.eq.s32.totalorder %s32, 1
      %p155 = por %p153, %p154
      %p157 = scmp.ne.s32.totalorder %s142, %s156
      %p158 = scmp.eq.s32.totalorder %s32, 0
      %p159 = por %p157, %p158
      %s160 = ssub.s32 %s26, %s33
      %p161 = scmp.eq.s32.totalorder %s160, 0
      %s163 = sadd.s32 %s162, 1
      %s164 = scalar_select %p161, %s162, %s163
      %p167 = pneg %p161
      %p168 = scmp.eq.s32.totalorder %s26, 1
      %p169 = por %p167, %p168
      %p170 = scmp.ne.s32.totalorder %s162, %s165
      %p171 = scmp.eq.s32.totalorder %s26, 0
      %p172 = por %p170, %p171
      %p173 = scmp.ne.s32.totalorder %s162, %s165
      %p174 = scmp.eq.s32.totalorder %s31, 1
      %p175 = por %p173, %p174
      %p176 = scmp.ne.s32.totalorder %s165, %s166
      %p177 = scmp.eq.s32.totalorder %s31, 0
      %p178 = por %p176, %p177
      %p179 = scmp.ne.s32.totalorder %s165, %s166
      %p180 = scmp.eq.s32.totalorder %s32, 1
      %p181 = por %p179, %p180
      %p183 = scmp.ne.s32.totalorder %s166, %s182
      %p184 = scmp.eq.s32.totalorder %s32, 0
      %p185 = por %p183, %p184
      %s187 = sadd.s32 %s186, 1
      %p190 = scmp.eq.s32.totalorder %s26, 1
      %p191 = scmp.ne.s32.totalorder %s186, %s188
      %p192 = scmp.eq.s32.totalorder %s26, 0
      %p193 = por %p191, %p192
      %p194 = scmp.ne.s32.totalorder %s186, %s188
      %p195 = scmp.eq.s32.totalorder %s31, 1
      %p196 = por %p194, %p195
      %p197 = scmp.ne.s32.totalorder %s188, %s189
      %p198 = scmp.eq.s32.totalorder %s31, 0
      %p199 = por %p197, %p198
      %p200 = scmp.ne.s32.totalorder %s188, %s189
      %p201 = scmp.eq.s32.totalorder %s32, 1
      %p202 = por %p200, %p201
      %p204 = scmp.ne.s32.totalorder %s189, %s203
      %p205 = scmp.eq.s32.totalorder %s32, 0
      %p206 = por %p204, %p205
      %s208 = sadd.s32 %s207, 1
      %p211 = scmp.eq.s32.totalorder %s26, 1
      %p212 = scmp.ne.s32.totalorder %s207, %s209
      %p213 = scmp.eq.s32.totalorder %s26, 0
      %p214 = por %p212, %p213
      %p215 = scmp.ne.s32.totalorder %s207, %s209
      %p216 = scmp.eq.s32.totalorder %s31, 1
      %p217 = por %p215, %p216
      %p218 = scmp.ne.s32.totalorder %s209, %s210
      %p219 = scmp.eq.s32.totalorder %s31, 0
      %p220 = por %p218, %p219
      %p221 = scmp.ne.s32.totalorder %s209, %s210
      %p222 = scmp.eq.s32.totalorder %s32, 1
      %p223 = por %p221, %p222
      %p225 = scmp.ne.s32.totalorder %s210, %s224
      %p226 = scmp.eq.s32.totalorder %s32, 0
      %p227 = por %p225, %p226
      %s229 = sadd.s32 %s228, 1
      %p232 = scmp.eq.s32.totalorder %s26, 1
      %p233 = scmp.ne.s32.totalorder %s228, %s230
      %p234 = scmp.eq.s32.totalorder %s26, 0
      %p235 = por %p233, %p234
      %p236 = scmp.ne.s32.totalorder %s228, %s230
      %p237 = scmp.eq.s32.totalorder %s31, 1
      %p238 = por %p236, %p237
      %p239 = scmp.ne.s32.totalorder %s230, %s231
      %p240 = scmp.eq.s32.totalorder %s31, 0
      %p241 = por %p239, %p240
      %p242 = scmp.ne.s32.totalorder %s230, %s231
      %p243 = scmp.eq.s32.totalorder %s32, 1
      %p244 = por %p242, %p243
      %p246 = scmp.ne.s32.totalorder %s231, %s245
      %p247 = scmp.eq.s32.totalorder %s32, 0
      %p248 = por %p246, %p247
      %s250 = sadd.s32 %s249, 1
      %p253 = scmp.eq.s32.totalorder %s26, 1
      %p254 = scmp.ne.s32.totalorder %s249, %s251
      %p255 = scmp.eq.s32.totalorder %s26, 0
      %p256 = por %p254, %p255
      %p257 = scmp.ne.s32.totalorder %s249, %s251
      %p258 = scmp.eq.s32.totalorder %s31, 1
      %p259 = por %p257, %p258
      %p260 = scmp.ne.s32.totalorder %s251, %s252
      %p261 = scmp.eq.s32.totalorder %s31, 0
      %p262 = por %p260, %p261
      %p263 = scmp.ne.s32.totalorder %s251, %s252
      %p264 = scmp.eq.s32.totalorder %s32, 1
      %p265 = por %p263, %p264
      %p267 = scmp.ne.s32.totalorder %s252, %s266
      %p268 = scmp.eq.s32.totalorder %s32, 0
      %p269 = por %p267, %p268
      %p270 = scmp.le.s32.totalorder 1, %s26
      %p271 = scmp.lt.s32.totalorder %s26, 3
      %p272 = pnand %p270, %p271
      %p273 = pneg %p272
      // Predicated region
      $region9: #{nndc_forward.1} parent=5 // pred_check
        _
      $region10: #{nndc_forward.1} parent=5 // pred_check_branch
        %275 = sbr.rel (%p272) target = $region12
      $region11: #{nndc_forward.1} parent=5 // pred_region
        %s276 = ssub.s32 %s26, 1
        // Predicated region
        $region13: #{nndc_forward.1} parent=11 // pred_check
          %p277 = pneg %p47
        $region14: #{nndc_forward.1} parent=11 // pred_check_branch
          %279 = sbr.rel (%p277) target = $region16
        $region15: #{nndc_forward.1} parent=11 // pred_region
          %s281 = ssub.s32 16, 16
          %282 = vsyncadd [#allocation11], %s281
          %s284 = sshll.u32 [#allocation10], 4
          %s285 = int_to_ptr.vmem [resolvable:$true] %s284
          %287 = dma.hbm_to_vmem [thread:$0]  %s0, 16, %s285, [#allocation11]
        $region16: #{nndc_forward.1} parent=11 // pred_fallthru
          _
        // Predicated region
        $region17: #{nndc_forward.1} parent=11 // pred_check
          %p288 = pneg %p68
        $region18: #{nndc_forward.1} parent=11 // pred_check_branch
          %290 = sbr.rel (%p288) target = $region20
        $region19: #{nndc_forward.1} parent=11 // pred_region
          %s292 = ssub.s32 128, 128
          %293 = vsyncadd [#allocation15], %s292
          %s295 = sshll.u32 [#allocation14], 4
          %s296 = int_to_ptr.vmem [resolvable:$true] %s295
          %298 = dma.hbm_to_vmem [thread:$0]  %s1, 128, %s296, [#allocation15]
        $region20: #{nndc_forward.1} parent=11 // pred_fallthru
          _
        // Predicated region
        $region21: #{nndc_forward.1} parent=11 // pred_check
          %p299 = pneg %p89
        $region22: #{nndc_forward.1} parent=11 // pred_check_branch
          %301 = sbr.rel (%p299) target = $region24
        $region23: #{nndc_forward.1} parent=11 // pred_region
          %s303 = ssub.s32 16, 16
          %304 = vsyncadd [#allocation15], %s303
          %s306 = sshll.u32 [#allocation16], 4
          %s307 = int_to_ptr.vmem [resolvable:$true] %s306
          %309 = dma.hbm_to_vmem [thread:$0]  %s2, 16, %s307, [#allocation15]
        $region24: #{nndc_forward.1} parent=11 // pred_fallthru
          _
        // Predicated region
        $region25: #{nndc_forward.1} parent=11 // pred_check
          %p310 = pneg %p110
        $region26: #{nndc_forward.1} parent=11 // pred_check_branch
          %312 = sbr.rel (%p310) target = $region28
        $region27: #{nndc_forward.1} parent=11 // pred_region
          %s314 = ssub.s32 6144, 6144
          %315 = vsyncadd [#allocation18], %s314
          %s316 = sshll.u32 [#allocation17], 4
          %s317 = int_to_ptr.vmem [resolvable:$true] %s316
          %322 = dma.hbm_to_vmem [thread:$0]  %s3, 6144, %s317, [#allocation18], 1536, 1536, 96
        $region28: #{nndc_forward.1} parent=11 // pred_fallthru
          _
        // Predicated region
        $region29: #{nndc_forward.1} parent=11 // pred_check
          %p323 = pneg %p131
        $region30: #{nndc_forward.1} parent=11 // pred_check_branch
          %325 = sbr.rel (%p323) target = $region32
        $region31: #{nndc_forward.1} parent=11 // pred_region
          %s327 = ssub.s32 192, 192
          %328 = vsyncadd [#allocation18], %s327
          %s330 = sshll.u32 [#allocation19], 4
          %s331 = int_to_ptr.vmem [resolvable:$true] %s330
          %333 = dma.hbm_to_vmem [thread:$0]  %s4, 192, %s331, [#allocation18]
        $region32: #{nndc_forward.1} parent=11 // pred_fallthru
          _
        // Predicated region
        $region33: #{nndc_forward.1} parent=11 // pred_check
          %p334 = pneg %p152
        $region34: #{nndc_forward.1} parent=11 // pred_check_branch
          %336 = sbr.rel (%p334) target = $region36
        $region35: #{nndc_forward.1} parent=11 // pred_region
          _
        $region36: #{nndc_forward.1} parent=11 // pred_fallthru
          _
        // Predicated region
        $region37: #{nndc_forward.1} parent=11 // pred_check
          %p337 = pneg %p199
        $region38: #{nndc_forward.1} parent=11 // pred_check_branch
          %339 = sbr.rel (%p337) target = $region40
        $region39: #{nndc_forward.1} parent=11 // pred_region
          %s341 = ssub.s32 16, 16
          %342 = vsyncadd [#allocation13], %s341
          %345 = dma.hbm_to_smem %s7, 16, [#allocation22], [#allocation13]
        $region40: #{nndc_forward.1} parent=11 // pred_fallthru
          _
        // Predicated region
        $region41: #{nndc_forward.1} parent=11 // pred_check
          %p346 = pneg %p220
        $region42: #{nndc_forward.1} parent=11 // pred_check_branch
          %348 = sbr.rel (%p346) target = $region44
        $region43: #{nndc_forward.1} parent=11 // pred_region
          %s350 = ssub.s32 16, 16
          %351 = vsyncadd [#allocation24], %s350
          %354 = dma.hbm_to_smem %s8, 16, [#allocation23], [#allocation24]
        $region44: #{nndc_forward.1} parent=11 // pred_fallthru
          _
        // Predicated region
        $region45: #{nndc_forward.1} parent=11 // pred_check
          %p355 = pneg %p241
        $region46: #{nndc_forward.1} parent=11 // pred_check_branch
          %357 = sbr.rel (%p355) target = $region48
        $region47: #{nndc_forward.1} parent=11 // pred_region
          _
        $region48: #{nndc_forward.1} parent=11 // pred_fallthru
          _
      $region12: #{nndc_forward.1} parent=5 // pred_fallthru
        _
      %p358 = scmp.lt.s32.totalorder %s26, 2
      // Predicated region
      $region49: #{nndc_forward.1} parent=5 // pred_check
        %p359 = pneg %p358
      $region50: #{nndc_forward.1} parent=5 // pred_check_branch
        %361 = sbr.rel (%p359) target = $region52
      $region51: #{nndc_forward.1} parent=5 // pred_region
        // Predicated region
        $region53: #{nndc_forward.1} parent=51 // pred_check
          %p362 = pneg %p172
        $region54: #{nndc_forward.1} parent=51 // pred_check_branch
          %364 = sbr.rel (%p362) target = $region56
        $region55: #{nndc_forward.1} parent=51 // pred_region
          %s365 = sand.u32 %s162, 1
          %s366 = scalar_lea.sflag [#allocation21], %s365
          %s367 = sand.u32 %s162, 1
          %s368 = smul.addr %s367, 1536
          %s369 = scalar_lea.vmem [#allocation20], %s368
          %s370 = smul.u32 16, %s26
          %s372 = ssub.s32 24576, 24576
          %373 = vsyncadd %s366, %s372
          %s374 = smul.addr %s370, 24
          %s375 = smul.addr %s374, 64
          %s376 = scalar_lea.hbm %s6, %s375
          %s377 = sshll.u32 %s369, 4
          %s378 = int_to_ptr.vmem [resolvable:$true] %s377
          %383 = dma.hbm_to_vmem [thread:$0]  %s376, 24576, %s378, %s366, 1536, 1536, 96
        $region56: #{nndc_forward.1} parent=51 // pred_fallthru
          _
      $region52: #{nndc_forward.1} parent=5 // pred_fallthru
        _
      %p384 = scmp.le.s32.totalorder 1, %s26
      %p385 = scmp.lt.s32.totalorder %s26, 3
      %p386 = pnand %p384, %p385
      %p387 = pneg %p386
      // Predicated region
      $region57: #{nndc_forward.1} parent=5 // pred_check
        _
      $region58: #{nndc_forward.1} parent=5 // pred_check_branch
        %389 = sbr.rel (%p386) target = $region60
      $region59: #{nndc_forward.1} parent=5 // pred_region
        %s390 = ssub.s32 %s26, 1
        // Predicated region
        $region61: #{nndc_forward.1} parent=59 // pred_check
          %p391 = pneg %p47
        $region62: #{nndc_forward.1} parent=59 // pred_check_branch
          %393 = sbr.rel (%p391) target = $region64
        $region63: #{nndc_forward.1} parent=59 // pred_region
          %394 = dma.done [#allocation11], 16
        $region64: #{nndc_forward.1} parent=59 // pred_fallthru
          _
        // Predicated region
        $region65: #{nndc_forward.1} parent=59 // pred_check
          %p395 = pneg %p68
        $region66: #{nndc_forward.1} parent=59 // pred_check_branch
          %397 = sbr.rel (%p395) target = $region68
        $region67: #{nndc_forward.1} parent=59 // pred_region
          %398 = dma.done [#allocation15], 128
        $region68: #{nndc_forward.1} parent=59 // pred_fallthru
          _
        // Predicated region
        $region69: #{nndc_forward.1} parent=59 // pred_check
          %p399 = pneg %p89
        $region70: #{nndc_forward.1} parent=59 // pred_check_branch
          %401 = sbr.rel (%p399) target = $region72
        $region71: #{nndc_forward.1} parent=59 // pred_region
          %402 = dma.done [#allocation15], 16
        $region72: #{nndc_forward.1} parent=59 // pred_fallthru
          _
        // Predicated region
        $region73: #{nndc_forward.1} parent=59 // pred_check
          %p403 = pneg %p110
        $region74: #{nndc_forward.1} parent=59 // pred_check_branch
          %405 = sbr.rel (%p403) target = $region76
        $region75: #{nndc_forward.1} parent=59 // pred_region
          %406 = dma.done [#allocation18], 6144
        $region76: #{nndc_forward.1} parent=59 // pred_fallthru
          _
        // Predicated region
        $region77: #{nndc_forward.1} parent=59 // pred_check
          %p407 = pneg %p131
        $region78: #{nndc_forward.1} parent=59 // pred_check_branch
          %409 = sbr.rel (%p407) target = $region80
        $region79: #{nndc_forward.1} parent=59 // pred_region
          %410 = dma.done [#allocation18], 192
        $region80: #{nndc_forward.1} parent=59 // pred_fallthru
          _
        %s411 = sand.u32 %s165, 1
        %s412 = scalar_lea.sflag [#allocation21], %s411
        %s413 = sand.u32 %s165, 1
        %s414 = smul.addr %s413, 1536
        %s415 = scalar_lea.vmem [#allocation20], %s414
        // Predicated region
        $region81: #{nndc_forward.1} parent=59 // pred_check
          %p416 = pneg %p178
        $region82: #{nndc_forward.1} parent=59 // pred_check_branch
          %418 = sbr.rel (%p416) target = $region84
        $region83: #{nndc_forward.1} parent=59 // pred_region
          %419 = dma.done %s412, 24576
        $region84: #{nndc_forward.1} parent=59 // pred_fallthru
          _
        // Predicated region
        $region85: #{nndc_forward.1} parent=59 // pred_check
          %p420 = pneg %p199
        $region86: #{nndc_forward.1} parent=59 // pred_check_branch
          %422 = sbr.rel (%p420) target = $region88
        $region87: #{nndc_forward.1} parent=59 // pred_region
          %423 = dma.done [#allocation13], 16
        $region88: #{nndc_forward.1} parent=59 // pred_fallthru
          _
        // Predicated region
        $region89: #{nndc_forward.1} parent=59 // pred_check
          %p424 = pneg %p220
        $region90: #{nndc_forward.1} parent=59 // pred_check_branch
          %426 = sbr.rel (%p424) target = $region92
        $region91: #{nndc_forward.1} parent=59 // pred_region
          %427 = dma.done [#allocation24], 16
        $region92: #{nndc_forward.1} parent=59 // pred_fallthru
          _
        %428 = sfence
        %p429 = pneg %p47
        %p430 = pneg %p44
        %p431 = pneg %p68
        %p432 = pneg %p65
        %p433 = pneg %p89
        %p434 = pneg %p86
        %p435 = pneg %p110
        %p436 = pneg %p107
        %p437 = pneg %p131
        %p438 = pneg %p128
        %p439 = pneg %p152
        %p440 = pneg %p149
        %s441 = sand.u32 %s165, 1
        %s442 = scalar_lea.sflag [#allocation21], %s441
        %s443 = sand.u32 %s165, 1
        %s444 = smul.addr %s443, 1536
        %s445 = scalar_lea.vmem [#allocation20], %s444
        %p446 = pneg %p178
        %p447 = pneg %p175
        %p448 = pneg %p199
        %p449 = pneg %p196
        %p450 = pneg %p220
        %p451 = pneg %p217
        %p452 = pneg %p241
        %p453 = pneg %p238
        %p454 = pneg %p262
        %p455 = pneg %p259
        %s456 = smul.u32 16, %s31
        %p458 = scmp.eq.s32.totalorder %s31, 0
        // Predicated region
        $region93: #{nndc_forward.1} parent=59 // pred_check
          %p459 = pneg %p458
        $region94: #{nndc_forward.1} parent=59 // pred_check_branch
          %461 = sbr.rel (%p459) target = $region96
        $region95: #{nndc_forward.1} parent=59 // pred_region
          %v462 = vld [vmem:[#allocation10] sm:$0x1]
          %v463 = vld [vmem:[#allocation14] sm:$0xff]
          %v464 = vld [vmem:[#allocation16] sm:$0x1]
          %vm465 = vcmask 64512
          %v467 = vsel %vm465, %v462, 0
          %469 = vmatprep.subr.mxu0 0.0
          %470 = vmatpush1.msra.mxu0 0.0
          %471 = vmatprep.subr.mxu0 0.0
          %472 = vmatpush1.msra.mxu0 0.0
          %473 = vmatprep.subr.mxu0 0.0
          %474 = vmatpush1.msra.mxu0 0.0
          %475 = vmatprep.subr.mxu0 0.0
          %476 = vmatpush1.msra.mxu0 0.0
          %477 = vmatprep.subr.mxu0 0.0
          %478 = vmatpush1.msra.mxu0 0.0
          %479 = vmatprep.subr.mxu0 0.0
          %480 = vmatpush1.msra.mxu0 0.0
          %481 = vmatprep.subr.mxu0 0.0
          %482 = vmatpush1.msra.mxu0 0.0
          %483 = vmatprep.subr.mxu0 0.0
          %484 = vmatpush1.msra.mxu0 0.0
          %485 = vmatprep.subr.mxu0 0.0
          %486 = vmatpush1.msra.mxu0 0.0
          %487 = vmatprep.subr.mxu0 0.0
          %488 = vmatpush1.msra.mxu0 0.0
          %489 = vmatprep.subr.mxu0 0.0
          %490 = vmatpush1.msra.mxu0 0.0
          %491 = vmatprep.subr.mxu0 0.0
          %492 = vmatpush1.msra.mxu0 0.0
          %493 = vmatprep.subr.mxu0 0.0
          %494 = vmatpush1.msra.mxu0 0.0
          %495 = vmatprep.subr.mxu0 0.0
          %496 = vmatpush1.msra.mxu0 0.0
          %497 = vmatprep.subr.mxu0 0.0
          %498 = vmatpush1.msra.mxu0 0.0
          %499 = vmatprep.subr.mxu0 0.0
          %500 = vmatpush1.msra.mxu0 %v463
          %501 = vmatprep.subr.mxu0 0.0
          %502 = vmatpush2.msra.mxu0 0.0
          %503 = vmatprep.subr.mxu0 0.0
          %504 = vmatpush2.msra.mxu0 0.0
          %505 = vmatprep.subr.mxu0 0.0
          %506 = vmatpush2.msra.mxu0 0.0
          %507 = vmatprep.subr.mxu0 0.0
          %508 = vmatpush2.msra.mxu0 0.0
          %509 = vmatprep.subr.mxu0 0.0
          %510 = vmatpush2.msra.mxu0 0.0
          %511 = vmatprep.subr.mxu0 0.0
          %512 = vmatpush2.msra.mxu0 0.0
          %513 = vmatprep.subr.mxu0 0.0
          %514 = vmatpush2.msra.mxu0 0.0
          %515 = vmatprep.subr.mxu0 0.0
          %516 = vmatpush2.msra.mxu0 0.0
          %517 = vmatprep.subr.mxu0 0.0
          %518 = vmatpush2.msra.mxu0 0.0
          %519 = vmatprep.subr.mxu0 0.0
          %520 = vmatpush2.msra.mxu0 0.0
          %521 = vmatprep.subr.mxu0 0.0
          %522 = vmatpush2.msra.mxu0 0.0
          %523 = vmatprep.subr.mxu0 0.0
          %524 = vmatpush2.msra.mxu0 0.0
          %525 = vmatprep.subr.mxu0 0.0
          %526 = vmatpush2.msra.mxu0 0.0
          %527 = vmatprep.subr.mxu0 0.0
          %528 = vmatpush2.msra.mxu0 0.0
          %529 = vmatprep.subr.mxu0 0.0
          %530 = vmatpush2.msra.mxu0 0.0
          %531 = vmatprep.subr.mxu0 0.0
          %532 = vmatpush2.msra.mxu0 0.0
          %533 = vmatprep.mubr.f32.mxu0 0.0
          %534 = vmatmul.mubr.f32.gmra.mxu0 %v467
          %v535 = vpop.f32.mrf.mxu0
          %v536 = vadd.f32 %v464, %v535
          %v537 = vpop.f32.mrf.mxu0
          %538 = vdwg.mxu0
          %vm539 = vcmp.gt.f32.partialorder %v536, 0.0
          %v540 = vmul.f32 %v536, 0.2
          %v541 = vsel %vm539, %v536, %v540
          %v542 = vld [vmem:[#allocation17] sm:$0xff]
          %v543 = vld [vmem:[#allocation17 + $0x8] sm:$0xff]
          %v544 = vld [vmem:[#allocation17 + $0x10] sm:$0xff]
          %v545 = vld [vmem:[#allocation17 + $0x18] sm:$0xff]
          %v546 = vld [vmem:[#allocation17 + $0x20] sm:$0xff]
          %v547 = vld [vmem:[#allocation17 + $0x28] sm:$0xff]
          %v548 = vld [vmem:[#allocation17 + $0x30] sm:$0xff]
          %v549 = vld [vmem:[#allocation17 + $0x38] sm:$0xff]
          %v550 = vld [vmem:[#allocation17 + $0x40] sm:$0xff]
          %v551 = vld [vmem:[#allocation17 + $0x48] sm:$0xff]
          %v552 = vld [vmem:[#allocation17 + $0x50] sm:$0xff]
          %v553 = vld [vmem:[#allocation17 + $0x58] sm:$0xff]
          %v554 = vld [vmem:[#allocation17 + $0x60] sm:$0xff]
          %v555 = vld [vmem:[#allocation17 + $0x68] sm:$0xff]
          %v556 = vld [vmem:[#allocation17 + $0x70] sm:$0xff]
          %v557 = vld [vmem:[#allocation17 + $0x78] sm:$0xff]
          %v558 = vld [vmem:[#allocation17 + $0x80] sm:$0xff]
          %v559 = vld [vmem:[#allocation17 + $0x88] sm:$0xff]
          %v560 = vld [vmem:[#allocation17 + $0x90] sm:$0xff]
          %v561 = vld [vmem:[#allocation17 + $0x98] sm:$0xff]
          %v562 = vld [vmem:[#allocation17 + $0xa0] sm:$0xff]
          %v563 = vld [vmem:[#allocation17 + $0xa8] sm:$0xff]
          %v564 = vld [vmem:[#allocation17 + $0xb0] sm:$0xff]
          %v565 = vld [vmem:[#allocation17 + $0xb8] sm:$0xff]
          %v566 = vld [vmem:[#allocation17 + $0xc0] sm:$0xff]
          %v567 = vld [vmem:[#allocation17 + $0xc8] sm:$0xff]
          %v568 = vld [vmem:[#allocation17 + $0xd0] sm:$0xff]
          %v569 = vld [vmem:[#allocation17 + $0xd8] sm:$0xff]
          %v570 = vld [vmem:[#allocation17 + $0xe0] sm:$0xff]
          %v571 = vld [vmem:[#allocation17 + $0xe8] sm:$0xff]
          %v572 = vld [vmem:[#allocation17 + $0xf0] sm:$0xff]
          %v573 = vld [vmem:[#allocation17 + $0xf8] sm:$0xff]
          %v574 = vld [vmem:[#allocation17 + $0x100] sm:$0xff]
          %v575 = vld [vmem:[#allocation17 + $0x108] sm:$0xff]
          %v576 = vld [vmem:[#allocation17 + $0x110] sm:$0xff]
          %v577 = vld [vmem:[#allocation17 + $0x118] sm:$0xff]
          %v578 = vld [vmem:[#allocation17 + $0x120] sm:$0x7]
          %v579 = vld [vmem:[#allocation17 + $0x128] sm:$0x7]
          %v580 = vld [vmem:[#allocation17 + $0x130] sm:$0x7]
          %v581 = vld [vmem:[#allocation17 + $0x138] sm:$0x7]
          %v582 = vld [vmem:[#allocation17 + $0x140] sm:$0x7]
          %v583 = vld [vmem:[#allocation17 + $0x148] sm:$0x7]
          %v584 = vld [vmem:[#allocation17 + $0x150] sm:$0x7]
          %v585 = vld [vmem:[#allocation17 + $0x158] sm:$0x7]
          %v586 = vld [vmem:[#allocation17 + $0x160] sm:$0x7]
          %v587 = vld [vmem:[#allocation17 + $0x168] sm:$0x7]
          %v588 = vld [vmem:[#allocation17 + $0x170] sm:$0x7]
          %v589 = vld [vmem:[#allocation17 + $0x178] sm:$0x7]
          %v590 = vld [vmem:[#allocation19] sm:$0xff]
          %v591 = vld [vmem:[#allocation19 + $0x8] sm:$0xf]
          %v594 = vlaneseq
          %v595 = vshrl.u32 %v594, 7
          %v596 = vsub.s32 0, %v595
          %v597 = vrot.slane %v590, %v596
          %v598 = vlaneseq
          %v599 = vshrl.u32 %v598, 7
          %v600 = vsub.s32 1, %v599
          %v601 = vrot.slane %v590, %v600
          %v602 = vlaneseq
          %v603 = vshrl.u32 %v602, 7
          %v604 = vsub.s32 2, %v603
          %v605 = vrot.slane %v590, %v604
          %v606 = vlaneseq
          %v607 = vshrl.u32 %v606, 7
          %v608 = vsub.s32 3, %v607
          %v609 = vrot.slane %v590, %v608
          %v610 = vlaneseq
          %v611 = vshrl.u32 %v610, 7
          %v612 = vsub.s32 4, %v611
          %v613 = vrot.slane %v590, %v612
          %v614 = vlaneseq
          %v615 = vshrl.u32 %v614, 7
          %v616 = vsub.s32 5, %v615
          %v617 = vrot.slane %v590, %v616
          %v618 = vlaneseq
          %v619 = vshrl.u32 %v618, 7
          %v620 = vsub.s32 6, %v619
          %v621 = vrot.slane %v590, %v620
          %v622 = vlaneseq
          %v623 = vshrl.u32 %v622, 7
          %v624 = vsub.s32 7, %v623
          %v625 = vrot.slane %v590, %v624
          %v626 = vlaneseq
          %v627 = vshrl.u32 %v626, 7
          %v628 = vsub.s32 0, %v627
          %v629 = vrot.slane %v591, %v628
          %v630 = vlaneseq
          %v631 = vshrl.u32 %v630, 7
          %v632 = vsub.s32 1, %v631
          %v633 = vrot.slane %v591, %v632
          %v634 = vlaneseq
          %v635 = vshrl.u32 %v634, 7
          %v636 = vsub.s32 2, %v635
          %v637 = vrot.slane %v591, %v636
          %v638 = vlaneseq
          %v639 = vshrl.u32 %v638, 7
          %v640 = vsub.s32 3, %v639
          %v641 = vrot.slane %v591, %v640
          %vm654 = vcmask 220160
          %v656 = vsel %vm654, %v541, 0
          %vm658 = vcmask 1042432
          %v660 = vsel %vm658, %v578, 0
          %v663 = vsel %vm658, %v579, 0
          %v666 = vsel %vm658, %v580, 0
          %v669 = vsel %vm658, %v581, 0
          %v672 = vsel %vm658, %v582, 0
          %v675 = vsel %vm658, %v583, 0
          %v678 = vsel %vm658, %v584, 0
          %v681 = vsel %vm658, %v585, 0
          %v684 = vsel %vm658, %v586, 0
          %v687 = vsel %vm658, %v587, 0
          %v690 = vsel %vm658, %v588, 0
          %v693 = vsel %vm658, %v589, 0
          %695 = vmatprep.subr.mxu0 0.0
          %696 = vmatpush1.msra.mxu0 0.0
          %697 = vmatprep.subr.mxu0 0.0
          %698 = vmatpush1.msra.mxu0 0.0
          %699 = vmatprep.subr.mxu0 0.0
          %700 = vmatpush1.msra.mxu0 0.0
          %701 = vmatprep.subr.mxu0 0.0
          %702 = vmatpush1.msra.mxu0 0.0
          %703 = vmatprep.subr.mxu0 0.0
          %704 = vmatpush1.msra.mxu0 0.0
          %705 = vmatprep.subr.mxu0 0.0
          %706 = vmatpush1.msra.mxu0 0.0
          %707 = vmatprep.subr.mxu0 0.0
          %708 = vmatpush1.msra.mxu0 0.0
          %709 = vmatprep.subr.mxu0 0.0
          %710 = vmatpush1.msra.mxu0 0.0
          %711 = vmatprep.subr.mxu0 0.0
          %712 = vmatpush1.msra.mxu0 0.0
          %713 = vmatprep.subr.mxu0 0.0
          %714 = vmatpush1.msra.mxu0 0.0
          %715 = vmatprep.subr.mxu0 0.0
          %716 = vmatpush1.msra.mxu0 0.0
          %717 = vmatprep.subr.mxu0 0.0
          %718 = vmatpush1.msra.mxu0 0.0
          %719 = vmatprep.subr.mxu0 %v663
          %720 = vmatpush1.msra.mxu0 %v660
          %721 = vmatprep.subr.mxu0 %v567
          %722 = vmatpush1.msra.mxu0 %v566
          %723 = vmatprep.subr.mxu0 %v555
          %724 = vmatpush1.msra.mxu0 %v554
          %725 = vmatprep.subr.mxu0 %v543
          %726 = vmatpush1.msra.mxu0 %v542
          %727 = vmatprep.subr.mxu0 0.0
          %728 = vmatpush2.msra.mxu0 0.0
          %729 = vmatprep.subr.mxu0 0.0
          %730 = vmatpush2.msra.mxu0 0.0
          %731 = vmatprep.subr.mxu0 0.0
          %732 = vmatpush2.msra.mxu0 0.0
          %733 = vmatprep.subr.mxu0 0.0
          %734 = vmatpush2.msra.mxu0 0.0
          %735 = vmatprep.subr.mxu0 0.0
          %736 = vmatpush2.msra.mxu0 0.0
          %737 = vmatprep.subr.mxu0 0.0
          %738 = vmatpush2.msra.mxu0 0.0
          %739 = vmatprep.subr.mxu0 0.0
          %740 = vmatpush2.msra.mxu0 0.0
          %741 = vmatprep.subr.mxu0 0.0
          %742 = vmatpush2.msra.mxu0 0.0
          %743 = vmatprep.subr.mxu0 0.0
          %744 = vmatpush2.msra.mxu0 0.0
          %745 = vmatprep.subr.mxu0 0.0
          %746 = vmatpush2.msra.mxu0 0.0
          %747 = vmatprep.subr.mxu0 0.0
          %748 = vmatpush2.msra.mxu0 0.0
          %749 = vmatprep.subr.mxu0 0.0
          %750 = vmatpush2.msra.mxu0 0.0
          %751 = vmatprep.subr.mxu0 0.0
          %752 = vmatpush2.msra.mxu0 0.0
          %753 = vmatprep.subr.mxu0 0.0
          %754 = vmatpush2.msra.mxu0 0.0
          %755 = vmatprep.subr.mxu0 0.0
          %756 = vmatpush2.msra.mxu0 0.0
          %757 = vmatprep.subr.mxu0 0.0
          %758 = vmatpush2.msra.mxu0 0.0
          %759 = vmatprep.mubr.f32.mxu0 0.0
          %760 = vmatmul.mubr.f32.gmra.mxu0 %v656
          %v761 = vpop.f32.mrf.mxu0
          %v762 = vadd.f32 %v597, %v761
          %v763 = vpop.f32.mrf.mxu0
          %v764 = vadd.f32 %v601, %v763
          %765 = vdwg.mxu0
          %766 = vmatprep.subr.mxu0 0.0
          %767 = vmatpush1.msra.mxu0 0.0
          %768 = vmatprep.subr.mxu0 0.0
          %769 = vmatpush1.msra.mxu0 0.0
          %770 = vmatprep.subr.mxu0 0.0
          %771 = vmatpush1.msra.mxu0 0.0
          %772 = vmatprep.subr.mxu0 0.0
          %773 = vmatpush1.msra.mxu0 0.0
          %774 = vmatprep.subr.mxu0 0.0
          %775 = vmatpush1.msra.mxu0 0.0
          %776 = vmatprep.subr.mxu0 0.0
          %777 = vmatpush1.msra.mxu0 0.0
          %778 = vmatprep.subr.mxu0 0.0
          %779 = vmatpush1.msra.mxu0 0.0
          %780 = vmatprep.subr.mxu0 0.0
          %781 = vmatpush1.msra.mxu0 0.0
          %782 = vmatprep.subr.mxu0 0.0
          %783 = vmatpush1.msra.mxu0 0.0
          %784 = vmatprep.subr.mxu0 0.0
          %785 = vmatpush1.msra.mxu0 0.0
          %786 = vmatprep.subr.mxu0 0.0
          %787 = vmatpush1.msra.mxu0 0.0
          %788 = vmatprep.subr.mxu0 0.0
          %789 = vmatpush1.msra.mxu0 0.0
          %790 = vmatprep.subr.mxu0 %v669
          %791 = vmatpush1.msra.mxu0 %v666
          %792 = vmatprep.subr.mxu0 %v569
          %793 = vmatpush1.msra.mxu0 %v568
          %794 = vmatprep.subr.mxu0 %v557
          %795 = vmatpush1.msra.mxu0 %v556
          %796 = vmatprep.subr.mxu0 %v545
          %797 = vmatpush1.msra.mxu0 %v544
          %798 = vmatprep.subr.mxu0 0.0
          %799 = vmatpush2.msra.mxu0 0.0
          %800 = vmatprep.subr.mxu0 0.0
          %801 = vmatpush2.msra.mxu0 0.0
          %802 = vmatprep.subr.mxu0 0.0
          %803 = vmatpush2.msra.mxu0 0.0
          %804 = vmatprep.subr.mxu0 0.0
          %805 = vmatpush2.msra.mxu0 0.0
          %806 = vmatprep.subr.mxu0 0.0
          %807 = vmatpush2.msra.mxu0 0.0
          %808 = vmatprep.subr.mxu0 0.0
          %809 = vmatpush2.msra.mxu0 0.0
          %810 = vmatprep.subr.mxu0 0.0
          %811 = vmatpush2.msra.mxu0 0.0
          %812 = vmatprep.subr.mxu0 0.0
          %813 = vmatpush2.msra.mxu0 0.0
          %814 = vmatprep.subr.mxu0 0.0
          %815 = vmatpush2.msra.mxu0 0.0
          %816 = vmatprep.subr.mxu0 0.0
          %817 = vmatpush2.msra.mxu0 0.0
          %818 = vmatprep.subr.mxu0 0.0
          %819 = vmatpush2.msra.mxu0 0.0
          %820 = vmatprep.subr.mxu0 0.0
          %821 = vmatpush2.msra.mxu0 0.0
          %822 = vmatprep.subr.mxu0 0.0
          %823 = vmatpush2.msra.mxu0 0.0
          %824 = vmatprep.subr.mxu0 0.0
          %825 = vmatpush2.msra.mxu0 0.0
          %826 = vmatprep.subr.mxu0 0.0
          %827 = vmatpush2.msra.mxu0 0.0
          %828 = vmatprep.subr.mxu0 0.0
          %829 = vmatpush2.msra.mxu0 0.0
          %830 = vmatprep.mubr.f32.mxu0 0.0
          %831 = vmatmul.mubr.f32.gmra.mxu0 %v656
          %v832 = vpop.f32.mrf.mxu0
          %v833 = vadd.f32 %v605, %v832
          %v834 = vpop.f32.mrf.mxu0
          %v835 = vadd.f32 %v609, %v834
          %836 = vdwg.mxu0
          %837 = vmatprep.subr.mxu0 0.0
          %838 = vmatpush1.msra.mxu0 0.0
          %839 = vmatprep.subr.mxu0 0.0
          %840 = vmatpush1.msra.mxu0 0.0
          %841 = vmatprep.subr.mxu0 0.0
          %842 = vmatpush1.msra.mxu0 0.0
          %843 = vmatprep.subr.mxu0 0.0
          %844 = vmatpush1.msra.mxu0 0.0
          %845 = vmatprep.subr.mxu0 0.0
          %846 = vmatpush1.msra.mxu0 0.0
          %847 = vmatprep.subr.mxu0 0.0
          %848 = vmatpush1.msra.mxu0 0.0
          %849 = vmatprep.subr.mxu0 0.0
          %850 = vmatpush1.msra.mxu0 0.0
          %851 = vmatprep.subr.mxu0 0.0
          %852 = vmatpush1.msra.mxu0 0.0
          %853 = vmatprep.subr.mxu0 0.0
          %854 = vmatpush1.msra.mxu0 0.0
          %855 = vmatprep.subr.mxu0 0.0
          %856 = vmatpush1.msra.mxu0 0.0
          %857 = vmatprep.subr.mxu0 0.0
          %858 = vmatpush1.msra.mxu0 0.0
          %859 = vmatprep.subr.mxu0 0.0
          %860 = vmatpush1.msra.mxu0 0.0
          %861 = vmatprep.subr.mxu0 %v675
          %862 = vmatpush1.msra.mxu0 %v672
          %863 = vmatprep.subr.mxu0 %v571
          %864 = vmatpush1.msra.mxu0 %v570
          %865 = vmatprep.subr.mxu0 %v559
          %866 = vmatpush1.msra.mxu0 %v558
          %867 = vmatprep.subr.mxu0 %v547
          %868 = vmatpush1.msra.mxu0 %v546
          %869 = vmatprep.subr.mxu0 0.0
          %870 = vmatpush2.msra.mxu0 0.0
          %871 = vmatprep.subr.mxu0 0.0
          %872 = vmatpush2.msra.mxu0 0.0
          %873 = vmatprep.subr.mxu0 0.0
          %874 = vmatpush2.msra.mxu0 0.0
          %875 = vmatprep.subr.mxu0 0.0
          %876 = vmatpush2.msra.mxu0 0.0
          %877 = vmatprep.subr.mxu0 0.0
          %878 = vmatpush2.msra.mxu0 0.0
          %879 = vmatprep.subr.mxu0 0.0
          %880 = vmatpush2.msra.mxu0 0.0
          %881 = vmatprep.subr.mxu0 0.0
          %882 = vmatpush2.msra.mxu0 0.0
          %883 = vmatprep.subr.mxu0 0.0
          %884 = vmatpush2.msra.mxu0 0.0
          %885 = vmatprep.subr.mxu0 0.0
          %886 = vmatpush2.msra.mxu0 0.0
          %887 = vmatprep.subr.mxu0 0.0
          %888 = vmatpush2.msra.mxu0 0.0
          %889 = vmatprep.subr.mxu0 0.0
          %890 = vmatpush2.msra.mxu0 0.0
          %891 = vmatprep.subr.mxu0 0.0
          %892 = vmatpush2.msra.mxu0 0.0
          %893 = vmatprep.subr.mxu0 0.0
          %894 = vmatpush2.msra.mxu0 0.0
          %895 = vmatprep.subr.mxu0 0.0
          %896 = vmatpush2.msra.mxu0 0.0
          %897 = vmatprep.subr.mxu0 0.0
          %898 = vmatpush2.msra.mxu0 0.0
          %899 = vmatprep.subr.mxu0 0.0
          %900 = vmatpush2.msra.mxu0 0.0
          %901 = vmatprep.mubr.f32.mxu0 0.0
          %902 = vmatmul.mubr.f32.gmra.mxu0 %v656
          %v903 = vpop.f32.mrf.mxu0
          %v904 = vadd.f32 %v613, %v903
          %v905 = vpop.f32.mrf.mxu0
          %v906 = vadd.f32 %v617, %v905
          %907 = vdwg.mxu0
          %908 = vmatprep.subr.mxu0 0.0
          %909 = vmatpush1.msra.mxu0 0.0
          %910 = vmatprep.subr.mxu0 0.0
          %911 = vmatpush1.msra.mxu0 0.0
          %912 = vmatprep.subr.mxu0 0.0
          %913 = vmatpush1.msra.mxu0 0.0
          %914 = vmatprep.subr.mxu0 0.0
          %915 = vmatpush1.msra.mxu0 0.0
          %916 = vmatprep.subr.mxu0 0.0
          %917 = vmatpush1.msra.mxu0 0.0
          %918 = vmatprep.subr.mxu0 0.0
          %919 = vmatpush1.msra.mxu0 0.0
          %920 = vmatprep.subr.mxu0 0.0
          %921 = vmatpush1.msra.mxu0 0.0
          %922 = vmatprep.subr.mxu0 0.0
          %923 = vmatpush1.msra.mxu0 0.0
          %924 = vmatprep.subr.mxu0 0.0
          %925 = vmatpush1.msra.mxu0 0.0
          %926 = vmatprep.subr.mxu0 0.0
          %927 = vmatpush1.msra.mxu0 0.0
          %928 = vmatprep.subr.mxu0 0.0
          %929 = vmatpush1.msra.mxu0 0.0
          %930 = vmatprep.subr.mxu0 0.0
          %931 = vmatpush1.msra.mxu0 0.0
          %932 = vmatprep.subr.mxu0 %v681
          %933 = vmatpush1.msra.mxu0 %v678
          %934 = vmatprep.subr.mxu0 %v573
          %935 = vmatpush1.msra.mxu0 %v572
          %936 = vmatprep.subr.mxu0 %v561
          %937 = vmatpush1.msra.mxu0 %v560
          %938 = vmatprep.subr.mxu0 %v549
          %939 = vmatpush1.msra.mxu0 %v548
          %940 = vmatprep.subr.mxu0 0.0
          %941 = vmatpush2.msra.mxu0 0.0
          %942 = vmatprep.subr.mxu0 0.0
          %943 = vmatpush2.msra.mxu0 0.0
          %944 = vmatprep.subr.mxu0 0.0
          %945 = vmatpush2.msra.mxu0 0.0
          %946 = vmatprep.subr.mxu0 0.0
          %947 = vmatpush2.msra.mxu0 0.0
          %948 = vmatprep.subr.mxu0 0.0
          %949 = vmatpush2.msra.mxu0 0.0
          %950 = vmatprep.subr.mxu0 0.0
          %951 = vmatpush2.msra.mxu0 0.0
          %952 = vmatprep.subr.mxu0 0.0
          %953 = vmatpush2.msra.mxu0 0.0
          %954 = vmatprep.subr.mxu0 0.0
          %955 = vmatpush2.msra.mxu0 0.0
          %956 = vmatprep.subr.mxu0 0.0
          %957 = vmatpush2.msra.mxu0 0.0
          %958 = vmatprep.subr.mxu0 0.0
          %959 = vmatpush2.msra.mxu0 0.0
          %960 = vmatprep.subr.mxu0 0.0
          %961 = vmatpush2.msra.mxu0 0.0
          %962 = vmatprep.subr.mxu0 0.0
          %963 = vmatpush2.msra.mxu0 0.0
          %964 = vmatprep.subr.mxu0 0.0
          %965 = vmatpush2.msra.mxu0 0.0
          %966 = vmatprep.subr.mxu0 0.0
          %967 = vmatpush2.msra.mxu0 0.0
          %968 = vmatprep.subr.mxu0 0.0
          %969 = vmatpush2.msra.mxu0 0.0
          %970 = vmatprep.subr.mxu0 0.0
          %971 = vmatpush2.msra.mxu0 0.0
          %972 = vmatprep.mubr.f32.mxu0 0.0
          %973 = vmatmul.mubr.f32.gmra.mxu0 %v656
          %v974 = vpop.f32.mrf.mxu0
          %v975 = vadd.f32 %v621, %v974
          %v976 = vpop.f32.mrf.mxu0
          %v977 = vadd.f32 %v625, %v976
          %978 = vdwg.mxu0
          %979 = vmatprep.subr.mxu0 0.0
          %980 = vmatpush1.msra.mxu0 0.0
          %981 = vmatprep.subr.mxu0 0.0
          %982 = vmatpush1.msra.mxu0 0.0
          %983 = vmatprep.subr.mxu0 0.0
          %984 = vmatpush1.msra.mxu0 0.0
          %985 = vmatprep.subr.mxu0 0.0
          %986 = vmatpush1.msra.mxu0 0.0
          %987 = vmatprep.subr.mxu0 0.0
          %988 = vmatpush1.msra.mxu0 0.0
          %989 = vmatprep.subr.mxu0 0.0
          %990 = vmatpush1.msra.mxu0 0.0
          %991 = vmatprep.subr.mxu0 0.0
          %992 = vmatpush1.msra.mxu0 0.0
          %993 = vmatprep.subr.mxu0 0.0
          %994 = vmatpush1.msra.mxu0 0.0
          %995 = vmatprep.subr.mxu0 0.0
          %996 = vmatpush1.msra.mxu0 0.0
          %997 = vmatprep.subr.mxu0 0.0
          %998 = vmatpush1.msra.mxu0 0.0
          %999 = vmatprep.subr.mxu0 0.0
          %1000 = vmatpush1.msra.mxu0 0.0
          %1001 = vmatprep.subr.mxu0 0.0
          %1002 = vmatpush1.msra.mxu0 0.0
          %1003 = vmatprep.subr.mxu0 %v687
          %1004 = vmatpush1.msra.mxu0 %v684
          %1005 = vmatprep.subr.mxu0 %v575
          %1006 = vmatpush1.msra.mxu0 %v574
          %1007 = vmatprep.subr.mxu0 %v563
          %1008 = vmatpush1.msra.mxu0 %v562
          %1009 = vmatprep.subr.mxu0 %v551
          %1010 = vmatpush1.msra.mxu0 %v550
          %1011 = vmatprep.subr.mxu0 0.0
          %1012 = vmatpush2.msra.mxu0 0.0
          %1013 = vmatprep.subr.mxu0 0.0
          %1014 = vmatpush2.msra.mxu0 0.0
          %1015 = vmatprep.subr.mxu0 0.0
          %1016 = vmatpush2.msra.mxu0 0.0
          %1017 = vmatprep.subr.mxu0 0.0
          %1018 = vmatpush2.msra.mxu0 0.0
          %1019 = vmatprep.subr.mxu0 0.0
          %1020 = vmatpush2.msra.mxu0 0.0
          %1021 = vmatprep.subr.mxu0 0.0
          %1022 = vmatpush2.msra.mxu0 0.0
          %1023 = vmatprep.subr.mxu0 0.0
          %1024 = vmatpush2.msra.mxu0 0.0
          %1025 = vmatprep.subr.mxu0 0.0
          %1026 = vmatpush2.msra.mxu0 0.0
          %1027 = vmatprep.subr.mxu0 0.0
          %1028 = vmatpush2.msra.mxu0 0.0
          %1029 = vmatprep.subr.mxu0 0.0
          %1030 = vmatpush2.msra.mxu0 0.0
          %1031 = vmatprep.subr.mxu0 0.0
          %1032 = vmatpush2.msra.mxu0 0.0
          %1033 = vmatprep.subr.mxu0 0.0
          %1034 = vmatpush2.msra.mxu0 0.0
          %1035 = vmatprep.subr.mxu0 0.0
          %1036 = vmatpush2.msra.mxu0 0.0
          %1037 = vmatprep.subr.mxu0 0.0
          %1038 = vmatpush2.msra.mxu0 0.0
          %1039 = vmatprep.subr.mxu0 0.0
          %1040 = vmatpush2.msra.mxu0 0.0
          %1041 = vmatprep.subr.mxu0 0.0
          %1042 = vmatpush2.msra.mxu0 0.0
          %1043 = vmatprep.mubr.f32.mxu0 0.0
          %1044 = vmatmul.mubr.f32.gmra.mxu0 %v656
          %v1045 = vpop.f32.mrf.mxu0
          %v1046 = vadd.f32 %v629, %v1045
          %v1047 = vpop.f32.mrf.mxu0
          %v1048 = vadd.f32 %v633, %v1047
          %1049 = vdwg.mxu0
          %1050 = vmatprep.subr.mxu0 0.0
          %1051 = vmatpush1.msra.mxu0 0.0
          %1052 = vmatprep.subr.mxu0 0.0
          %1053 = vmatpush1.msra.mxu0 0.0
          %1054 = vmatprep.subr.mxu0 0.0
          %1055 = vmatpush1.msra.mxu0 0.0
          %1056 = vmatprep.subr.mxu0 0.0
          %1057 = vmatpush1.msra.mxu0 0.0
          %1058 = vmatprep.subr.mxu0 0.0
          %1059 = vmatpush1.msra.mxu0 0.0
          %1060 = vmatprep.subr.mxu0 0.0
          %1061 = vmatpush1.msra.mxu0 0.0
          %1062 = vmatprep.subr.mxu0 0.0
          %1063 = vmatpush1.msra.mxu0 0.0
          %1064 = vmatprep.subr.mxu0 0.0
          %1065 = vmatpush1.msra.mxu0 0.0
          %1066 = vmatprep.subr.mxu0 0.0
          %1067 = vmatpush1.msra.mxu0 0.0
          %1068 = vmatprep.subr.mxu0 0.0
          %1069 = vmatpush1.msra.mxu0 0.0
          %1070 = vmatprep.subr.mxu0 0.0
          %1071 = vmatpush1.msra.mxu0 0.0
          %1072 = vmatprep.subr.mxu0 0.0
          %1073 = vmatpush1.msra.mxu0 0.0
          %1074 = vmatprep.subr.mxu0 %v693
          %1075 = vmatpush1.msra.mxu0 %v690
          %1076 = vmatprep.subr.mxu0 %v577
          %1077 = vmatpush1.msra.mxu0 %v576
          %1078 = vmatprep.subr.mxu0 %v565
          %1079 = vmatpush1.msra.mxu0 %v564
          %1080 = vmatprep.subr.mxu0 %v553
          %1081 = vmatpush1.msra.mxu0 %v552
          %1082 = vmatprep.subr.mxu0 0.0
          %1083 = vmatpush2.msra.mxu0 0.0
          %1084 = vmatprep.subr.mxu0 0.0
          %1085 = vmatpush2.msra.mxu0 0.0
          %1086 = vmatprep.subr.mxu0 0.0
          %1087 = vmatpush2.msra.mxu0 0.0
          %1088 = vmatprep.subr.mxu0 0.0
          %1089 = vmatpush2.msra.mxu0 0.0
          %1090 = vmatprep.subr.mxu0 0.0
          %1091 = vmatpush2.msra.mxu0 0.0
          %1092 = vmatprep.subr.mxu0 0.0
          %1093 = vmatpush2.msra.mxu0 0.0
          %1094 = vmatprep.subr.mxu0 0.0
          %1095 = vmatpush2.msra.mxu0 0.0
          %1096 = vmatprep.subr.mxu0 0.0
          %1097 = vmatpush2.msra.mxu0 0.0
          %1098 = vmatprep.subr.mxu0 0.0
          %1099 = vmatpush2.msra.mxu0 0.0
          %1100 = vmatprep.subr.mxu0 0.0
          %1101 = vmatpush2.msra.mxu0 0.0
          %1102 = vmatprep.subr.mxu0 0.0
          %1103 = vmatpush2.msra.mxu0 0.0
          %1104 = vmatprep.subr.mxu0 0.0
          %1105 = vmatpush2.msra.mxu0 0.0
          %1106 = vmatprep.subr.mxu0 0.0
          %1107 = vmatpush2.msra.mxu0 0.0
          %1108 = vmatprep.subr.mxu0 0.0
          %1109 = vmatpush2.msra.mxu0 0.0
          %1110 = vmatprep.subr.mxu0 0.0
          %1111 = vmatpush2.msra.mxu0 0.0
          %1112 = vmatprep.subr.mxu0 0.0
          %1113 = vmatpush2.msra.mxu0 0.0
          %1114 = vmatprep.mubr.f32.mxu0 0.0
          %1115 = vmatmul.mubr.f32.gmra.mxu0 %v656
          %v1116 = vpop.f32.mrf.mxu0
          %v1117 = vadd.f32 %v637, %v1116
          %v1118 = vpop.f32.mrf.mxu0
          %v1119 = vadd.f32 %v641, %v1118
          %1120 = vdwg.mxu0
          %vm1121 = vcmp.gt.f32.partialorder %v762, 0.0
          %vm1122 = vcmp.gt.f32.partialorder %v764, 0.0
          %vm1123 = vcmp.gt.f32.partialorder %v833, 0.0
          %vm1124 = vcmp.gt.f32.partialorder %v835, 0.0
          %vm1125 = vcmp.gt.f32.partialorder %v904, 0.0
          %vm1126 = vcmp.gt.f32.partialorder %v906, 0.0
          %vm1127 = vcmp.gt.f32.partialorder %v975, 0.0
          %vm1128 = vcmp.gt.f32.partialorder %v977, 0.0
          %vm1129 = vcmp.gt.f32.partialorder %v1046, 0.0
          %vm1130 = vcmp.gt.f32.partialorder %v1048, 0.0
          %vm1131 = vcmp.gt.f32.partialorder %v1117, 0.0
          %vm1132 = vcmp.gt.f32.partialorder %v1119, 0.0
          %v1133 = vmul.f32 %v762, 0.2
          %v1134 = vmul.f32 %v764, 0.2
          %v1135 = vmul.f32 %v833, 0.2
          %v1136 = vmul.f32 %v835, 0.2
          %v1137 = vmul.f32 %v904, 0.2
          %v1138 = vmul.f32 %v906, 0.2
          %v1139 = vmul.f32 %v975, 0.2
          %v1140 = vmul.f32 %v977, 0.2
          %v1141 = vmul.f32 %v1046, 0.2
          %v1142 = vmul.f32 %v1048, 0.2
          %v1143 = vmul.f32 %v1117, 0.2
          %v1144 = vmul.f32 %v1119, 0.2
          %v1145 = vsel %vm1121, %v762, %v1133
          %v1146 = vsel %vm1122, %v764, %v1134
          %v1147 = vsel %vm1123, %v833, %v1135
          %v1148 = vsel %vm1124, %v835, %v1136
          %v1149 = vsel %vm1125, %v904, %v1137
          %v1150 = vsel %vm1126, %v906, %v1138
          %v1151 = vsel %vm1127, %v975, %v1139
          %v1152 = vsel %vm1128, %v977, %v1140
          %v1153 = vsel %vm1129, %v1046, %v1141
          %v1154 = vsel %vm1130, %v1048, %v1142
          %v1155 = vsel %vm1131, %v1117, %v1143
          %v1156 = vsel %vm1132, %v1119, %v1144
          %1157 = vst [vmem:[#allocation2] sm:$0x1] %v1145
          %1158 = vst [vmem:[#allocation2 + $0x1] sm:$0x1] %v1146
          %1159 = vst [vmem:[#allocation2 + $0x2] sm:$0x1] %v1147
          %1160 = vst [vmem:[#allocation2 + $0x3] sm:$0x1] %v1148
          %1161 = vst [vmem:[#allocation2 + $0x4] sm:$0x1] %v1149
          %1162 = vst [vmem:[#allocation2 + $0x5] sm:$0x1] %v1150
          %1163 = vst [vmem:[#allocation2 + $0x6] sm:$0x1] %v1151
          %1164 = vst [vmem:[#allocation2 + $0x7] sm:$0x1] %v1152
          %1165 = vst [vmem:[#allocation2 + $0x8] sm:$0x1] %v1153
          %1166 = vst [vmem:[#allocation2 + $0x9] sm:$0x1] %v1154
          %1167 = vst [vmem:[#allocation2 + $0xa] sm:$0x1] %v1155
          %1168 = vst [vmem:[#allocation2 + $0xb] sm:$0x1] %v1156
          %v1169 = vld [vmem:[%s5] sm:$0xff]
          %v1170 = vld [vmem:[%s5 + $0x8] sm:$0xff]
          %v1171 = vld [vmem:[%s5 + $0x10] sm:$0xff]
          %v1172 = vld [vmem:[%s5 + $0x18] sm:$0xff]
          %v1173 = vld [vmem:[%s5 + $0x20] sm:$0xf]
          %v1174 = vld [vmem:[#allocation2] sm:$0xff]
          %v1175 = vld [vmem:[#allocation2 + $0x8] sm:$0xf]
          %vm1176 = vcmask 97280
          %v1178 = vsel %vm1176, %v1169, 0
          %v1181 = vsel %vm1176, %v1170, 0
          %v1184 = vsel %vm1176, %v1171, 0
          %v1187 = vsel %vm1176, %v1172, 0
          %v1190 = vsel %vm1176, %v1173, 0
          %vm1192 = vcmask 1043456
          %v1194 = vsel %vm1192, %v1175, 0
          %1196 = vmatprep.subr.mxu0 0.0
          %1197 = vmatpush1.msra.mxu0 0.0
          %1198 = vmatprep.subr.mxu0 0.0
          %1199 = vmatpush1.msra.mxu0 0.0
          %1200 = vmatprep.subr.mxu0 0.0
          %1201 = vmatpush1.msra.mxu0 0.0
          %1202 = vmatprep.subr.mxu0 0.0
          %1203 = vmatpush1.msra.mxu0 0.0
          %1204 = vmatprep.subr.mxu0 0.0
          %1205 = vmatpush1.msra.mxu0 0.0
          %1206 = vmatprep.subr.mxu0 0.0
          %1207 = vmatpush1.msra.mxu0 0.0
          %1208 = vmatprep.subr.mxu0 0.0
          %1209 = vmatpush1.msra.mxu0 0.0
          %1210 = vmatprep.subr.mxu0 0.0
          %1211 = vmatpush1.msra.mxu0 0.0
          %1212 = vmatprep.subr.mxu0 0.0
          %1213 = vmatpush1.msra.mxu0 0.0
          %1214 = vmatprep.subr.mxu0 0.0
          %1215 = vmatpush1.msra.mxu0 0.0
          %1216 = vmatprep.subr.mxu0 0.0
          %1217 = vmatpush1.msra.mxu0 0.0
          %1218 = vmatprep.subr.mxu0 0.0
          %1219 = vmatpush1.msra.mxu0 0.0
          %1220 = vmatprep.subr.mxu0 0.0
          %1221 = vmatpush1.msra.mxu0 0.0
          %1222 = vmatprep.subr.mxu0 0.0
          %1223 = vmatpush1.msra.mxu0 0.0
          %1224 = vmatprep.subr.mxu0 0.0
          %1225 = vmatpush1.msra.mxu0 %v1194
          %1226 = vmatprep.subr.mxu0 0.0
          %1227 = vmatpush1.msra.mxu0 %v1174
          %1228 = vmatprep.subr.mxu0 0.0
          %1229 = vmatpush2.msra.mxu0 0.0
          %1230 = vmatprep.subr.mxu0 0.0
          %1231 = vmatpush2.msra.mxu0 0.0
          %1232 = vmatprep.subr.mxu0 0.0
          %1233 = vmatpush2.msra.mxu0 0.0
          %1234 = vmatprep.subr.mxu0 0.0
          %1235 = vmatpush2.msra.mxu0 0.0
          %1236 = vmatprep.subr.mxu0 0.0
          %1237 = vmatpush2.msra.mxu0 0.0
          %1238 = vmatprep.subr.mxu0 0.0
          %1239 = vmatpush2.msra.mxu0 0.0
          %1240 = vmatprep.subr.mxu0 0.0
          %1241 = vmatpush2.msra.mxu0 0.0
          %1242 = vmatprep.subr.mxu0 0.0
          %1243 = vmatpush2.msra.mxu0 0.0
          %1244 = vmatprep.subr.mxu0 0.0
          %1245 = vmatpush2.msra.mxu0 0.0
          %1246 = vmatprep.subr.mxu0 0.0
          %1247 = vmatpush2.msra.mxu0 0.0
          %1248 = vmatprep.subr.mxu0 0.0
          %1249 = vmatpush2.msra.mxu0 0.0
          %1250 = vmatprep.subr.mxu0 0.0
          %1251 = vmatpush2.msra.mxu0 0.0
          %1252 = vmatprep.subr.mxu0 0.0
          %1253 = vmatpush2.msra.mxu0 0.0
          %1254 = vmatprep.subr.mxu0 0.0
          %1255 = vmatpush2.msra.mxu0 0.0
          %1256 = vmatprep.subr.mxu0 0.0
          %1257 = vmatpush2.msra.mxu0 0.0
          %1258 = vmatprep.subr.mxu0 0.0
          %1259 = vmatpush2.msra.mxu0 0.0
          %1260 = vmatprep.mubr.f32.mxu0 0.0
          %1261 = vmatmul.mubr.f32.gmra.mxu0 %v1178
          %v1262 = vpop.f32.mrf.mxu0
          %v1263 = vadd.f32 0.0, %v1262
          %v1264 = vpop.f32.mrf.mxu0
          %1265 = vmatprep.mubr.f32.mxu0 0.0
          %1266 = vmatmul.mubr.f32.gmra.mxu0 %v1181
          %v1267 = vpop.f32.mrf.mxu0
          %v1268 = vadd.f32 0.0, %v1267
          %v1269 = vpop.f32.mrf.mxu0
          %1270 = vmatprep.mubr.f32.mxu0 0.0
          %1271 = vmatmul.mubr.f32.gmra.mxu0 %v1184
          %v1272 = vpop.f32.mrf.mxu0
          %v1273 = vadd.f32 0.0, %v1272
          %v1274 = vpop.f32.mrf.mxu0
          %1275 = vmatprep.mubr.f32.mxu0 0.0
          %1276 = vmatmul.mubr.f32.gmra.mxu0 %v1187
          %v1277 = vpop.f32.mrf.mxu0
          %v1278 = vadd.f32 0.0, %v1277
          %v1279 = vpop.f32.mrf.mxu0
          %1280 = vmatprep.mubr.f32.mxu0 0.0
          %1281 = vmatmul.mubr.f32.gmra.mxu0 %v1190
          %v1282 = vpop.f32.mrf.mxu0
          %v1283 = vadd.f32 0.0, %v1282
          %v1284 = vpop.f32.mrf.mxu0
          %1285 = vdwg.mxu0
          %v1286 = vpack.c.bf16 %v1268, %v1263
          %v1287 = vpack.c.bf16 %v1278, %v1273
          %v1288 = vpack.c.bf16 %v1283, %v1283
          %v1292 = vunpack.c.l.b16 %v1286
          %v1293 = vunpack.c.h.b16 %v1286
          %v1294 = vunpack.c.l.b16 %v1287
          %v1295 = vunpack.c.h.b16 %v1287
          %v1296 = vunpack.c.l.b16 %v1288
          %v1297 = vpack.c.b16 %v1292, %v1292
          %v1298 = vpack.c.b16 %v1293, %v1293
          %v1299 = vpack.c.b16 %v1294, %v1294
          %v1300 = vpack.c.b16 %v1295, %v1295
          %v1301 = vpack.c.b16 %v1296, %v1296
          %1307 = vst [vmem:[#allocation3] sm:$0xf] %v1297
          %1308 = vst [vmem:[#allocation3 + $0x4] sm:$0xf] %v1298
          %1309 = vst [vmem:[#allocation3 + $0x8] sm:$0xf] %v1299
          %1310 = vst [vmem:[#allocation3 + $0xc] sm:$0xf] %v1300
          %1311 = vst [vmem:[#allocation3 + $0x10] sm:$0x3] %v1301
          %1312 = vst [vmem:[#allocation6] sm:$0xff] 0.0
          %1313 = vst [vmem:[#allocation6 + $0x8] sm:$0xff] 0.0
          %1314 = vst [vmem:[#allocation6 + $0x10] sm:$0xff] 0.0
          %1315 = vst [vmem:[#allocation6 + $0x18] sm:$0xff] 0.0
          %1316 = vst [vmem:[#allocation6 + $0x20] sm:$0xff] 0.0
          %1317 = vst [vmem:[#allocation6 + $0x28] sm:$0xff] 0.0
          %1318 = vst [vmem:[#allocation6 + $0x30] sm:$0xff] 0.0
          %1319 = vst [vmem:[#allocation6 + $0x38] sm:$0xff] 0.0
          %1320 = vst [vmem:[#allocation7] sm:$0xff] 0.0
          %1321 = vst [vmem:[#allocation7 + $0x8] sm:$0xff] 0.0
          %1322 = vst [vmem:[#allocation7 + $0x10] sm:$0xff] 0.0
          %1323 = vst [vmem:[#allocation7 + $0x18] sm:$0xff] 0.0
          %1324 = vst [vmem:[#allocation7 + $0x20] sm:$0xff] 0.0
          %1325 = vst [vmem:[#allocation7 + $0x28] sm:$0xff] 0.0
          %1326 = vst [vmem:[#allocation7 + $0x30] sm:$0xff] 0.0
          %1327 = vst [vmem:[#allocation7 + $0x38] sm:$0xff] 0.0
          %1328 = vst [vmem:[#allocation8] sm:$0xff] 0.0
          %1329 = vst [vmem:[#allocation8 + $0x8] sm:$0xff] 0.0
          %1330 = vst [vmem:[#allocation8 + $0x10] sm:$0xff] 0.0
          %1331 = vst [vmem:[#allocation8 + $0x18] sm:$0xff] 0.0
          %1332 = vst [vmem:[#allocation8 + $0x20] sm:$0xff] 0.0
          %1333 = vst [vmem:[#allocation8 + $0x28] sm:$0xff] 0.0
          %1334 = vst [vmem:[#allocation8 + $0x30] sm:$0xff] 0.0
          %1335 = vst [vmem:[#allocation8 + $0x38] sm:$0xff] 0.0
        $region96: #{nndc_forward.1} parent=59 // pred_fallthru
          _
        %v1336 = vld [vmem:[#allocation3] sm:$0xf]
        %v1337 = vld [vmem:[#allocation3 + $0x4] sm:$0xf]
        %v1338 = vld [vmem:[#allocation3 + $0x8] sm:$0xf]
        %v1339 = vld [vmem:[#allocation3 + $0xc] sm:$0xf]
        %v1340 = vld [vmem:[#allocation3 + $0x10] sm:$0x3]
        %v1341 = vld [vmem:[%s415] sm:$0xff]
        %v1342 = vld [vmem:[%s415 + $0x8] sm:$0xff]
        %v1343 = vld [vmem:[%s415 + $0x10] sm:$0xff]
        %v1344 = vld [vmem:[%s415 + $0x18] sm:$0xff]
        %v1345 = vld [vmem:[%s415 + $0x20] sm:$0xff]
        %v1346 = vld [vmem:[%s415 + $0x28] sm:$0xff]
        %v1347 = vld [vmem:[%s415 + $0x30] sm:$0xff]
        %v1348 = vld [vmem:[%s415 + $0x38] sm:$0xff]
        %v1349 = vld [vmem:[%s415 + $0x40] sm:$0xff]
        %v1350 = vld [vmem:[%s415 + $0x48] sm:$0xff]
        %v1351 = vld [vmem:[%s415 + $0x50] sm:$0xff]
        %v1352 = vld [vmem:[%s415 + $0x58] sm:$0xff]
        %v1353 = vld [vmem:[%s415 + $0x60] sm:$0xff]
        %v1354 = vld [vmem:[%s415 + $0x68] sm:$0xff]
        %v1355 = vld [vmem:[%s415 + $0x70] sm:$0xff]
        %v1356 = vld [vmem:[%s415 + $0x78] sm:$0xff]
        %v1357 = vld [vmem:[%s415 + $0x80] sm:$0xff]
        %v1358 = vld [vmem:[%s415 + $0x88] sm:$0xff]
        %v1359 = vld [vmem:[%s415 + $0x90] sm:$0xff]
        %v1360 = vld [vmem:[%s415 + $0x98] sm:$0xff]
        %v1361 = vld [vmem:[%s415 + $0xa0] sm:$0xff]
        %v1362 = vld [vmem:[%s415 + $0xa8] sm:$0xff]
        %v1363 = vld [vmem:[%s415 + $0xb0] sm:$0xff]
        %v1364 = vld [vmem:[%s415 + $0xb8] sm:$0xff]
        %v1365 = vld [vmem:[%s415 + $0xc0] sm:$0xff]
        %v1366 = vld [vmem:[%s415 + $0xc8] sm:$0xff]
        %v1367 = vld [vmem:[%s415 + $0xd0] sm:$0xff]
        %v1368 = vld [vmem:[%s415 + $0xd8] sm:$0xff]
        %v1369 = vld [vmem:[%s415 + $0xe0] sm:$0xff]
        %v1370 = vld [vmem:[%s415 + $0xe8] sm:$0xff]
        %v1371 = vld [vmem:[%s415 + $0xf0] sm:$0xff]
        %v1372 = vld [vmem:[%s415 + $0xf8] sm:$0xff]
        %v1373 = vld [vmem:[%s415 + $0x100] sm:$0xff]
        %v1374 = vld [vmem:[%s415 + $0x108] sm:$0xff]
        %v1375 = vld [vmem:[%s415 + $0x110] sm:$0xff]
        %v1376 = vld [vmem:[%s415 + $0x118] sm:$0xff]
        %v1377 = vld [vmem:[%s415 + $0x120] sm:$0xff]
        %v1378 = vld [vmem:[%s415 + $0x128] sm:$0xff]
        %v1379 = vld [vmem:[%s415 + $0x130] sm:$0xff]
        %v1380 = vld [vmem:[%s415 + $0x138] sm:$0xff]
        %v1381 = vld [vmem:[%s415 + $0x140] sm:$0xff]
        %v1382 = vld [vmem:[%s415 + $0x148] sm:$0xff]
        %v1383 = vld [vmem:[%s415 + $0x150] sm:$0xff]
        %v1384 = vld [vmem:[%s415 + $0x158] sm:$0xff]
        %v1385 = vld [vmem:[%s415 + $0x160] sm:$0xff]
        %v1386 = vld [vmem:[%s415 + $0x168] sm:$0xff]
        %v1387 = vld [vmem:[%s415 + $0x170] sm:$0xff]
        %v1388 = vld [vmem:[%s415 + $0x178] sm:$0xff]
        %v1389 = vld [vmem:[%s415 + $0x180] sm:$0xff]
        %v1390 = vld [vmem:[%s415 + $0x188] sm:$0xff]
        %v1391 = vld [vmem:[%s415 + $0x190] sm:$0xff]
        %v1392 = vld [vmem:[%s415 + $0x198] sm:$0xff]
        %v1393 = vld [vmem:[%s415 + $0x1a0] sm:$0xff]
        %v1394 = vld [vmem:[%s415 + $0x1a8] sm:$0xff]
        %v1395 = vld [vmem:[%s415 + $0x1b0] sm:$0xff]
        %v1396 = vld [vmem:[%s415 + $0x1b8] sm:$0xff]
        %v1397 = vld [vmem:[%s415 + $0x1c0] sm:$0xff]
        %v1398 = vld [vmem:[%s415 + $0x1c8] sm:$0xff]
        %v1399 = vld [vmem:[%s415 + $0x1d0] sm:$0xff]
        %v1400 = vld [vmem:[%s415 + $0x1d8] sm:$0xff]
        %v1401 = vld [vmem:[%s415 + $0x1e0] sm:$0xff]
        %v1402 = vld [vmem:[%s415 + $0x1e8] sm:$0xff]
        %v1403 = vld [vmem:[%s415 + $0x1f0] sm:$0xff]
        %v1404 = vld [vmem:[%s415 + $0x1f8] sm:$0xff]
        %v1405 = vld [vmem:[%s415 + $0x200] sm:$0xff]
        %v1406 = vld [vmem:[%s415 + $0x208] sm:$0xff]
        %v1407 = vld [vmem:[%s415 + $0x210] sm:$0xff]
        %v1408 = vld [vmem:[%s415 + $0x218] sm:$0xff]
        %v1409 = vld [vmem:[%s415 + $0x220] sm:$0xff]
        %v1410 = vld [vmem:[%s415 + $0x228] sm:$0xff]
        %v1411 = vld [vmem:[%s415 + $0x230] sm:$0xff]
        %v1412 = vld [vmem:[%s415 + $0x238] sm:$0xff]
        %v1413 = vld [vmem:[%s415 + $0x240] sm:$0xff]
        %v1414 = vld [vmem:[%s415 + $0x248] sm:$0xff]
        %v1415 = vld [vmem:[%s415 + $0x250] sm:$0xff]
        %v1416 = vld [vmem:[%s415 + $0x258] sm:$0xff]
        %v1417 = vld [vmem:[%s415 + $0x260] sm:$0xff]
        %v1418 = vld [vmem:[%s415 + $0x268] sm:$0xff]
        %v1419 = vld [vmem:[%s415 + $0x270] sm:$0xff]
        %v1420 = vld [vmem:[%s415 + $0x278] sm:$0xff]
        %v1421 = vld [vmem:[%s415 + $0x280] sm:$0xff]
        %v1422 = vld [vmem:[%s415 + $0x288] sm:$0xff]
        %v1423 = vld [vmem:[%s415 + $0x290] sm:$0xff]
        %v1424 = vld [vmem:[%s415 + $0x298] sm:$0xff]
        %v1425 = vld [vmem:[%s415 + $0x2a0] sm:$0xff]
        %v1426 = vld [vmem:[%s415 + $0x2a8] sm:$0xff]
        %v1427 = vld [vmem:[%s415 + $0x2b0] sm:$0xff]
        %v1428 = vld [vmem:[%s415 + $0x2b8] sm:$0xff]
        %v1429 = vld [vmem:[%s415 + $0x2c0] sm:$0xff]
        %v1430 = vld [vmem:[%s415 + $0x2c8] sm:$0xff]
        %v1431 = vld [vmem:[%s415 + $0x2d0] sm:$0xff]
        %v1432 = vld [vmem:[%s415 + $0x2d8] sm:$0xff]
        %v1433 = vld [vmem:[%s415 + $0x2e0] sm:$0xff]
        %v1434 = vld [vmem:[%s415 + $0x2e8] sm:$0xff]
        %v1435 = vld [vmem:[%s415 + $0x2f0] sm:$0xff]
        %v1436 = vld [vmem:[%s415 + $0x2f8] sm:$0xff]
        %v1437 = vld [vmem:[%s415 + $0x300] sm:$0xff]
        %v1438 = vld [vmem:[%s415 + $0x308] sm:$0xff]
        %v1439 = vld [vmem:[%s415 + $0x310] sm:$0xff]
        %v1440 = vld [vmem:[%s415 + $0x318] sm:$0xff]
        %v1441 = vld [vmem:[%s415 + $0x320] sm:$0xff]
        %v1442 = vld [vmem:[%s415 + $0x328] sm:$0xff]
        %v1443 = vld [vmem:[%s415 + $0x330] sm:$0xff]
        %v1444 = vld [vmem:[%s415 + $0x338] sm:$0xff]
        %v1445 = vld [vmem:[%s415 + $0x340] sm:$0xff]
        %v1446 = vld [vmem:[%s415 + $0x348] sm:$0xff]
        %v1447 = vld [vmem:[%s415 + $0x350] sm:$0xff]
        %v1448 = vld [vmem:[%s415 + $0x358] sm:$0xff]
        %v1449 = vld [vmem:[%s415 + $0x360] sm:$0xff]
        %v1450 = vld [vmem:[%s415 + $0x368] sm:$0xff]
        %v1451 = vld [vmem:[%s415 + $0x370] sm:$0xff]
        %v1452 = vld [vmem:[%s415 + $0x378] sm:$0xff]
        %v1453 = vld [vmem:[%s415 + $0x380] sm:$0xff]
        %v1454 = vld [vmem:[%s415 + $0x388] sm:$0xff]
        %v1455 = vld [vmem:[%s415 + $0x390] sm:$0xff]
        %v1456 = vld [vmem:[%s415 + $0x398] sm:$0xff]
        %v1457 = vld [vmem:[%s415 + $0x3a0] sm:$0xff]
        %v1458 = vld [vmem:[%s415 + $0x3a8] sm:$0xff]
        %v1459 = vld [vmem:[%s415 + $0x3b0] sm:$0xff]
        %v1460 = vld [vmem:[%s415 + $0x3b8] sm:$0xff]
        %v1461 = vld [vmem:[%s415 + $0x3c0] sm:$0xff]
        %v1462 = vld [vmem:[%s415 + $0x3c8] sm:$0xff]
        %v1463 = vld [vmem:[%s415 + $0x3d0] sm:$0xff]
        %v1464 = vld [vmem:[%s415 + $0x3d8] sm:$0xff]
        %v1465 = vld [vmem:[%s415 + $0x3e0] sm:$0xff]
        %v1466 = vld [vmem:[%s415 + $0x3e8] sm:$0xff]
        %v1467 = vld [vmem:[%s415 + $0x3f0] sm:$0xff]
        %v1468 = vld [vmem:[%s415 + $0x3f8] sm:$0xff]
        %v1469 = vld [vmem:[%s415 + $0x400] sm:$0xff]
        %v1470 = vld [vmem:[%s415 + $0x408] sm:$0xff]
        %v1471 = vld [vmem:[%s415 + $0x410] sm:$0xff]
        %v1472 = vld [vmem:[%s415 + $0x418] sm:$0xff]
        %v1473 = vld [vmem:[%s415 + $0x420] sm:$0xff]
        %v1474 = vld [vmem:[%s415 + $0x428] sm:$0xff]
        %v1475 = vld [vmem:[%s415 + $0x430] sm:$0xff]
        %v1476 = vld [vmem:[%s415 + $0x438] sm:$0xff]
        %v1477 = vld [vmem:[%s415 + $0x440] sm:$0xff]
        %v1478 = vld [vmem:[%s415 + $0x448] sm:$0xff]
        %v1479 = vld [vmem:[%s415 + $0x450] sm:$0xff]
        %v1480 = vld [vmem:[%s415 + $0x458] sm:$0xff]
        %v1481 = vld [vmem:[%s415 + $0x460] sm:$0xff]
        %v1482 = vld [vmem:[%s415 + $0x468] sm:$0xff]
        %v1483 = vld [vmem:[%s415 + $0x470] sm:$0xff]
        %v1484 = vld [vmem:[%s415 + $0x478] sm:$0xff]
        %v1485 = vld [vmem:[%s415 + $0x480] sm:$0xff]
        %v1486 = vld [vmem:[%s415 + $0x488] sm:$0xff]
        %v1487 = vld [vmem:[%s415 + $0x490] sm:$0xff]
        %v1488 = vld [vmem:[%s415 + $0x498] sm:$0xff]
        %v1489 = vld [vmem:[%s415 + $0x4a0] sm:$0xff]
        %v1490 = vld [vmem:[%s415 + $0x4a8] sm:$0xff]
        %v1491 = vld [vmem:[%s415 + $0x4b0] sm:$0xff]
        %v1492 = vld [vmem:[%s415 + $0x4b8] sm:$0xff]
        %v1493 = vld [vmem:[%s415 + $0x4c0] sm:$0xff]
        %v1494 = vld [vmem:[%s415 + $0x4c8] sm:$0xff]
        %v1495 = vld [vmem:[%s415 + $0x4d0] sm:$0xff]
        %v1496 = vld [vmem:[%s415 + $0x4d8] sm:$0xff]
        %v1497 = vld [vmem:[%s415 + $0x4e0] sm:$0xff]
        %v1498 = vld [vmem:[%s415 + $0x4e8] sm:$0xff]
        %v1499 = vld [vmem:[%s415 + $0x4f0] sm:$0xff]
        %v1500 = vld [vmem:[%s415 + $0x4f8] sm:$0xff]
        %v1501 = vld [vmem:[%s415 + $0x500] sm:$0xff]
        %v1502 = vld [vmem:[%s415 + $0x508] sm:$0xff]
        %v1503 = vld [vmem:[%s415 + $0x510] sm:$0xff]
        %v1504 = vld [vmem:[%s415 + $0x518] sm:$0xff]
        %v1505 = vld [vmem:[%s415 + $0x520] sm:$0xff]
        %v1506 = vld [vmem:[%s415 + $0x528] sm:$0xff]
        %v1507 = vld [vmem:[%s415 + $0x530] sm:$0xff]
        %v1508 = vld [vmem:[%s415 + $0x538] sm:$0xff]
        %v1509 = vld [vmem:[%s415 + $0x540] sm:$0xff]
        %v1510 = vld [vmem:[%s415 + $0x548] sm:$0xff]
        %v1511 = vld [vmem:[%s415 + $0x550] sm:$0xff]
        %v1512 = vld [vmem:[%s415 + $0x558] sm:$0xff]
        %v1513 = vld [vmem:[%s415 + $0x560] sm:$0xff]
        %v1514 = vld [vmem:[%s415 + $0x568] sm:$0xff]
        %v1515 = vld [vmem:[%s415 + $0x570] sm:$0xff]
        %v1516 = vld [vmem:[%s415 + $0x578] sm:$0xff]
        %v1517 = vld [vmem:[%s415 + $0x580] sm:$0xff]
        %v1518 = vld [vmem:[%s415 + $0x588] sm:$0xff]
        %v1519 = vld [vmem:[%s415 + $0x590] sm:$0xff]
        %v1520 = vld [vmem:[%s415 + $0x598] sm:$0xff]
        %v1521 = vld [vmem:[%s415 + $0x5a0] sm:$0xff]
        %v1522 = vld [vmem:[%s415 + $0x5a8] sm:$0xff]
        %v1523 = vld [vmem:[%s415 + $0x5b0] sm:$0xff]
        %v1524 = vld [vmem:[%s415 + $0x5b8] sm:$0xff]
        %v1525 = vld [vmem:[%s415 + $0x5c0] sm:$0xff]
        %v1526 = vld [vmem:[%s415 + $0x5c8] sm:$0xff]
        %v1527 = vld [vmem:[%s415 + $0x5d0] sm:$0xff]
        %v1528 = vld [vmem:[%s415 + $0x5d8] sm:$0xff]
        %v1529 = vld [vmem:[%s415 + $0x5e0] sm:$0xff]
        %v1530 = vld [vmem:[%s415 + $0x5e8] sm:$0xff]
        %v1531 = vld [vmem:[%s415 + $0x5f0] sm:$0xff]
        %v1532 = vld [vmem:[%s415 + $0x5f8] sm:$0xff]
        %v1538 = vunpack.c.l.b16 %v1336
        %v1539 = vunpack.c.l.b16 %v1337
        %v1540 = vunpack.c.l.b16 %v1338
        %v1541 = vunpack.c.l.b16 %v1339
        %v1542 = vunpack.c.l.b16 %v1340
        %v1543 = vpack.c.b16 %v1539, %v1538
        %v1544 = vpack.c.b16 %v1541, %v1540
        %v1545 = vpack.c.b16 %v1542, %v1542
        %v1741 = vunpack.c.l.b16 %v1341
        %v1742 = vunpack.c.h.b16 %v1341
        %v1743 = vunpack.c.l.b16 %v1342
        %v1744 = vunpack.c.h.b16 %v1342
        %v1745 = vunpack.c.l.b16 %v1343
        %v1746 = vunpack.c.h.b16 %v1343
        %v1747 = vunpack.c.l.b16 %v1344
        %v1748 = vunpack.c.h.b16 %v1344
        %v1749 = vunpack.c.l.b16 %v1345
        %v1750 = vunpack.c.h.b16 %v1345
        %v1751 = vunpack.c.l.b16 %v1346
        %v1752 = vunpack.c.h.b16 %v1346
        %v1753 = vunpack.c.l.b16 %v1347
        %v1754 = vunpack.c.h.b16 %v1347
        %v1755 = vunpack.c.l.b16 %v1348
        %v1756 = vunpack.c.h.b16 %v1348
        %v1757 = vunpack.c.l.b16 %v1349
        %v1758 = vunpack.c.h.b16 %v1349
        %v1759 = vunpack.c.l.b16 %v1350
        %v1760 = vunpack.c.h.b16 %v1350
        %v1761 = vunpack.c.l.b16 %v1351
        %v1762 = vunpack.c.h.b16 %v1351
        %v1763 = vunpack.c.l.b16 %v1352
        %v1764 = vunpack.c.h.b16 %v1352
        %v1765 = vunpack.c.l.b16 %v1353
        %v1766 = vunpack.c.h.b16 %v1353
        %v1767 = vunpack.c.l.b16 %v1354
        %v1768 = vunpack.c.h.b16 %v1354
        %v1769 = vunpack.c.l.b16 %v1355
        %v1770 = vunpack.c.h.b16 %v1355
        %v1771 = vunpack.c.l.b16 %v1356
        %v1772 = vunpack.c.h.b16 %v1356
        %v1773 = vunpack.c.l.b16 %v1357
        %v1774 = vunpack.c.h.b16 %v1357
        %v1775 = vunpack.c.l.b16 %v1358
        %v1776 = vunpack.c.h.b16 %v1358
        %v1777 = vunpack.c.l.b16 %v1359
        %v1778 = vunpack.c.h.b16 %v1359
        %v1779 = vunpack.c.l.b16 %v1360
        %v1780 = vunpack.c.h.b16 %v1360
        %v1781 = vunpack.c.l.b16 %v1361
        %v1782 = vunpack.c.h.b16 %v1361
        %v1783 = vunpack.c.l.b16 %v1362
        %v1784 = vunpack.c.h.b16 %v1362
        %v1785 = vunpack.c.l.b16 %v1363
        %v1786 = vunpack.c.h.b16 %v1363
        %v1787 = vunpack.c.l.b16 %v1364
        %v1788 = vunpack.c.h.b16 %v1364
        %v1789 = vunpack.c.l.b16 %v1365
        %v1790 = vunpack.c.h.b16 %v1365
        %v1791 = vunpack.c.l.b16 %v1366
        %v1792 = vunpack.c.h.b16 %v1366
        %v1793 = vunpack.c.l.b16 %v1367
        %v1794 = vunpack.c.h.b16 %v1367
        %v1795 = vunpack.c.l.b16 %v1368
        %v1796 = vunpack.c.h.b16 %v1368
        %v1797 = vunpack.c.l.b16 %v1369
        %v1798 = vunpack.c.h.b16 %v1369
        %v1799 = vunpack.c.l.b16 %v1370
        %v1800 = vunpack.c.h.b16 %v1370
        %v1801 = vunpack.c.l.b16 %v1371
        %v1802 = vunpack.c.h.b16 %v1371
        %v1803 = vunpack.c.l.b16 %v1372
        %v1804 = vunpack.c.h.b16 %v1372
        %v1805 = vunpack.c.l.b16 %v1373
        %v1806 = vunpack.c.h.b16 %v1373
        %v1807 = vunpack.c.l.b16 %v1374
        %v1808 = vunpack.c.h.b16 %v1374
        %v1809 = vunpack.c.l.b16 %v1375
        %v1810 = vunpack.c.h.b16 %v1375
        %v1811 = vunpack.c.l.b16 %v1376
        %v1812 = vunpack.c.h.b16 %v1376
        %v1813 = vunpack.c.l.b16 %v1377
        %v1814 = vunpack.c.h.b16 %v1377
        %v1815 = vunpack.c.l.b16 %v1378
        %v1816 = vunpack.c.h.b16 %v1378
        %v1817 = vunpack.c.l.b16 %v1379
        %v1818 = vunpack.c.h.b16 %v1379
        %v1819 = vunpack.c.l.b16 %v1380
        %v1820 = vunpack.c.h.b16 %v1380
        %v1821 = vunpack.c.l.b16 %v1381
        %v1822 = vunpack.c.h.b16 %v1381
        %v1823 = vunpack.c.l.b16 %v1382
        %v1824 = vunpack.c.h.b16 %v1382
        %v1825 = vunpack.c.l.b16 %v1383
        %v1826 = vunpack.c.h.b16 %v1383
        %v1827 = vunpack.c.l.b16 %v1384
        %v1828 = vunpack.c.h.b16 %v1384
        %v1829 = vunpack.c.l.b16 %v1385
        %v1830 = vunpack.c.h.b16 %v1385
        %v1831 = vunpack.c.l.b16 %v1386
        %v1832 = vunpack.c.h.b16 %v1386
        %v1833 = vunpack.c.l.b16 %v1387
        %v1834 = vunpack.c.h.b16 %v1387
        %v1835 = vunpack.c.l.b16 %v1388
        %v1836 = vunpack.c.h.b16 %v1388
        %v1837 = vunpack.c.l.b16 %v1389
        %v1838 = vunpack.c.h.b16 %v1389
        %v1839 = vunpack.c.l.b16 %v1390
        %v1840 = vunpack.c.h.b16 %v1390
        %v1841 = vunpack.c.l.b16 %v1391
        %v1842 = vunpack.c.h.b16 %v1391
        %v1843 = vunpack.c.l.b16 %v1392
        %v1844 = vunpack.c.h.b16 %v1392
        %v1845 = vunpack.c.l.b16 %v1393
        %v1846 = vunpack.c.h.b16 %v1393
        %v1847 = vunpack.c.l.b16 %v1394
        %v1848 = vunpack.c.h.b16 %v1394
        %v1849 = vunpack.c.l.b16 %v1395
        %v1850 = vunpack.c.h.b16 %v1395
        %v1851 = vunpack.c.l.b16 %v1396
        %v1852 = vunpack.c.h.b16 %v1396
        %v1853 = vunpack.c.l.b16 %v1397
        %v1854 = vunpack.c.h.b16 %v1397
        %v1855 = vunpack.c.l.b16 %v1398
        %v1856 = vunpack.c.h.b16 %v1398
        %v1857 = vunpack.c.l.b16 %v1399
        %v1858 = vunpack.c.h.b16 %v1399
        %v1859 = vunpack.c.l.b16 %v1400
        %v1860 = vunpack.c.h.b16 %v1400
        %v1861 = vunpack.c.l.b16 %v1401
        %v1862 = vunpack.c.h.b16 %v1401
        %v1863 = vunpack.c.l.b16 %v1402
        %v1864 = vunpack.c.h.b16 %v1402
        %v1865 = vunpack.c.l.b16 %v1403
        %v1866 = vunpack.c.h.b16 %v1403
        %v1867 = vunpack.c.l.b16 %v1404
        %v1868 = vunpack.c.h.b16 %v1404
        %v1869 = vunpack.c.l.b16 %v1405
        %v1870 = vunpack.c.h.b16 %v1405
        %v1871 = vunpack.c.l.b16 %v1406
        %v1872 = vunpack.c.h.b16 %v1406
        %v1873 = vunpack.c.l.b16 %v1407
        %v1874 = vunpack.c.h.b16 %v1407
        %v1875 = vunpack.c.l.b16 %v1408
        %v1876 = vunpack.c.h.b16 %v1408
        %v1877 = vunpack.c.l.b16 %v1409
        %v1878 = vunpack.c.h.b16 %v1409
        %v1879 = vunpack.c.l.b16 %v1410
        %v1880 = vunpack.c.h.b16 %v1410
        %v1881 = vunpack.c.l.b16 %v1411
        %v1882 = vunpack.c.h.b16 %v1411
        %v1883 = vunpack.c.l.b16 %v1412
        %v1884 = vunpack.c.h.b16 %v1412
        %v1885 = vunpack.c.l.b16 %v1413
        %v1886 = vunpack.c.h.b16 %v1413
        %v1887 = vunpack.c.l.b16 %v1414
        %v1888 = vunpack.c.h.b16 %v1414
        %v1889 = vunpack.c.l.b16 %v1415
        %v1890 = vunpack.c.h.b16 %v1415
        %v1891 = vunpack.c.l.b16 %v1416
        %v1892 = vunpack.c.h.b16 %v1416
        %v1893 = vunpack.c.l.b16 %v1417
        %v1894 = vunpack.c.h.b16 %v1417
        %v1895 = vunpack.c.l.b16 %v1418
        %v1896 = vunpack.c.h.b16 %v1418
        %v1897 = vunpack.c.l.b16 %v1419
        %v1898 = vunpack.c.h.b16 %v1419
        %v1899 = vunpack.c.l.b16 %v1420
        %v1900 = vunpack.c.h.b16 %v1420
        %v1901 = vunpack.c.l.b16 %v1421
        %v1902 = vunpack.c.h.b16 %v1421
        %v1903 = vunpack.c.l.b16 %v1422
        %v1904 = vunpack.c.h.b16 %v1422
        %v1905 = vunpack.c.l.b16 %v1423
        %v1906 = vunpack.c.h.b16 %v1423
        %v1907 = vunpack.c.l.b16 %v1424
        %v1908 = vunpack.c.h.b16 %v1424
        %v1909 = vunpack.c.l.b16 %v1425
        %v1910 = vunpack.c.h.b16 %v1425
        %v1911 = vunpack.c.l.b16 %v1426
        %v1912 = vunpack.c.h.b16 %v1426
        %v1913 = vunpack.c.l.b16 %v1427
        %v1914 = vunpack.c.h.b16 %v1427
        %v1915 = vunpack.c.l.b16 %v1428
        %v1916 = vunpack.c.h.b16 %v1428
        %v1917 = vunpack.c.l.b16 %v1429
        %v1918 = vunpack.c.h.b16 %v1429
        %v1919 = vunpack.c.l.b16 %v1430
        %v1920 = vunpack.c.h.b16 %v1430
        %v1921 = vunpack.c.l.b16 %v1431
        %v1922 = vunpack.c.h.b16 %v1431
        %v1923 = vunpack.c.l.b16 %v1432
        %v1924 = vunpack.c.h.b16 %v1432
        %v1925 = vunpack.c.l.b16 %v1433
        %v1926 = vunpack.c.h.b16 %v1433
        %v1927 = vunpack.c.l.b16 %v1434
        %v1928 = vunpack.c.h.b16 %v1434
        %v1929 = vunpack.c.l.b16 %v1435
        %v1930 = vunpack.c.h.b16 %v1435
        %v1931 = vunpack.c.l.b16 %v1436
        %v1932 = vunpack.c.h.b16 %v1436
        %v1933 = vunpack.c.l.b16 %v1437
        %v1934 = vunpack.c.h.b16 %v1437
        %v1935 = vunpack.c.l.b16 %v1438
        %v1936 = vunpack.c.h.b16 %v1438
        %v1937 = vunpack.c.l.b16 %v1439
        %v1938 = vunpack.c.h.b16 %v1439
        %v1939 = vunpack.c.l.b16 %v1440
        %v1940 = vunpack.c.h.b16 %v1440
        %v1941 = vunpack.c.l.b16 %v1441
        %v1942 = vunpack.c.h.b16 %v1441
        %v1943 = vunpack.c.l.b16 %v1442
        %v1944 = vunpack.c.h.b16 %v1442
        %v1945 = vunpack.c.l.b16 %v1443
        %v1946 = vunpack.c.h.b16 %v1443
        %v1947 = vunpack.c.l.b16 %v1444
        %v1948 = vunpack.c.h.b16 %v1444
        %v1949 = vunpack.c.l.b16 %v1445
        %v1950 = vunpack.c.h.b16 %v1445
        %v1951 = vunpack.c.l.b16 %v1446
        %v1952 = vunpack.c.h.b16 %v1446
        %v1953 = vunpack.c.l.b16 %v1447
        %v1954 = vunpack.c.h.b16 %v1447
        %v1955 = vunpack.c.l.b16 %v1448
        %v1956 = vunpack.c.h.b16 %v1448
        %v1957 = vunpack.c.l.b16 %v1449
        %v1958 = vunpack.c.h.b16 %v1449
        %v1959 = vunpack.c.l.b16 %v1450
        %v1960 = vunpack.c.h.b16 %v1450
        %v1961 = vunpack.c.l.b16 %v1451
        %v1962 = vunpack.c.h.b16 %v1451
        %v1963 = vunpack.c.l.b16 %v1452
        %v1964 = vunpack.c.h.b16 %v1452
        %v1965 = vunpack.c.l.b16 %v1453
        %v1966 = vunpack.c.h.b16 %v1453
        %v1967 = vunpack.c.l.b16 %v1454
        %v1968 = vunpack.c.h.b16 %v1454
        %v1969 = vunpack.c.l.b16 %v1455
        %v1970 = vunpack.c.h.b16 %v1455
        %v1971 = vunpack.c.l.b16 %v1456
        %v1972 = vunpack.c.h.b16 %v1456
        %v1973 = vunpack.c.l.b16 %v1457
        %v1974 = vunpack.c.h.b16 %v1457
        %v1975 = vunpack.c.l.b16 %v1458
        %v1976 = vunpack.c.h.b16 %v1458
        %v1977 = vunpack.c.l.b16 %v1459
        %v1978 = vunpack.c.h.b16 %v1459
        %v1979 = vunpack.c.l.b16 %v1460
        %v1980 = vunpack.c.h.b16 %v1460
        %v1981 = vunpack.c.l.b16 %v1461
        %v1982 = vunpack.c.h.b16 %v1461
        %v1983 = vunpack.c.l.b16 %v1462
        %v1984 = vunpack.c.h.b16 %v1462
        %v1985 = vunpack.c.l.b16 %v1463
        %v1986 = vunpack.c.h.b16 %v1463
        %v1987 = vunpack.c.l.b16 %v1464
        %v1988 = vunpack.c.h.b16 %v1464
        %v1989 = vunpack.c.l.b16 %v1465
        %v1990 = vunpack.c.h.b16 %v1465
        %v1991 = vunpack.c.l.b16 %v1466
        %v1992 = vunpack.c.h.b16 %v1466
        %v1993 = vunpack.c.l.b16 %v1467
        %v1994 = vunpack.c.h.b16 %v1467
        %v1995 = vunpack.c.l.b16 %v1468
        %v1996 = vunpack.c.h.b16 %v1468
        %v1997 = vunpack.c.l.b16 %v1469
        %v1998 = vunpack.c.h.b16 %v1469
        %v1999 = vunpack.c.l.b16 %v1470
        %v2000 = vunpack.c.h.b16 %v1470
        %v2001 = vunpack.c.l.b16 %v1471
        %v2002 = vunpack.c.h.b16 %v1471
        %v2003 = vunpack.c.l.b16 %v1472
        %v2004 = vunpack.c.h.b16 %v1472
        %v2005 = vunpack.c.l.b16 %v1473
        %v2006 = vunpack.c.h.b16 %v1473
        %v2007 = vunpack.c.l.b16 %v1474
        %v2008 = vunpack.c.h.b16 %v1474
        %v2009 = vunpack.c.l.b16 %v1475
        %v2010 = vunpack.c.h.b16 %v1475
        %v2011 = vunpack.c.l.b16 %v1476
        %v2012 = vunpack.c.h.b16 %v1476
        %v2013 = vunpack.c.l.b16 %v1477
        %v2014 = vunpack.c.h.b16 %v1477
        %v2015 = vunpack.c.l.b16 %v1478
        %v2016 = vunpack.c.h.b16 %v1478
        %v2017 = vunpack.c.l.b16 %v1479
        %v2018 = vunpack.c.h.b16 %v1479
        %v2019 = vunpack.c.l.b16 %v1480
        %v2020 = vunpack.c.h.b16 %v1480
        %v2021 = vunpack.c.l.b16 %v1481
        %v2022 = vunpack.c.h.b16 %v1481
        %v2023 = vunpack.c.l.b16 %v1482
        %v2024 = vunpack.c.h.b16 %v1482
        %v2025 = vunpack.c.l.b16 %v1483
        %v2026 = vunpack.c.h.b16 %v1483
        %v2027 = vunpack.c.l.b16 %v1484
        %v2028 = vunpack.c.h.b16 %v1484
        %v2029 = vunpack.c.l.b16 %v1485
        %v2030 = vunpack.c.h.b16 %v1485
        %v2031 = vunpack.c.l.b16 %v1486
        %v2032 = vunpack.c.h.b16 %v1486
        %v2033 = vunpack.c.l.b16 %v1487
        %v2034 = vunpack.c.h.b16 %v1487
        %v2035 = vunpack.c.l.b16 %v1488
        %v2036 = vunpack.c.h.b16 %v1488
        %v2037 = vunpack.c.l.b16 %v1489
        %v2038 = vunpack.c.h.b16 %v1489
        %v2039 = vunpack.c.l.b16 %v1490
        %v2040 = vunpack.c.h.b16 %v1490
        %v2041 = vunpack.c.l.b16 %v1491
        %v2042 = vunpack.c.h.b16 %v1491
        %v2043 = vunpack.c.l.b16 %v1492
        %v2044 = vunpack.c.h.b16 %v1492
        %v2045 = vunpack.c.l.b16 %v1493
        %v2046 = vunpack.c.h.b16 %v1493
        %v2047 = vunpack.c.l.b16 %v1494
        %v2048 = vunpack.c.h.b16 %v1494
        %v2049 = vunpack.c.l.b16 %v1495
        %v2050 = vunpack.c.h.b16 %v1495
        %v2051 = vunpack.c.l.b16 %v1496
        %v2052 = vunpack.c.h.b16 %v1496
        %v2053 = vunpack.c.l.b16 %v1497
        %v2054 = vunpack.c.h.b16 %v1497
        %v2055 = vunpack.c.l.b16 %v1498
        %v2056 = vunpack.c.h.b16 %v1498
        %v2057 = vunpack.c.l.b16 %v1499
        %v2058 = vunpack.c.h.b16 %v1499
        %v2059 = vunpack.c.l.b16 %v1500
        %v2060 = vunpack.c.h.b16 %v1500
        %v2061 = vunpack.c.l.b16 %v1501
        %v2062 = vunpack.c.h.b16 %v1501
        %v2063 = vunpack.c.l.b16 %v1502
        %v2064 = vunpack.c.h.b16 %v1502
        %v2065 = vunpack.c.l.b16 %v1503
        %v2066 = vunpack.c.h.b16 %v1503
        %v2067 = vunpack.c.l.b16 %v1504
        %v2068 = vunpack.c.h.b16 %v1504
        %v2069 = vunpack.c.l.b16 %v1505
        %v2070 = vunpack.c.h.b16 %v1505
        %v2071 = vunpack.c.l.b16 %v1506
        %v2072 = vunpack.c.h.b16 %v1506
        %v2073 = vunpack.c.l.b16 %v1507
        %v2074 = vunpack.c.h.b16 %v1507
        %v2075 = vunpack.c.l.b16 %v1508
        %v2076 = vunpack.c.h.b16 %v1508
        %v2077 = vunpack.c.l.b16 %v1509
        %v2078 = vunpack.c.h.b16 %v1509
        %v2079 = vunpack.c.l.b16 %v1510
        %v2080 = vunpack.c.h.b16 %v1510
        %v2081 = vunpack.c.l.b16 %v1511
        %v2082 = vunpack.c.h.b16 %v1511
        %v2083 = vunpack.c.l.b16 %v1512
        %v2084 = vunpack.c.h.b16 %v1512
        %v2085 = vunpack.c.l.b16 %v1513
        %v2086 = vunpack.c.h.b16 %v1513
        %v2087 = vunpack.c.l.b16 %v1514
        %v2088 = vunpack.c.h.b16 %v1514
        %v2089 = vunpack.c.l.b16 %v1515
        %v2090 = vunpack.c.h.b16 %v1515
        %v2091 = vunpack.c.l.b16 %v1516
        %v2092 = vunpack.c.h.b16 %v1516
        %v2093 = vunpack.c.l.b16 %v1517
        %v2094 = vunpack.c.h.b16 %v1517
        %v2095 = vunpack.c.l.b16 %v1518
        %v2096 = vunpack.c.h.b16 %v1518
        %v2097 = vunpack.c.l.b16 %v1519
        %v2098 = vunpack.c.h.b16 %v1519
        %v2099 = vunpack.c.l.b16 %v1520
        %v2100 = vunpack.c.h.b16 %v1520
        %v2101 = vunpack.c.l.b16 %v1521
        %v2102 = vunpack.c.h.b16 %v1521
        %v2103 = vunpack.c.l.b16 %v1522
        %v2104 = vunpack.c.h.b16 %v1522
        %v2105 = vunpack.c.l.b16 %v1523
        %v2106 = vunpack.c.h.b16 %v1523
        %v2107 = vunpack.c.l.b16 %v1524
        %v2108 = vunpack.c.h.b16 %v1524
        %v2109 = vunpack.c.l.b16 %v1525
        %v2110 = vunpack.c.h.b16 %v1525
        %v2111 = vunpack.c.l.b16 %v1526
        %v2112 = vunpack.c.h.b16 %v1526
        %v2113 = vunpack.c.l.b16 %v1527
        %v2114 = vunpack.c.h.b16 %v1527
        %v2115 = vunpack.c.l.b16 %v1528
        %v2116 = vunpack.c.h.b16 %v1528
        %v2117 = vunpack.c.l.b16 %v1529
        %v2118 = vunpack.c.h.b16 %v1529
        %v2119 = vunpack.c.l.b16 %v1530
        %v2120 = vunpack.c.h.b16 %v1530
        %v2121 = vunpack.c.l.b16 %v1531
        %v2122 = vunpack.c.h.b16 %v1531
        %v2123 = vunpack.c.l.b16 %v1532
        %v2124 = vunpack.c.h.b16 %v1532
        %v2125 = vpack.c.b16 %v1765, %v1741
        %v2126 = vpack.c.b16 %v1766, %v1742
        %v2127 = vpack.c.b16 %v1767, %v1743
        %v2128 = vpack.c.b16 %v1768, %v1744
        %v2129 = vpack.c.b16 %v1769, %v1745
        %v2130 = vpack.c.b16 %v1770, %v1746
        %v2131 = vpack.c.b16 %v1771, %v1747
        %v2132 = vpack.c.b16 %v1772, %v1748
        %v2133 = vpack.c.b16 %v1773, %v1749
        %v2134 = vpack.c.b16 %v1774, %v1750
        %v2135 = vpack.c.b16 %v1775, %v1751
        %v2136 = vpack.c.b16 %v1776, %v1752
        %v2137 = vpack.c.b16 %v1777, %v1753
        %v2138 = vpack.c.b16 %v1778, %v1754
        %v2139 = vpack.c.b16 %v1779, %v1755
        %v2140 = vpack.c.b16 %v1780, %v1756
        %v2141 = vpack.c.b16 %v1781, %v1757
        %v2142 = vpack.c.b16 %v1782, %v1758
        %v2143 = vpack.c.b16 %v1783, %v1759
        %v2144 = vpack.c.b16 %v1784, %v1760
        %v2145 = vpack.c.b16 %v1785, %v1761
        %v2146 = vpack.c.b16 %v1786, %v1762
        %v2147 = vpack.c.b16 %v1787, %v1763
        %v2148 = vpack.c.b16 %v1788, %v1764
        %v2149 = vpack.c.b16 %v1813, %v1789
        %v2150 = vpack.c.b16 %v1814, %v1790
        %v2151 = vpack.c.b16 %v1815, %v1791
        %v2152 = vpack.c.b16 %v1816, %v1792
        %v2153 = vpack.c.b16 %v1817, %v1793
        %v2154 = vpack.c.b16 %v1818, %v1794
        %v2155 = vpack.c.b16 %v1819, %v1795
        %v2156 = vpack.c.b16 %v1820, %v1796
        %v2157 = vpack.c.b16 %v1821, %v1797
        %v2158 = vpack.c.b16 %v1822, %v1798
        %v2159 = vpack.c.b16 %v1823, %v1799
        %v2160 = vpack.c.b16 %v1824, %v1800
        %v2161 = vpack.c.b16 %v1825, %v1801
        %v2162 = vpack.c.b16 %v1826, %v1802
        %v2163 = vpack.c.b16 %v1827, %v1803
        %v2164 = vpack.c.b16 %v1828, %v1804
        %v2165 = vpack.c.b16 %v1829, %v1805
        %v2166 = vpack.c.b16 %v1830, %v1806
        %v2167 = vpack.c.b16 %v1831, %v1807
        %v2168 = vpack.c.b16 %v1832, %v1808
        %v2169 = vpack.c.b16 %v1833, %v1809
        %v2170 = vpack.c.b16 %v1834, %v1810
        %v2171 = vpack.c.b16 %v1835, %v1811
        %v2172 = vpack.c.b16 %v1836, %v1812
        %v2173 = vpack.c.b16 %v1861, %v1837
        %v2174 = vpack.c.b16 %v1862, %v1838
        %v2175 = vpack.c.b16 %v1863, %v1839
        %v2176 = vpack.c.b16 %v1864, %v1840
        %v2177 = vpack.c.b16 %v1865, %v1841
        %v2178 = vpack.c.b16 %v1866, %v1842
        %v2179 = vpack.c.b16 %v1867, %v1843
        %v2180 = vpack.c.b16 %v1868, %v1844
        %v2181 = vpack.c.b16 %v1869, %v1845
        %v2182 = vpack.c.b16 %v1870, %v1846
        %v2183 = vpack.c.b16 %v1871, %v1847
        %v2184 = vpack.c.b16 %v1872, %v1848
        %v2185 = vpack.c.b16 %v1873, %v1849
        %v2186 = vpack.c.b16 %v1874, %v1850
        %v2187 = vpack.c.b16 %v1875, %v1851
        %v2188 = vpack.c.b16 %v1876, %v1852
        %v2189 = vpack.c.b16 %v1877, %v1853
        %v2190 = vpack.c.b16 %v1878, %v1854
        %v2191 = vpack.c.b16 %v1879, %v1855
        %v2192 = vpack.c.b16 %v1880, %v1856
        %v2193 = vpack.c.b16 %v1881, %v1857
        %v2194 = vpack.c.b16 %v1882, %v1858
        %v2195 = vpack.c.b16 %v1883, %v1859
        %v2196 = vpack.c.b16 %v1884, %v1860
        %v2197 = vpack.c.b16 %v1909, %v1885
        %v2198 = vpack.c.b16 %v1910, %v1886
        %v2199 = vpack.c.b16 %v1911, %v1887
        %v2200 = vpack.c.b16 %v1912, %v1888
        %v2201 = vpack.c.b16 %v1913, %v1889
        %v2202 = vpack.c.b16 %v1914, %v1890
        %v2203 = vpack.c.b16 %v1915, %v1891
        %v2204 = vpack.c.b16 %v1916, %v1892
        %v2205 = vpack.c.b16 %v1917, %v1893
        %v2206 = vpack.c.b16 %v1918, %v1894
        %v2207 = vpack.c.b16 %v1919, %v1895
        %v2208 = vpack.c.b16 %v1920, %v1896
        %v2209 = vpack.c.b16 %v1921, %v1897
        %v2210 = vpack.c.b16 %v1922, %v1898
        %v2211 = vpack.c.b16 %v1923, %v1899
        %v2212 = vpack.c.b16 %v1924, %v1900
        %v2213 = vpack.c.b16 %v1925, %v1901
        %v2214 = vpack.c.b16 %v1926, %v1902
        %v2215 = vpack.c.b16 %v1927, %v1903
        %v2216 = vpack.c.b16 %v1928, %v1904
        %v2217 = vpack.c.b16 %v1929, %v1905
        %v2218 = vpack.c.b16 %v1930, %v1906
        %v2219 = vpack.c.b16 %v1931, %v1907
        %v2220 = vpack.c.b16 %v1932, %v1908
        %v2221 = vpack.c.b16 %v1957, %v1933
        %v2222 = vpack.c.b16 %v1958, %v1934
        %v2223 = vpack.c.b16 %v1959, %v1935
        %v2224 = vpack.c.b16 %v1960, %v1936
        %v2225 = vpack.c.b16 %v1961, %v1937
        %v2226 = vpack.c.b16 %v1962, %v1938
        %v2227 = vpack.c.b16 %v1963, %v1939
        %v2228 = vpack.c.b16 %v1964, %v1940
        %v2229 = vpack.c.b16 %v1965, %v1941
        %v2230 = vpack.c.b16 %v1966, %v1942
        %v2231 = vpack.c.b16 %v1967, %v1943
        %v2232 = vpack.c.b16 %v1968, %v1944
        %v2233 = vpack.c.b16 %v1969, %v1945
        %v2234 = vpack.c.b16 %v1970, %v1946
        %v2235 = vpack.c.b16 %v1971, %v1947
        %v2236 = vpack.c.b16 %v1972, %v1948
        %v2237 = vpack.c.b16 %v1973, %v1949
        %v2238 = vpack.c.b16 %v1974, %v1950
        %v2239 = vpack.c.b16 %v1975, %v1951
        %v2240 = vpack.c.b16 %v1976, %v1952
        %v2241 = vpack.c.b16 %v1977, %v1953
        %v2242 = vpack.c.b16 %v1978, %v1954
        %v2243 = vpack.c.b16 %v1979, %v1955
        %v2244 = vpack.c.b16 %v1980, %v1956
        %v2245 = vpack.c.b16 %v2005, %v1981
        %v2246 = vpack.c.b16 %v2006, %v1982
        %v2247 = vpack.c.b16 %v2007, %v1983
        %v2248 = vpack.c.b16 %v2008, %v1984
        %v2249 = vpack.c.b16 %v2009, %v1985
        %v2250 = vpack.c.b16 %v2010, %v1986
        %v2251 = vpack.c.b16 %v2011, %v1987
        %v2252 = vpack.c.b16 %v2012, %v1988
        %v2253 = vpack.c.b16 %v2013, %v1989
        %v2254 = vpack.c.b16 %v2014, %v1990
        %v2255 = vpack.c.b16 %v2015, %v1991
        %v2256 = vpack.c.b16 %v2016, %v1992
        %v2257 = vpack.c.b16 %v2017, %v1993
        %v2258 = vpack.c.b16 %v2018, %v1994
        %v2259 = vpack.c.b16 %v2019, %v1995
        %v2260 = vpack.c.b16 %v2020, %v1996
        %v2261 = vpack.c.b16 %v2021, %v1997
        %v2262 = vpack.c.b16 %v2022, %v1998
        %v2263 = vpack.c.b16 %v2023, %v1999
        %v2264 = vpack.c.b16 %v2024, %v2000
        %v2265 = vpack.c.b16 %v2025, %v2001
        %v2266 = vpack.c.b16 %v2026, %v2002
        %v2267 = vpack.c.b16 %v2027, %v2003
        %v2268 = vpack.c.b16 %v2028, %v2004
        %v2269 = vpack.c.b16 %v2053, %v2029
        %v2270 = vpack.c.b16 %v2054, %v2030
        %v2271 = vpack.c.b16 %v2055, %v2031
        %v2272 = vpack.c.b16 %v2056, %v2032
        %v2273 = vpack.c.b16 %v2057, %v2033
        %v2274 = vpack.c.b16 %v2058, %v2034
        %v2275 = vpack.c.b16 %v2059, %v2035
        %v2276 = vpack.c.b16 %v2060, %v2036
        %v2277 = vpack.c.b16 %v2061, %v2037
        %v2278 = vpack.c.b16 %v2062, %v2038
        %v2279 = vpack.c.b16 %v2063, %v2039
        %v2280 = vpack.c.b16 %v2064, %v2040
        %v2281 = vpack.c.b16 %v2065, %v2041
        %v2282 = vpack.c.b16 %v2066, %v2042
        %v2283 = vpack.c.b16 %v2067, %v2043
        %v2284 = vpack.c.b16 %v2068, %v2044
        %v2285 = vpack.c.b16 %v2069, %v2045
        %v2286 = vpack.c.b16 %v2070, %v2046
        %v2287 = vpack.c.b16 %v2071, %v2047
        %v2288 = vpack.c.b16 %v2072, %v2048
        %v2289 = vpack.c.b16 %v2073, %v2049
        %v2290 = vpack.c.b16 %v2074, %v2050
        %v2291 = vpack.c.b16 %v2075, %v2051
        %v2292 = vpack.c.b16 %v2076, %v2052
        %v2293 = vpack.c.b16 %v2101, %v2077
        %v2294 = vpack.c.b16 %v2102, %v2078
        %v2295 = vpack.c.b16 %v2103, %v2079
        %v2296 = vpack.c.b16 %v2104, %v2080
        %v2297 = vpack.c.b16 %v2105, %v2081
        %v2298 = vpack.c.b16 %v2106, %v2082
        %v2299 = vpack.c.b16 %v2107, %v2083
        %v2300 = vpack.c.b16 %v2108, %v2084
        %v2301 = vpack.c.b16 %v2109, %v2085
        %v2302 = vpack.c.b16 %v2110, %v2086
        %v2303 = vpack.c.b16 %v2111, %v2087
        %v2304 = vpack.c.b16 %v2112, %v2088
        %v2305 = vpack.c.b16 %v2113, %v2089
        %v2306 = vpack.c.b16 %v2114, %v2090
        %v2307 = vpack.c.b16 %v2115, %v2091
        %v2308 = vpack.c.b16 %v2116, %v2092
        %v2309 = vpack.c.b16 %v2117, %v2093
        %v2310 = vpack.c.b16 %v2118, %v2094
        %v2311 = vpack.c.b16 %v2119, %v2095
        %v2312 = vpack.c.b16 %v2120, %v2096
        %v2313 = vpack.c.b16 %v2121, %v2097
        %v2314 = vpack.c.b16 %v2122, %v2098
        %v2315 = vpack.c.b16 %v2123, %v2099
        %v2316 = vpack.c.b16 %v2124, %v2100
        %2509 = vmatprep.subr.bf16.mxu0 %v2294
        %2510 = vmatpush1.bf16.msra.mxu0 %v2293
        %2511 = vmatprep.subr.bf16.mxu0 %v2270
        %2512 = vmatpush1.bf16.msra.mxu0 %v2269
        %2513 = vmatprep.subr.bf16.mxu0 %v2246
        %2514 = vmatpush1.bf16.msra.mxu0 %v2245
        %2515 = vmatprep.subr.bf16.mxu0 %v2222
        %2516 = vmatpush1.bf16.msra.mxu0 %v2221
        %2517 = vmatprep.subr.bf16.mxu0 %v2198
        %2518 = vmatpush1.bf16.msra.mxu0 %v2197
        %2519 = vmatprep.subr.bf16.mxu0 %v2174
        %2520 = vmatpush1.bf16.msra.mxu0 %v2173
        %2521 = vmatprep.subr.bf16.mxu0 %v2150
        %2522 = vmatpush1.bf16.msra.mxu0 %v2149
        %2523 = vmatprep.subr.bf16.mxu0 %v2126
        %2524 = vmatpush1.bf16.msra.mxu0 %v2125
        %2525 = vmatprep.subr.bf16.mxu0 0
        %2526 = vmatpush2.bf16.msra.mxu0 0
        %2527 = vmatprep.subr.bf16.mxu0 0
        %2528 = vmatpush2.bf16.msra.mxu0 0
        %2529 = vmatprep.subr.bf16.mxu0 0
        %2530 = vmatpush2.bf16.msra.mxu0 0
        %2531 = vmatprep.subr.bf16.mxu0 0
        %2532 = vmatpush2.bf16.msra.mxu0 0
        %2533 = vmatprep.subr.bf16.mxu0 0
        %2534 = vmatpush2.bf16.msra.mxu0 0
        %2535 = vmatprep.subr.bf16.mxu0 0
        %2536 = vmatpush2.bf16.msra.mxu0 0
        %2537 = vmatprep.subr.bf16.mxu0 0
        %2538 = vmatpush2.bf16.msra.mxu0 0
        %2539 = vmatprep.subr.bf16.mxu0 0
        %2540 = vmatpush2.bf16.msra.mxu0 0
        %2541 = vmatprep.mubr.bf16.mxu0 0
        %2542 = vmatmul.mubr.bf16.gmra.mxu0 %v1543
        %v2543 = vpop.f32.mrf.mxu0
        %v2544 = vadd.f32 0.0, %v2543
        %v2545 = vpop.f32.mrf.mxu0
        %v2546 = vadd.f32 0.0, %v2545
        %v2547 = vpop.f32.mrf.mxu0
        %v2548 = vadd.f32 0.0, %v2547
        %v2549 = vpop.f32.mrf.mxu0
        %v2550 = vadd.f32 0.0, %v2549
        %2551 = vmatprep.mubr.bf16.mxu0 0
        %2552 = vmatmul.mubr.bf16.gmra.mxu0 %v1544
        %v2553 = vpop.f32.mrf.mxu0
        %v2554 = vadd.f32 0.0, %v2553
        %v2555 = vpop.f32.mrf.mxu0
        %v2556 = vadd.f32 0.0, %v2555
        %v2557 = vpop.f32.mrf.mxu0
        %v2558 = vadd.f32 0.0, %v2557
        %v2559 = vpop.f32.mrf.mxu0
        %v2560 = vadd.f32 0.0, %v2559
        %2561 = vmatprep.mubr.bf16.mxu0 0
        %2562 = vmatmul.mubr.bf16.gmra.mxu0 %v1545
        %v2563 = vpop.f32.mrf.mxu0
        %v2564 = vadd.f32 0.0, %v2563
        %v2565 = vpop.f32.mrf.mxu0
        %v2566 = vadd.f32 0.0, %v2565
        %v2567 = vpop.f32.mrf.mxu0
        %v2568 = vpop.f32.mrf.mxu0
        %2569 = vdwg.mxu0
        %2570 = vmatprep.subr.bf16.mxu0 %v2296
        %2571 = vmatpush1.bf16.msra.mxu0 %v2295
        %2572 = vmatprep.subr.bf16.mxu0 %v2272
        %2573 = vmatpush1.bf16.msra.mxu0 %v2271
        %2574 = vmatprep.subr.bf16.mxu0 %v2248
        %2575 = vmatpush1.bf16.msra.mxu0 %v2247
        %2576 = vmatprep.subr.bf16.mxu0 %v2224
        %2577 = vmatpush1.bf16.msra.mxu0 %v2223
        %2578 = vmatprep.subr.bf16.mxu0 %v2200
        %2579 = vmatpush1.bf16.msra.mxu0 %v2199
        %2580 = vmatprep.subr.bf16.mxu0 %v2176
        %2581 = vmatpush1.bf16.msra.mxu0 %v2175
        %2582 = vmatprep.subr.bf16.mxu0 %v2152
        %2583 = vmatpush1.bf16.msra.mxu0 %v2151
        %2584 = vmatprep.subr.bf16.mxu0 %v2128
        %2585 = vmatpush1.bf16.msra.mxu0 %v2127
        %2586 = vmatprep.subr.bf16.mxu0 0
        %2587 = vmatpush2.bf16.msra.mxu0 0
        %2588 = vmatprep.subr.bf16.mxu0 0
        %2589 = vmatpush2.bf16.msra.mxu0 0
        %2590 = vmatprep.subr.bf16.mxu0 0
        %2591 = vmatpush2.bf16.msra.mxu0 0
        %2592 = vmatprep.subr.bf16.mxu0 0
        %2593 = vmatpush2.bf16.msra.mxu0 0
        %2594 = vmatprep.subr.bf16.mxu0 0
        %2595 = vmatpush2.bf16.msra.mxu0 0
        %2596 = vmatprep.subr.bf16.mxu0 0
        %2597 = vmatpush2.bf16.msra.mxu0 0
        %2598 = vmatprep.subr.bf16.mxu0 0
        %2599 = vmatpush2.bf16.msra.mxu0 0
        %2600 = vmatprep.subr.bf16.mxu0 0
        %2601 = vmatpush2.bf16.msra.mxu0 0
        %2602 = vmatprep.mubr.bf16.mxu0 0
        %2603 = vmatmul.mubr.bf16.gmra.mxu0 %v1543
        %v2604 = vpop.f32.mrf.mxu0
        %v2605 = vadd.f32 0.0, %v2604
        %v2606 = vpop.f32.mrf.mxu0
        %v2607 = vadd.f32 0.0, %v2606
        %v2608 = vpop.f32.mrf.mxu0
        %v2609 = vadd.f32 0.0, %v2608
        %v2610 = vpop.f32.mrf.mxu0
        %v2611 = vadd.f32 0.0, %v2610
        %2612 = vmatprep.mubr.bf16.mxu0 0
        %2613 = vmatmul.mubr.bf16.gmra.mxu0 %v1544
        %v2614 = vpop.f32.mrf.mxu0
        %v2615 = vadd.f32 0.0, %v2614
        %v2616 = vpop.f32.mrf.mxu0
        %v2617 = vadd.f32 0.0, %v2616
        %v2618 = vpop.f32.mrf.mxu0
        %v2619 = vadd.f32 0.0, %v2618
        %v2620 = vpop.f32.mrf.mxu0
        %v2621 = vadd.f32 0.0, %v2620
        %2622 = vmatprep.mubr.bf16.mxu0 0
        %2623 = vmatmul.mubr.bf16.gmra.mxu0 %v1545
        %v2624 = vpop.f32.mrf.mxu0
        %v2625 = vadd.f32 0.0, %v2624
        %v2626 = vpop.f32.mrf.mxu0
        %v2627 = vadd.f32 0.0, %v2626
        %v2628 = vpop.f32.mrf.mxu0
        %v2629 = vpop.f32.mrf.mxu0
        %2630 = vdwg.mxu0
        %2631 = vmatprep.subr.bf16.mxu0 %v2298
        %2632 = vmatpush1.bf16.msra.mxu0 %v2297
        %2633 = vmatprep.subr.bf16.mxu0 %v2274
        %2634 = vmatpush1.bf16.msra.mxu0 %v2273
        %2635 = vmatprep.subr.bf16.mxu0 %v2250
        %2636 = vmatpush1.bf16.msra.mxu0 %v2249
        %2637 = vmatprep.subr.bf16.mxu0 %v2226
        %2638 = vmatpush1.bf16.msra.mxu0 %v2225
        %2639 = vmatprep.subr.bf16.mxu0 %v2202
        %2640 = vmatpush1.bf16.msra.mxu0 %v2201
        %2641 = vmatprep.subr.bf16.mxu0 %v2178
        %2642 = vmatpush1.bf16.msra.mxu0 %v2177
        %2643 = vmatprep.subr.bf16.mxu0 %v2154
        %2644 = vmatpush1.bf16.msra.mxu0 %v2153
        %2645 = vmatprep.subr.bf16.mxu0 %v2130
        %2646 = vmatpush1.bf16.msra.mxu0 %v2129
        %2647 = vmatprep.subr.bf16.mxu0 0
        %2648 = vmatpush2.bf16.msra.mxu0 0
        %2649 = vmatprep.subr.bf16.mxu0 0
        %2650 = vmatpush2.bf16.msra.mxu0 0
        %2651 = vmatprep.subr.bf16.mxu0 0
        %2652 = vmatpush2.bf16.msra.mxu0 0
        %2653 = vmatprep.subr.bf16.mxu0 0
        %2654 = vmatpush2.bf16.msra.mxu0 0
        %2655 = vmatprep.subr.bf16.mxu0 0
        %2656 = vmatpush2.bf16.msra.mxu0 0
        %2657 = vmatprep.subr.bf16.mxu0 0
        %2658 = vmatpush2.bf16.msra.mxu0 0
        %2659 = vmatprep.subr.bf16.mxu0 0
        %2660 = vmatpush2.bf16.msra.mxu0 0
        %2661 = vmatprep.subr.bf16.mxu0 0
        %2662 = vmatpush2.bf16.msra.mxu0 0
        %2663 = vmatprep.mubr.bf16.mxu0 0
        %2664 = vmatmul.mubr.bf16.gmra.mxu0 %v1543
        %v2665 = vpop.f32.mrf.mxu0
        %v2666 = vadd.f32 0.0, %v2665
        %v2667 = vpop.f32.mrf.mxu0
        %v2668 = vadd.f32 0.0, %v2667
        %v2669 = vpop.f32.mrf.mxu0
        %v2670 = vadd.f32 0.0, %v2669
        %v2671 = vpop.f32.mrf.mxu0
        %v2672 = vadd.f32 0.0, %v2671
        %2673 = vmatprep.mubr.bf16.mxu0 0
        %2674 = vmatmul.mubr.bf16.gmra.mxu0 %v1544
        %v2675 = vpop.f32.mrf.mxu0
        %v2676 = vadd.f32 0.0, %v2675
        %v2677 = vpop.f32.mrf.mxu0
        %v2678 = vadd.f32 0.0, %v2677
        %v2679 = vpop.f32.mrf.mxu0
        %v2680 = vadd.f32 0.0, %v2679
        %v2681 = vpop.f32.mrf.mxu0
        %v2682 = vadd.f32 0.0, %v2681
        %2683 = vmatprep.mubr.bf16.mxu0 0
        %2684 = vmatmul.mubr.bf16.gmra.mxu0 %v1545
        %v2685 = vpop.f32.mrf.mxu0
        %v2686 = vadd.f32 0.0, %v2685
        %v2687 = vpop.f32.mrf.mxu0
        %v2688 = vadd.f32 0.0, %v2687
        %v2689 = vpop.f32.mrf.mxu0
        %v2690 = vpop.f32.mrf.mxu0
        %2691 = vdwg.mxu0
        %2692 = vmatprep.subr.bf16.mxu0 %v2300
        %2693 = vmatpush1.bf16.msra.mxu0 %v2299
        %2694 = vmatprep.subr.bf16.mxu0 %v2276
        %2695 = vmatpush1.bf16.msra.mxu0 %v2275
        %2696 = vmatprep.subr.bf16.mxu0 %v2252
        %2697 = vmatpush1.bf16.msra.mxu0 %v2251
        %2698 = vmatprep.subr.bf16.mxu0 %v2228
        %2699 = vmatpush1.bf16.msra.mxu0 %v2227
        %2700 = vmatprep.subr.bf16.mxu0 %v2204
        %2701 = vmatpush1.bf16.msra.mxu0 %v2203
        %2702 = vmatprep.subr.bf16.mxu0 %v2180
        %2703 = vmatpush1.bf16.msra.mxu0 %v2179
        %2704 = vmatprep.subr.bf16.mxu0 %v2156
        %2705 = vmatpush1.bf16.msra.mxu0 %v2155
        %2706 = vmatprep.subr.bf16.mxu0 %v2132
        %2707 = vmatpush1.bf16.msra.mxu0 %v2131
        %2708 = vmatprep.subr.bf16.mxu0 0
        %2709 = vmatpush2.bf16.msra.mxu0 0
        %2710 = vmatprep.subr.bf16.mxu0 0
        %2711 = vmatpush2.bf16.msra.mxu0 0
        %2712 = vmatprep.subr.bf16.mxu0 0
        %2713 = vmatpush2.bf16.msra.mxu0 0
        %2714 = vmatprep.subr.bf16.mxu0 0
        %2715 = vmatpush2.bf16.msra.mxu0 0
        %2716 = vmatprep.subr.bf16.mxu0 0
        %2717 = vmatpush2.bf16.msra.mxu0 0
        %2718 = vmatprep.subr.bf16.mxu0 0
        %2719 = vmatpush2.bf16.msra.mxu0 0
        %2720 = vmatprep.subr.bf16.mxu0 0
        %2721 = vmatpush2.bf16.msra.mxu0 0
        %2722 = vmatprep.subr.bf16.mxu0 0
        %2723 = vmatpush2.bf16.msra.mxu0 0
        %2724 = vmatprep.mubr.bf16.mxu0 0
        %2725 = vmatmul.mubr.bf16.gmra.mxu0 %v1543
        %v2726 = vpop.f32.mrf.mxu0
        %v2727 = vadd.f32 0.0, %v2726
        %v2728 = vpop.f32.mrf.mxu0
        %v2729 = vadd.f32 0.0, %v2728
        %v2730 = vpop.f32.mrf.mxu0
        %v2731 = vadd.f32 0.0, %v2730
        %v2732 = vpop.f32.mrf.mxu0
        %v2733 = vadd.f32 0.0, %v2732
        %2734 = vmatprep.mubr.bf16.mxu0 0
        %2735 = vmatmul.mubr.bf16.gmra.mxu0 %v1544
        %v2736 = vpop.f32.mrf.mxu0
        %v2737 = vadd.f32 0.0, %v2736
        %v2738 = vpop.f32.mrf.mxu0
        %v2739 = vadd.f32 0.0, %v2738
        %v2740 = vpop.f32.mrf.mxu0
        %v2741 = vadd.f32 0.0, %v2740
        %v2742 = vpop.f32.mrf.mxu0
        %v2743 = vadd.f32 0.0, %v2742
        %2744 = vmatprep.mubr.bf16.mxu0 0
        %2745 = vmatmul.mubr.bf16.gmra.mxu0 %v1545
        %v2746 = vpop.f32.mrf.mxu0
        %v2747 = vadd.f32 0.0, %v2746
        %v2748 = vpop.f32.mrf.mxu0
        %v2749 = vadd.f32 0.0, %v2748
        %v2750 = vpop.f32.mrf.mxu0
        %v2751 = vpop.f32.mrf.mxu0
        %2752 = vdwg.mxu0
        %2753 = vmatprep.subr.bf16.mxu0 %v2302
        %2754 = vmatpush1.bf16.msra.mxu0 %v2301
        %2755 = vmatprep.subr.bf16.mxu0 %v2278
        %2756 = vmatpush1.bf16.msra.mxu0 %v2277
        %2757 = vmatprep.subr.bf16.mxu0 %v2254
        %2758 = vmatpush1.bf16.msra.mxu0 %v2253
        %2759 = vmatprep.subr.bf16.mxu0 %v2230
        %2760 = vmatpush1.bf16.msra.mxu0 %v2229
        %2761 = vmatprep.subr.bf16.mxu0 %v2206
        %2762 = vmatpush1.bf16.msra.mxu0 %v2205
        %2763 = vmatprep.subr.bf16.mxu0 %v2182
        %2764 = vmatpush1.bf16.msra.mxu0 %v2181
        %2765 = vmatprep.subr.bf16.mxu0 %v2158
        %2766 = vmatpush1.bf16.msra.mxu0 %v2157
        %2767 = vmatprep.subr.bf16.mxu0 %v2134
        %2768 = vmatpush1.bf16.msra.mxu0 %v2133
        %2769 = vmatprep.subr.bf16.mxu0 0
        %2770 = vmatpush2.bf16.msra.mxu0 0
        %2771 = vmatprep.subr.bf16.mxu0 0
        %2772 = vmatpush2.bf16.msra.mxu0 0
        %2773 = vmatprep.subr.bf16.mxu0 0
        %2774 = vmatpush2.bf16.msra.mxu0 0
        %2775 = vmatprep.subr.bf16.mxu0 0
        %2776 = vmatpush2.bf16.msra.mxu0 0
        %2777 = vmatprep.subr.bf16.mxu0 0
        %2778 = vmatpush2.bf16.msra.mxu0 0
        %2779 = vmatprep.subr.bf16.mxu0 0
        %2780 = vmatpush2.bf16.msra.mxu0 0
        %2781 = vmatprep.subr.bf16.mxu0 0
        %2782 = vmatpush2.bf16.msra.mxu0 0
        %2783 = vmatprep.subr.bf16.mxu0 0
        %2784 = vmatpush2.bf16.msra.mxu0 0
        %2785 = vmatprep.mubr.bf16.mxu0 0
        %2786 = vmatmul.mubr.bf16.gmra.mxu0 %v1543
        %v2787 = vpop.f32.mrf.mxu0
        %v2788 = vadd.f32 0.0, %v2787
        %v2789 = vpop.f32.mrf.mxu0
        %v2790 = vadd.f32 0.0, %v2789
        %v2791 = vpop.f32.mrf.mxu0
        %v2792 = vadd.f32 0.0, %v2791
        %v2793 = vpop.f32.mrf.mxu0
        %v2794 = vadd.f32 0.0, %v2793
        %2795 = vmatprep.mubr.bf16.mxu0 0
        %2796 = vmatmul.mubr.bf16.gmra.mxu0 %v1544
        %v2797 = vpop.f32.mrf.mxu0
        %v2798 = vadd.f32 0.0, %v2797
        %v2799 = vpop.f32.mrf.mxu0
        %v2800 = vadd.f32 0.0, %v2799
        %v2801 = vpop.f32.mrf.mxu0
        %v2802 = vadd.f32 0.0, %v2801
        %v2803 = vpop.f32.mrf.mxu0
        %v2804 = vadd.f32 0.0, %v2803
        %2805 = vmatprep.mubr.bf16.mxu0 0
        %2806 = vmatmul.mubr.bf16.gmra.mxu0 %v1545
        %v2807 = vpop.f32.mrf.mxu0
        %v2808 = vadd.f32 0.0, %v2807
        %v2809 = vpop.f32.mrf.mxu0
        %v2810 = vadd.f32 0.0, %v2809
        %v2811 = vpop.f32.mrf.mxu0
        %v2812 = vpop.f32.mrf.mxu0
        %2813 = vdwg.mxu0
        %2814 = vmatprep.subr.bf16.mxu0 %v2304
        %2815 = vmatpush1.bf16.msra.mxu0 %v2303
        %2816 = vmatprep.subr.bf16.mxu0 %v2280
        %2817 = vmatpush1.bf16.msra.mxu0 %v2279
        %2818 = vmatprep.subr.bf16.mxu0 %v2256
        %2819 = vmatpush1.bf16.msra.mxu0 %v2255
        %2820 = vmatprep.subr.bf16.mxu0 %v2232
        %2821 = vmatpush1.bf16.msra.mxu0 %v2231
        %2822 = vmatprep.subr.bf16.mxu0 %v2208
        %2823 = vmatpush1.bf16.msra.mxu0 %v2207
        %2824 = vmatprep.subr.bf16.mxu0 %v2184
        %2825 = vmatpush1.bf16.msra.mxu0 %v2183
        %2826 = vmatprep.subr.bf16.mxu0 %v2160
        %2827 = vmatpush1.bf16.msra.mxu0 %v2159
        %2828 = vmatprep.subr.bf16.mxu0 %v2136
        %2829 = vmatpush1.bf16.msra.mxu0 %v2135
        %2830 = vmatprep.subr.bf16.mxu0 0
        %2831 = vmatpush2.bf16.msra.mxu0 0
        %2832 = vmatprep.subr.bf16.mxu0 0
        %2833 = vmatpush2.bf16.msra.mxu0 0
        %2834 = vmatprep.subr.bf16.mxu0 0
        %2835 = vmatpush2.bf16.msra.mxu0 0
        %2836 = vmatprep.subr.bf16.mxu0 0
        %2837 = vmatpush2.bf16.msra.mxu0 0
        %2838 = vmatprep.subr.bf16.mxu0 0
        %2839 = vmatpush2.bf16.msra.mxu0 0
        %2840 = vmatprep.subr.bf16.mxu0 0
        %2841 = vmatpush2.bf16.msra.mxu0 0
        %2842 = vmatprep.subr.bf16.mxu0 0
        %2843 = vmatpush2.bf16.msra.mxu0 0
        %2844 = vmatprep.subr.bf16.mxu0 0
        %2845 = vmatpush2.bf16.msra.mxu0 0
        %2846 = vmatprep.mubr.bf16.mxu0 0
        %2847 = vmatmul.mubr.bf16.gmra.mxu0 %v1543
        %v2848 = vpop.f32.mrf.mxu0
        %v2849 = vadd.f32 0.0, %v2848
        %v2850 = vpop.f32.mrf.mxu0
        %v2851 = vadd.f32 0.0, %v2850
        %v2852 = vpop.f32.mrf.mxu0
        %v2853 = vadd.f32 0.0, %v2852
        %v2854 = vpop.f32.mrf.mxu0
        %v2855 = vadd.f32 0.0, %v2854
        %2856 = vmatprep.mubr.bf16.mxu0 0
        %2857 = vmatmul.mubr.bf16.gmra.mxu0 %v1544
        %v2858 = vpop.f32.mrf.mxu0
        %v2859 = vadd.f32 0.0, %v2858
        %v2860 = vpop.f32.mrf.mxu0
        %v2861 = vadd.f32 0.0, %v2860
        %v2862 = vpop.f32.mrf.mxu0
        %v2863 = vadd.f32 0.0, %v2862
        %v2864 = vpop.f32.mrf.mxu0
        %v2865 = vadd.f32 0.0, %v2864
        %2866 = vmatprep.mubr.bf16.mxu0 0
        %2867 = vmatmul.mubr.bf16.gmra.mxu0 %v1545
        %v2868 = vpop.f32.mrf.mxu0
        %v2869 = vadd.f32 0.0, %v2868
        %v2870 = vpop.f32.mrf.mxu0
        %v2871 = vadd.f32 0.0, %v2870
        %v2872 = vpop.f32.mrf.mxu0
        %v2873 = vpop.f32.mrf.mxu0
        %2874 = vdwg.mxu0
        %2875 = vmatprep.subr.bf16.mxu0 %v2306
        %2876 = vmatpush1.bf16.msra.mxu0 %v2305
        %2877 = vmatprep.subr.bf16.mxu0 %v2282
        %2878 = vmatpush1.bf16.msra.mxu0 %v2281
        %2879 = vmatprep.subr.bf16.mxu0 %v2258
        %2880 = vmatpush1.bf16.msra.mxu0 %v2257
        %2881 = vmatprep.subr.bf16.mxu0 %v2234
        %2882 = vmatpush1.bf16.msra.mxu0 %v2233
        %2883 = vmatprep.subr.bf16.mxu0 %v2210
        %2884 = vmatpush1.bf16.msra.mxu0 %v2209
        %2885 = vmatprep.subr.bf16.mxu0 %v2186
        %2886 = vmatpush1.bf16.msra.mxu0 %v2185
        %2887 = vmatprep.subr.bf16.mxu0 %v2162
        %2888 = vmatpush1.bf16.msra.mxu0 %v2161
        %2889 = vmatprep.subr.bf16.mxu0 %v2138
        %2890 = vmatpush1.bf16.msra.mxu0 %v2137
        %2891 = vmatprep.subr.bf16.mxu0 0
        %2892 = vmatpush2.bf16.msra.mxu0 0
        %2893 = vmatprep.subr.bf16.mxu0 0
        %2894 = vmatpush2.bf16.msra.mxu0 0
        %2895 = vmatprep.subr.bf16.mxu0 0
        %2896 = vmatpush2.bf16.msra.mxu0 0
        %2897 = vmatprep.subr.bf16.mxu0 0
        %2898 = vmatpush2.bf16.msra.mxu0 0
        %2899 = vmatprep.subr.bf16.mxu0 0
        %2900 = vmatpush2.bf16.msra.mxu0 0
        %2901 = vmatprep.subr.bf16.mxu0 0
        %2902 = vmatpush2.bf16.msra.mxu0 0
        %2903 = vmatprep.subr.bf16.mxu0 0
        %2904 = vmatpush2.bf16.msra.mxu0 0
        %2905 = vmatprep.subr.bf16.mxu0 0
        %2906 = vmatpush2.bf16.msra.mxu0 0
        %2907 = vmatprep.mubr.bf16.mxu0 0
        %2908 = vmatmul.mubr.bf16.gmra.mxu0 %v1543
        %v2909 = vpop.f32.mrf.mxu0
        %v2910 = vadd.f32 0.0, %v2909
        %v2911 = vpop.f32.mrf.mxu0
        %v2912 = vadd.f32 0.0, %v2911
        %v2913 = vpop.f32.mrf.mxu0
        %v2914 = vadd.f32 0.0, %v2913
        %v2915 = vpop.f32.mrf.mxu0
        %v2916 = vadd.f32 0.0, %v2915
        %2917 = vmatprep.mubr.bf16.mxu0 0
        %2918 = vmatmul.mubr.bf16.gmra.mxu0 %v1544
        %v2919 = vpop.f32.mrf.mxu0
        %v2920 = vadd.f32 0.0, %v2919
        %v2921 = vpop.f32.mrf.mxu0
        %v2922 = vadd.f32 0.0, %v2921
        %v2923 = vpop.f32.mrf.mxu0
        %v2924 = vadd.f32 0.0, %v2923
        %v2925 = vpop.f32.mrf.mxu0
        %v2926 = vadd.f32 0.0, %v2925
        %2927 = vmatprep.mubr.bf16.mxu0 0
        %2928 = vmatmul.mubr.bf16.gmra.mxu0 %v1545
        %v2929 = vpop.f32.mrf.mxu0
        %v2930 = vadd.f32 0.0, %v2929
        %v2931 = vpop.f32.mrf.mxu0
        %v2932 = vadd.f32 0.0, %v2931
        %v2933 = vpop.f32.mrf.mxu0
        %v2934 = vpop.f32.mrf.mxu0
        %2935 = vdwg.mxu0
        %2936 = vmatprep.subr.bf16.mxu0 %v2308
        %2937 = vmatpush1.bf16.msra.mxu0 %v2307
        %2938 = vmatprep.subr.bf16.mxu0 %v2284
        %2939 = vmatpush1.bf16.msra.mxu0 %v2283
        %2940 = vmatprep.subr.bf16.mxu0 %v2260
        %2941 = vmatpush1.bf16.msra.mxu0 %v2259
        %2942 = vmatprep.subr.bf16.mxu0 %v2236
        %2943 = vmatpush1.bf16.msra.mxu0 %v2235
        %2944 = vmatprep.subr.bf16.mxu0 %v2212
        %2945 = vmatpush1.bf16.msra.mxu0 %v2211
        %2946 = vmatprep.subr.bf16.mxu0 %v2188
        %2947 = vmatpush1.bf16.msra.mxu0 %v2187
        %2948 = vmatprep.subr.bf16.mxu0 %v2164
        %2949 = vmatpush1.bf16.msra.mxu0 %v2163
        %2950 = vmatprep.subr.bf16.mxu0 %v2140
        %2951 = vmatpush1.bf16.msra.mxu0 %v2139
        %2952 = vmatprep.subr.bf16.mxu0 0
        %2953 = vmatpush2.bf16.msra.mxu0 0
        %2954 = vmatprep.subr.bf16.mxu0 0
        %2955 = vmatpush2.bf16.msra.mxu0 0
        %2956 = vmatprep.subr.bf16.mxu0 0
        %2957 = vmatpush2.bf16.msra.mxu0 0
        %2958 = vmatprep.subr.bf16.mxu0 0
        %2959 = vmatpush2.bf16.msra.mxu0 0
        %2960 = vmatprep.subr.bf16.mxu0 0
        %2961 = vmatpush2.bf16.msra.mxu0 0
        %2962 = vmatprep.subr.bf16.mxu0 0
        %2963 = vmatpush2.bf16.msra.mxu0 0
        %2964 = vmatprep.subr.bf16.mxu0 0
        %2965 = vmatpush2.bf16.msra.mxu0 0
        %2966 = vmatprep.subr.bf16.mxu0 0
        %2967 = vmatpush2.bf16.msra.mxu0 0
        %2968 = vmatprep.mubr.bf16.mxu0 0
        %2969 = vmatmul.mubr.bf16.gmra.mxu0 %v1543
        %v2970 = vpop.f32.mrf.mxu0
        %v2971 = vadd.f32 0.0, %v2970
        %v2972 = vpop.f32.mrf.mxu0
        %v2973 = vadd.f32 0.0, %v2972
        %v2974 = vpop.f32.mrf.mxu0
        %v2975 = vadd.f32 0.0, %v2974
        %v2976 = vpop.f32.mrf.mxu0
        %v2977 = vadd.f32 0.0, %v2976
        %2978 = vmatprep.mubr.bf16.mxu0 0
        %2979 = vmatmul.mubr.bf16.gmra.mxu0 %v1544
        %v2980 = vpop.f32.mrf.mxu0
        %v2981 = vadd.f32 0.0, %v2980
        %v2982 = vpop.f32.mrf.mxu0
        %v2983 = vadd.f32 0.0, %v2982
        %v2984 = vpop.f32.mrf.mxu0
        %v2985 = vadd.f32 0.0, %v2984
        %v2986 = vpop.f32.mrf.mxu0
        %v2987 = vadd.f32 0.0, %v2986
        %2988 = vmatprep.mubr.bf16.mxu0 0
        %2989 = vmatmul.mubr.bf16.gmra.mxu0 %v1545
        %v2990 = vpop.f32.mrf.mxu0
        %v2991 = vadd.f32 0.0, %v2990
        %v2992 = vpop.f32.mrf.mxu0
        %v2993 = vadd.f32 0.0, %v2992
        %v2994 = vpop.f32.mrf.mxu0
        %v2995 = vpop.f32.mrf.mxu0
        %2996 = vdwg.mxu0
        %2997 = vmatprep.subr.bf16.mxu0 %v2310
        %2998 = vmatpush1.bf16.msra.mxu0 %v2309
        %2999 = vmatprep.subr.bf16.mxu0 %v2286
        %3000 = vmatpush1.bf16.msra.mxu0 %v2285
        %3001 = vmatprep.subr.bf16.mxu0 %v2262
        %3002 = vmatpush1.bf16.msra.mxu0 %v2261
        %3003 = vmatprep.subr.bf16.mxu0 %v2238
        %3004 = vmatpush1.bf16.msra.mxu0 %v2237
        %3005 = vmatprep.subr.bf16.mxu0 %v2214
        %3006 = vmatpush1.bf16.msra.mxu0 %v2213
        %3007 = vmatprep.subr.bf16.mxu0 %v2190
        %3008 = vmatpush1.bf16.msra.mxu0 %v2189
        %3009 = vmatprep.subr.bf16.mxu0 %v2166
        %3010 = vmatpush1.bf16.msra.mxu0 %v2165
        %3011 = vmatprep.subr.bf16.mxu0 %v2142
        %3012 = vmatpush1.bf16.msra.mxu0 %v2141
        %3013 = vmatprep.subr.bf16.mxu0 0
        %3014 = vmatpush2.bf16.msra.mxu0 0
        %3015 = vmatprep.subr.bf16.mxu0 0
        %3016 = vmatpush2.bf16.msra.mxu0 0
        %3017 = vmatprep.subr.bf16.mxu0 0
        %3018 = vmatpush2.bf16.msra.mxu0 0
        %3019 = vmatprep.subr.bf16.mxu0 0
        %3020 = vmatpush2.bf16.msra.mxu0 0
        %3021 = vmatprep.subr.bf16.mxu0 0
        %3022 = vmatpush2.bf16.msra.mxu0 0
        %3023 = vmatprep.subr.bf16.mxu0 0
        %3024 = vmatpush2.bf16.msra.mxu0 0
        %3025 = vmatprep.subr.bf16.mxu0 0
        %3026 = vmatpush2.bf16.msra.mxu0 0
        %3027 = vmatprep.subr.bf16.mxu0 0
        %3028 = vmatpush2.bf16.msra.mxu0 0
        %3029 = vmatprep.mubr.bf16.mxu0 0
        %3030 = vmatmul.mubr.bf16.gmra.mxu0 %v1543
        %v3031 = vpop.f32.mrf.mxu0
        %v3032 = vadd.f32 0.0, %v3031
        %v3033 = vpop.f32.mrf.mxu0
        %v3034 = vadd.f32 0.0, %v3033
        %v3035 = vpop.f32.mrf.mxu0
        %v3036 = vadd.f32 0.0, %v3035
        %v3037 = vpop.f32.mrf.mxu0
        %v3038 = vadd.f32 0.0, %v3037
        %3039 = vmatprep.mubr.bf16.mxu0 0
        %3040 = vmatmul.mubr.bf16.gmra.mxu0 %v1544
        %v3041 = vpop.f32.mrf.mxu0
        %v3042 = vadd.f32 0.0, %v3041
        %v3043 = vpop.f32.mrf.mxu0
        %v3044 = vadd.f32 0.0, %v3043
        %v3045 = vpop.f32.mrf.mxu0
        %v3046 = vadd.f32 0.0, %v3045
        %v3047 = vpop.f32.mrf.mxu0
        %v3048 = vadd.f32 0.0, %v3047
        %3049 = vmatprep.mubr.bf16.mxu0 0
        %3050 = vmatmul.mubr.bf16.gmra.mxu0 %v1545
        %v3051 = vpop.f32.mrf.mxu0
        %v3052 = vadd.f32 0.0, %v3051
        %v3053 = vpop.f32.mrf.mxu0
        %v3054 = vadd.f32 0.0, %v3053
        %v3055 = vpop.f32.mrf.mxu0
        %v3056 = vpop.f32.mrf.mxu0
        %3057 = vdwg.mxu0
        %3058 = vmatprep.subr.bf16.mxu0 %v2312
        %3059 = vmatpush1.bf16.msra.mxu0 %v2311
        %3060 = vmatprep.subr.bf16.mxu0 %v2288
        %3061 = vmatpush1.bf16.msra.mxu0 %v2287
        %3062 = vmatprep.subr.bf16.mxu0 %v2264
        %3063 = vmatpush1.bf16.msra.mxu0 %v2263
        %3064 = vmatprep.subr.bf16.mxu0 %v2240
        %3065 = vmatpush1.bf16.msra.mxu0 %v2239
        %3066 = vmatprep.subr.bf16.mxu0 %v2216
        %3067 = vmatpush1.bf16.msra.mxu0 %v2215
        %3068 = vmatprep.subr.bf16.mxu0 %v2192
        %3069 = vmatpush1.bf16.msra.mxu0 %v2191
        %3070 = vmatprep.subr.bf16.mxu0 %v2168
        %3071 = vmatpush1.bf16.msra.mxu0 %v2167
        %3072 = vmatprep.subr.bf16.mxu0 %v2144
        %3073 = vmatpush1.bf16.msra.mxu0 %v2143
        %3074 = vmatprep.subr.bf16.mxu0 0
        %3075 = vmatpush2.bf16.msra.mxu0 0
        %3076 = vmatprep.subr.bf16.mxu0 0
        %3077 = vmatpush2.bf16.msra.mxu0 0
        %3078 = vmatprep.subr.bf16.mxu0 0
        %3079 = vmatpush2.bf16.msra.mxu0 0
        %3080 = vmatprep.subr.bf16.mxu0 0
        %3081 = vmatpush2.bf16.msra.mxu0 0
        %3082 = vmatprep.subr.bf16.mxu0 0
        %3083 = vmatpush2.bf16.msra.mxu0 0
        %3084 = vmatprep.subr.bf16.mxu0 0
        %3085 = vmatpush2.bf16.msra.mxu0 0
        %3086 = vmatprep.subr.bf16.mxu0 0
        %3087 = vmatpush2.bf16.msra.mxu0 0
        %3088 = vmatprep.subr.bf16.mxu0 0
        %3089 = vmatpush2.bf16.msra.mxu0 0
        %3090 = vmatprep.mubr.bf16.mxu0 0
        %3091 = vmatmul.mubr.bf16.gmra.mxu0 %v1543
        %v3092 = vpop.f32.mrf.mxu0
        %v3093 = vadd.f32 0.0, %v3092
        %v3094 = vpop.f32.mrf.mxu0
        %v3095 = vadd.f32 0.0, %v3094
        %v3096 = vpop.f32.mrf.mxu0
        %v3097 = vadd.f32 0.0, %v3096
        %v3098 = vpop.f32.mrf.mxu0
        %v3099 = vadd.f32 0.0, %v3098
        %3100 = vmatprep.mubr.bf16.mxu0 0
        %3101 = vmatmul.mubr.bf16.gmra.mxu0 %v1544
        %v3102 = vpop.f32.mrf.mxu0
        %v3103 = vadd.f32 0.0, %v3102
        %v3104 = vpop.f32.mrf.mxu0
        %v3105 = vadd.f32 0.0, %v3104
        %v3106 = vpop.f32.mrf.mxu0
        %v3107 = vadd.f32 0.0, %v3106
        %v3108 = vpop.f32.mrf.mxu0
        %v3109 = vadd.f32 0.0, %v3108
        %3110 = vmatprep.mubr.bf16.mxu0 0
        %3111 = vmatmul.mubr.bf16.gmra.mxu0 %v1545
        %v3112 = vpop.f32.mrf.mxu0
        %v3113 = vadd.f32 0.0, %v3112
        %v3114 = vpop.f32.mrf.mxu0
        %v3115 = vadd.f32 0.0, %v3114
        %v3116 = vpop.f32.mrf.mxu0
        %v3117 = vpop.f32.mrf.mxu0
        %3118 = vdwg.mxu0
        %3119 = vmatprep.subr.bf16.mxu0 %v2314
        %3120 = vmatpush1.bf16.msra.mxu0 %v2313
        %3121 = vmatprep.subr.bf16.mxu0 %v2290
        %3122 = vmatpush1.bf16.msra.mxu0 %v2289
        %3123 = vmatprep.subr.bf16.mxu0 %v2266
        %3124 = vmatpush1.bf16.msra.mxu0 %v2265
        %3125 = vmatprep.subr.bf16.mxu0 %v2242
        %3126 = vmatpush1.bf16.msra.mxu0 %v2241
        %3127 = vmatprep.subr.bf16.mxu0 %v2218
        %3128 = vmatpush1.bf16.msra.mxu0 %v2217
        %3129 = vmatprep.subr.bf16.mxu0 %v2194
        %3130 = vmatpush1.bf16.msra.mxu0 %v2193
        %3131 = vmatprep.subr.bf16.mxu0 %v2170
        %3132 = vmatpush1.bf16.msra.mxu0 %v2169
        %3133 = vmatprep.subr.bf16.mxu0 %v2146
        %3134 = vmatpush1.bf16.msra.mxu0 %v2145
        %3135 = vmatprep.subr.bf16.mxu0 0
        %3136 = vmatpush2.bf16.msra.mxu0 0
        %3137 = vmatprep.subr.bf16.mxu0 0
        %3138 = vmatpush2.bf16.msra.mxu0 0
        %3139 = vmatprep.subr.bf16.mxu0 0
        %3140 = vmatpush2.bf16.msra.mxu0 0
        %3141 = vmatprep.subr.bf16.mxu0 0
        %3142 = vmatpush2.bf16.msra.mxu0 0
        %3143 = vmatprep.subr.bf16.mxu0 0
        %3144 = vmatpush2.bf16.msra.mxu0 0
        %3145 = vmatprep.subr.bf16.mxu0 0
        %3146 = vmatpush2.bf16.msra.mxu0 0
        %3147 = vmatprep.subr.bf16.mxu0 0
        %3148 = vmatpush2.bf16.msra.mxu0 0
        %3149 = vmatprep.subr.bf16.mxu0 0
        %3150 = vmatpush2.bf16.msra.mxu0 0
        %3151 = vmatprep.mubr.bf16.mxu0 0
        %3152 = vmatmul.mubr.bf16.gmra.mxu0 %v1543
        %v3153 = vpop.f32.mrf.mxu0
        %v3154 = vadd.f32 0.0, %v3153
        %v3155 = vpop.f32.mrf.mxu0
        %v3156 = vadd.f32 0.0, %v3155
        %v3157 = vpop.f32.mrf.mxu0
        %v3158 = vadd.f32 0.0, %v3157
        %v3159 = vpop.f32.mrf.mxu0
        %v3160 = vadd.f32 0.0, %v3159
        %3161 = vmatprep.mubr.bf16.mxu0 0
        %3162 = vmatmul.mubr.bf16.gmra.mxu0 %v1544
        %v3163 = vpop.f32.mrf.mxu0
        %v3164 = vadd.f32 0.0, %v3163
        %v3165 = vpop.f32.mrf.mxu0
        %v3166 = vadd.f32 0.0, %v3165
        %v3167 = vpop.f32.mrf.mxu0
        %v3168 = vadd.f32 0.0, %v3167
        %v3169 = vpop.f32.mrf.mxu0
        %v3170 = vadd.f32 0.0, %v3169
        %3171 = vmatprep.mubr.bf16.mxu0 0
        %3172 = vmatmul.mubr.bf16.gmra.mxu0 %v1545
        %v3173 = vpop.f32.mrf.mxu0
        %v3174 = vadd.f32 0.0, %v3173
        %v3175 = vpop.f32.mrf.mxu0
        %v3176 = vadd.f32 0.0, %v3175
        %v3177 = vpop.f32.mrf.mxu0
        %v3178 = vpop.f32.mrf.mxu0
        %3179 = vdwg.mxu0
        %3180 = vmatprep.subr.bf16.mxu0 %v2316
        %3181 = vmatpush1.bf16.msra.mxu0 %v2315
        %3182 = vmatprep.subr.bf16.mxu0 %v2292
        %3183 = vmatpush1.bf16.msra.mxu0 %v2291
        %3184 = vmatprep.subr.bf16.mxu0 %v2268
        %3185 = vmatpush1.bf16.msra.mxu0 %v2267
        %3186 = vmatprep.subr.bf16.mxu0 %v2244
        %3187 = vmatpush1.bf16.msra.mxu0 %v2243
        %3188 = vmatprep.subr.bf16.mxu0 %v2220
        %3189 = vmatpush1.bf16.msra.mxu0 %v2219
        %3190 = vmatprep.subr.bf16.mxu0 %v2196
        %3191 = vmatpush1.bf16.msra.mxu0 %v2195
        %3192 = vmatprep.subr.bf16.mxu0 %v2172
        %3193 = vmatpush1.bf16.msra.mxu0 %v2171
        %3194 = vmatprep.subr.bf16.mxu0 %v2148
        %3195 = vmatpush1.bf16.msra.mxu0 %v2147
        %3196 = vmatprep.subr.bf16.mxu0 0
        %3197 = vmatpush2.bf16.msra.mxu0 0
        %3198 = vmatprep.subr.bf16.mxu0 0
        %3199 = vmatpush2.bf16.msra.mxu0 0
        %3200 = vmatprep.subr.bf16.mxu0 0
        %3201 = vmatpush2.bf16.msra.mxu0 0
        %3202 = vmatprep.subr.bf16.mxu0 0
        %3203 = vmatpush2.bf16.msra.mxu0 0
        %3204 = vmatprep.subr.bf16.mxu0 0
        %3205 = vmatpush2.bf16.msra.mxu0 0
        %3206 = vmatprep.subr.bf16.mxu0 0
        %3207 = vmatpush2.bf16.msra.mxu0 0
        %3208 = vmatprep.subr.bf16.mxu0 0
        %3209 = vmatpush2.bf16.msra.mxu0 0
        %3210 = vmatprep.subr.bf16.mxu0 0
        %3211 = vmatpush2.bf16.msra.mxu0 0
        %3212 = vmatprep.mubr.bf16.mxu0 0
        %3213 = vmatmul.mubr.bf16.gmra.mxu0 %v1543
        %v3214 = vpop.f32.mrf.mxu0
        %v3215 = vadd.f32 0.0, %v3214
        %v3216 = vpop.f32.mrf.mxu0
        %v3217 = vadd.f32 0.0, %v3216
        %v3218 = vpop.f32.mrf.mxu0
        %v3219 = vadd.f32 0.0, %v3218
        %v3220 = vpop.f32.mrf.mxu0
        %v3221 = vadd.f32 0.0, %v3220
        %3222 = vmatprep.mubr.bf16.mxu0 0
        %3223 = vmatmul.mubr.bf16.gmra.mxu0 %v1544
        %v3224 = vpop.f32.mrf.mxu0
        %v3225 = vadd.f32 0.0, %v3224
        %v3226 = vpop.f32.mrf.mxu0
        %v3227 = vadd.f32 0.0, %v3226
        %v3228 = vpop.f32.mrf.mxu0
        %v3229 = vadd.f32 0.0, %v3228
        %v3230 = vpop.f32.mrf.mxu0
        %v3231 = vadd.f32 0.0, %v3230
        %3232 = vmatprep.mubr.bf16.mxu0 0
        %3233 = vmatmul.mubr.bf16.gmra.mxu0 %v1545
        %v3234 = vpop.f32.mrf.mxu0
        %v3235 = vadd.f32 0.0, %v3234
        %v3236 = vpop.f32.mrf.mxu0
        %v3237 = vadd.f32 0.0, %v3236
        %v3238 = vpop.f32.mrf.mxu0
        %v3239 = vpop.f32.mrf.mxu0
        %3240 = vdwg.mxu0
        %3241 = vst [vmem:[#allocation4] sm:$0xff] %v2544
        %3242 = vst [vmem:[#allocation4 + $0x8] sm:$0xff] %v2546
        %3243 = vst [vmem:[#allocation4 + $0x10] sm:$0xff] %v2605
        %3244 = vst [vmem:[#allocation4 + $0x18] sm:$0xff] %v2607
        %3245 = vst [vmem:[#allocation4 + $0x20] sm:$0xff] %v2666
        %3246 = vst [vmem:[#allocation4 + $0x28] sm:$0xff] %v2668
        %3247 = vst [vmem:[#allocation4 + $0x30] sm:$0xff] %v2727
        %3248 = vst [vmem:[#allocation4 + $0x38] sm:$0xff] %v2729
        %3249 = vst [vmem:[#allocation4 + $0x40] sm:$0xff] %v2788
        %3250 = vst [vmem:[#allocation4 + $0x48] sm:$0xff] %v2790
        %3251 = vst [vmem:[#allocation4 + $0x50] sm:$0xff] %v2849
        %3252 = vst [vmem:[#allocation4 + $0x58] sm:$0xff] %v2851
        %3253 = vst [vmem:[#allocation4 + $0x60] sm:$0xff] %v2910
        %3254 = vst [vmem:[#allocation4 + $0x68] sm:$0xff] %v2912
        %3255 = vst [vmem:[#allocation4 + $0x70] sm:$0xff] %v2971
        %3256 = vst [vmem:[#allocation4 + $0x78] sm:$0xff] %v2973
        %3257 = vst [vmem:[#allocation4 + $0x80] sm:$0xff] %v3032
        %3258 = vst [vmem:[#allocation4 + $0x88] sm:$0xff] %v3034
        %3259 = vst [vmem:[#allocation4 + $0x90] sm:$0xff] %v3093
        %3260 = vst [vmem:[#allocation4 + $0x98] sm:$0xff] %v3095
        %3261 = vst [vmem:[#allocation4 + $0xa0] sm:$0xff] %v3154
        %3262 = vst [vmem:[#allocation4 + $0xa8] sm:$0xff] %v3156
        %3263 = vst [vmem:[#allocation4 + $0xb0] sm:$0xff] %v3215
        %3264 = vst [vmem:[#allocation4 + $0xb8] sm:$0xff] %v3217
        %3265 = vst [vmem:[#allocation4 + $0xc0] sm:$0xff] %v2548
        %3266 = vst [vmem:[#allocation4 + $0xc8] sm:$0xff] %v2550
        %3267 = vst [vmem:[#allocation4 + $0xd0] sm:$0xff] %v2609
        %3268 = vst [vmem:[#allocation4 + $0xd8] sm:$0xff] %v2611
        %3269 = vst [vmem:[#allocation4 + $0xe0] sm:$0xff] %v2670
        %3270 = vst [vmem:[#allocation4 + $0xe8] sm:$0xff] %v2672
        %3271 = vst [vmem:[#allocation4 + $0xf0] sm:$0xff] %v2731
        %3272 = vst [vmem:[#allocation4 + $0xf8] sm:$0xff] %v2733
        %3273 = vst [vmem:[#allocation4 + $0x100] sm:$0xff] %v2792
        %3274 = vst [vmem:[#allocation4 + $0x108] sm:$0xff] %v2794
        %3275 = vst [vmem:[#allocation4 + $0x110] sm:$0xff] %v2853
        %3276 = vst [vmem:[#allocation4 + $0x118] sm:$0xff] %v2855
        %3277 = vst [vmem:[#allocation4 + $0x120] sm:$0xff] %v2914
        %3278 = vst [vmem:[#allocation4 + $0x128] sm:$0xff] %v2916
        %3279 = vst [vmem:[#allocation4 + $0x130] sm:$0xff] %v2975
        %3280 = vst [vmem:[#allocation4 + $0x138] sm:$0xff] %v2977
        %3281 = vst [vmem:[#allocation4 + $0x140] sm:$0xff] %v3036
        %3282 = vst [vmem:[#allocation4 + $0x148] sm:$0xff] %v3038
        %3283 = vst [vmem:[#allocation4 + $0x150] sm:$0xff] %v3097
        %3284 = vst [vmem:[#allocation4 + $0x158] sm:$0xff] %v3099
        %3285 = vst [vmem:[#allocation4 + $0x160] sm:$0xff] %v3158
        %3286 = vst [vmem:[#allocation4 + $0x168] sm:$0xff] %v3160
        %3287 = vst [vmem:[#allocation4 + $0x170] sm:$0xff] %v3219
        %3288 = vst [vmem:[#allocation4 + $0x178] sm:$0xff] %v3221
        %3289 = vst [vmem:[#allocation4 + $0x180] sm:$0xff] %v2554
        %3290 = vst [vmem:[#allocation4 + $0x188] sm:$0xff] %v2556
        %3291 = vst [vmem:[#allocation4 + $0x190] sm:$0xff] %v2615
        %3292 = vst [vmem:[#allocation4 + $0x198] sm:$0xff] %v2617
        %3293 = vst [vmem:[#allocation4 + $0x1a0] sm:$0xff] %v2676
        %3294 = vst [vmem:[#allocation4 + $0x1a8] sm:$0xff] %v2678
        %3295 = vst [vmem:[#allocation4 + $0x1b0] sm:$0xff] %v2737
        %3296 = vst [vmem:[#allocation4 + $0x1b8] sm:$0xff] %v2739
        %3297 = vst [vmem:[#allocation4 + $0x1c0] sm:$0xff] %v2798
        %3298 = vst [vmem:[#allocation4 + $0x1c8] sm:$0xff] %v2800
        %3299 = vst [vmem:[#allocation4 + $0x1d0] sm:$0xff] %v2859
        %3300 = vst [vmem:[#allocation4 + $0x1d8] sm:$0xff] %v2861
        %3301 = vst [vmem:[#allocation4 + $0x1e0] sm:$0xff] %v2920
        %3302 = vst [vmem:[#allocation4 + $0x1e8] sm:$0xff] %v2922
        %3303 = vst [vmem:[#allocation4 + $0x1f0] sm:$0xff] %v2981
        %3304 = vst [vmem:[#allocation4 + $0x1f8] sm:$0xff] %v2983
        %3305 = vst [vmem:[#allocation4 + $0x200] sm:$0xff] %v3042
        %3306 = vst [vmem:[#allocation4 + $0x208] sm:$0xff] %v3044
        %3307 = vst [vmem:[#allocation4 + $0x210] sm:$0xff] %v3103
        %3308 = vst [vmem:[#allocation4 + $0x218] sm:$0xff] %v3105
        %3309 = vst [vmem:[#allocation4 + $0x220] sm:$0xff] %v3164
        %3310 = vst [vmem:[#allocation4 + $0x228] sm:$0xff] %v3166
        %3311 = vst [vmem:[#allocation4 + $0x230] sm:$0xff] %v3225
        %3312 = vst [vmem:[#allocation4 + $0x238] sm:$0xff] %v3227
        %3313 = vst [vmem:[#allocation4 + $0x240] sm:$0xff] %v2558
        %3314 = vst [vmem:[#allocation4 + $0x248] sm:$0xff] %v2560
        %3315 = vst [vmem:[#allocation4 + $0x250] sm:$0xff] %v2619
        %3316 = vst [vmem:[#allocation4 + $0x258] sm:$0xff] %v2621
        %3317 = vst [vmem:[#allocation4 + $0x260] sm:$0xff] %v2680
        %3318 = vst [vmem:[#allocation4 + $0x268] sm:$0xff] %v2682
        %3319 = vst [vmem:[#allocation4 + $0x270] sm:$0xff] %v2741
        %3320 = vst [vmem:[#allocation4 + $0x278] sm:$0xff] %v2743
        %3321 = vst [vmem:[#allocation4 + $0x280] sm:$0xff] %v2802
        %3322 = vst [vmem:[#allocation4 + $0x288] sm:$0xff] %v2804
        %3323 = vst [vmem:[#allocation4 + $0x290] sm:$0xff] %v2863
        %3324 = vst [vmem:[#allocation4 + $0x298] sm:$0xff] %v2865
        %3325 = vst [vmem:[#allocation4 + $0x2a0] sm:$0xff] %v2924
        %3326 = vst [vmem:[#allocation4 + $0x2a8] sm:$0xff] %v2926
        %3327 = vst [vmem:[#allocation4 + $0x2b0] sm:$0xff] %v2985
        %3328 = vst [vmem:[#allocation4 + $0x2b8] sm:$0xff] %v2987
        %3329 = vst [vmem:[#allocation4 + $0x2c0] sm:$0xff] %v3046
        %3330 = vst [vmem:[#allocation4 + $0x2c8] sm:$0xff] %v3048
        %3331 = vst [vmem:[#allocation4 + $0x2d0] sm:$0xff] %v3107
        %3332 = vst [vmem:[#allocation4 + $0x2d8] sm:$0xff] %v3109
        %3333 = vst [vmem:[#allocation4 + $0x2e0] sm:$0xff] %v3168
        %3334 = vst [vmem:[#allocation4 + $0x2e8] sm:$0xff] %v3170
        %3335 = vst [vmem:[#allocation4 + $0x2f0] sm:$0xff] %v3229
        %3336 = vst [vmem:[#allocation4 + $0x2f8] sm:$0xff] %v3231
        %3337 = vst [vmem:[#allocation4 + $0x300] sm:$0xf] %v2564
        %3338 = vst [vmem:[#allocation4 + $0x308] sm:$0xf] %v2566
        %3339 = vst [vmem:[#allocation4 + $0x310] sm:$0xf] %v2625
        %3340 = vst [vmem:[#allocation4 + $0x318] sm:$0xf] %v2627
        %3341 = vst [vmem:[#allocation4 + $0x320] sm:$0xf] %v2686
        %3342 = vst [vmem:[#allocation4 + $0x328] sm:$0xf] %v2688
        %3343 = vst [vmem:[#allocation4 + $0x330] sm:$0xf] %v2747
        %3344 = vst [vmem:[#allocation4 + $0x338] sm:$0xf] %v2749
        %3345 = vst [vmem:[#allocation4 + $0x340] sm:$0xf] %v2808
        %3346 = vst [vmem:[#allocation4 + $0x348] sm:$0xf] %v2810
        %3347 = vst [vmem:[#allocation4 + $0x350] sm:$0xf] %v2869
        %3348 = vst [vmem:[#allocation4 + $0x358] sm:$0xf] %v2871
        %3349 = vst [vmem:[#allocation4 + $0x360] sm:$0xf] %v2930
        %3350 = vst [vmem:[#allocation4 + $0x368] sm:$0xf] %v2932
        %3351 = vst [vmem:[#allocation4 + $0x370] sm:$0xf] %v2991
        %3352 = vst [vmem:[#allocation4 + $0x378] sm:$0xf] %v2993
        %3353 = vst [vmem:[#allocation4 + $0x380] sm:$0xf] %v3052
        %3354 = vst [vmem:[#allocation4 + $0x388] sm:$0xf] %v3054
        %3355 = vst [vmem:[#allocation4 + $0x390] sm:$0xf] %v3113
        %3356 = vst [vmem:[#allocation4 + $0x398] sm:$0xf] %v3115
        %3357 = vst [vmem:[#allocation4 + $0x3a0] sm:$0xf] %v3174
        %3358 = vst [vmem:[#allocation4 + $0x3a8] sm:$0xf] %v3176
        %3359 = vst [vmem:[#allocation4 + $0x3b0] sm:$0xf] %v3235
        %3360 = vst [vmem:[#allocation4 + $0x3b8] sm:$0xf] %v3237
        %v3361 = vld [vmem:[#allocation6] sm:$0xff]
        %v3362 = vld [vmem:[#allocation6 + $0x8] sm:$0xff]
        %v3363 = vld [vmem:[#allocation6 + $0x10] sm:$0xff]
        %v3364 = vld [vmem:[#allocation6 + $0x18] sm:$0xff]
        %v3365 = vld [vmem:[#allocation6 + $0x20] sm:$0xff]
        %v3366 = vld [vmem:[#allocation6 + $0x28] sm:$0xff]
        %v3367 = vld [vmem:[#allocation6 + $0x30] sm:$0xff]
        %v3368 = vld [vmem:[#allocation6 + $0x38] sm:$0xff]
        %v3369 = vld [vmem:[#allocation7] sm:$0xff]
        %v3370 = vld [vmem:[#allocation7 + $0x8] sm:$0xff]
        %v3371 = vld [vmem:[#allocation7 + $0x10] sm:$0xff]
        %v3372 = vld [vmem:[#allocation7 + $0x18] sm:$0xff]
        %v3373 = vld [vmem:[#allocation7 + $0x20] sm:$0xff]
        %v3374 = vld [vmem:[#allocation7 + $0x28] sm:$0xff]
        %v3375 = vld [vmem:[#allocation7 + $0x30] sm:$0xff]
        %v3376 = vld [vmem:[#allocation7 + $0x38] sm:$0xff]
        %v3377 = vld [vmem:[#allocation8] sm:$0xff]
        %v3378 = vld [vmem:[#allocation8 + $0x8] sm:$0xff]
        %v3379 = vld [vmem:[#allocation8 + $0x10] sm:$0xff]
        %v3380 = vld [vmem:[#allocation8 + $0x18] sm:$0xff]
        %v3381 = vld [vmem:[#allocation8 + $0x20] sm:$0xff]
        %v3382 = vld [vmem:[#allocation8 + $0x28] sm:$0xff]
        %v3383 = vld [vmem:[#allocation8 + $0x30] sm:$0xff]
        %v3384 = vld [vmem:[#allocation8 + $0x38] sm:$0xff]
        %s3385 = smul.u32 %s31, 4
        %v3386 = vld [vmem:[#allocation4] sm:$0xff]
        %v3387 = vld [vmem:[#allocation4 + $0x8] sm:$0xff]
        %v3388 = vld [vmem:[#allocation4 + $0xc0] sm:$0xff]
        %v3389 = vld [vmem:[#allocation4 + $0xc8] sm:$0xff]
        %v3390 = vld [vmem:[#allocation4 + $0x180] sm:$0xff]
        %v3391 = vld [vmem:[#allocation4 + $0x188] sm:$0xff]
        %v3392 = vld [vmem:[#allocation4 + $0x240] sm:$0xff]
        %v3393 = vld [vmem:[#allocation4 + $0x248] sm:$0xff]
        %v3394 = vld [vmem:[#allocation4 + $0x300] sm:$0x3]
        %v3395 = vld [vmem:[#allocation4 + $0x308] sm:$0x3]
        %v3396 = vld [vmem:[#allocation4 + $0x10] sm:$0xfe]
        %v3397 = vld [vmem:[#allocation4 + $0x18] sm:$0xfe]
        %v3398 = vld [vmem:[#allocation4 + $0xd0] sm:$0xff]
        %v3399 = vld [vmem:[#allocation4 + $0xd8] sm:$0xff]
        %v3400 = vld [vmem:[#allocation4 + $0x190] sm:$0xff]
        %v3401 = vld [vmem:[#allocation4 + $0x198] sm:$0xff]
        %v3402 = vld [vmem:[#allocation4 + $0x250] sm:$0xff]
        %v3403 = vld [vmem:[#allocation4 + $0x258] sm:$0xff]
        %v3404 = vld [vmem:[#allocation4 + $0x310] sm:$0x7]
        %v3405 = vld [vmem:[#allocation4 + $0x318] sm:$0x7]
        %vm3416 = vcmask 1046528
        %v3417 = vrot.slane %v3396, 1
        %v3418 = vrot.slane %v3398, 1
        %v3419 = vsel %vm3416, %v3417, %v3418
        %v3420 = vrot.slane %v3397, 1
        %v3421 = vrot.slane %v3399, 1
        %v3422 = vsel %vm3416, %v3420, %v3421
        %v3423 = vrot.slane %v3400, 1
        %v3424 = vsel %vm3416, %v3418, %v3423
        %v3425 = vrot.slane %v3401, 1
        %v3426 = vsel %vm3416, %v3421, %v3425
        %v3427 = vrot.slane %v3402, 1
        %v3428 = vsel %vm3416, %v3423, %v3427
        %v3429 = vrot.slane %v3403, 1
        %v3430 = vsel %vm3416, %v3425, %v3429
        %v3431 = vrot.slane %v3404, 1
        %v3432 = vsel %vm3416, %v3427, %v3431
        %v3433 = vrot.slane %v3405, 1
        %v3434 = vsel %vm3416, %v3429, %v3433
        %v3445 = vadd.f32 %v3386, %v3419
        %v3446 = vadd.f32 %v3387, %v3422
        %v3447 = vadd.f32 %v3388, %v3424
        %v3448 = vadd.f32 %v3389, %v3426
        %v3449 = vadd.f32 %v3390, %v3428
        %v3450 = vadd.f32 %v3391, %v3430
        %v3451 = vadd.f32 %v3392, %v3432
        %v3452 = vadd.f32 %v3393, %v3434
        %v3453 = vadd.f32 %v3394, %v3431
        %v3454 = vadd.f32 %v3395, %v3433
        %v3455 = vld [vmem:[#allocation4 + $0x20] sm:$0xfc]
        %v3456 = vld [vmem:[#allocation4 + $0x28] sm:$0xfc]
        %v3457 = vld [vmem:[#allocation4 + $0xe0] sm:$0xff]
        %v3458 = vld [vmem:[#allocation4 + $0xe8] sm:$0xff]
        %v3459 = vld [vmem:[#allocation4 + $0x1a0] sm:$0xff]
        %v3460 = vld [vmem:[#allocation4 + $0x1a8] sm:$0xff]
        %v3461 = vld [vmem:[#allocation4 + $0x260] sm:$0xff]
        %v3462 = vld [vmem:[#allocation4 + $0x268] sm:$0xff]
        %v3463 = vld [vmem:[#allocation4 + $0x320] sm:$0xf]
        %v3464 = vld [vmem:[#allocation4 + $0x328] sm:$0xf]
        %vm3475 = vcmask 1045504
        %v3476 = vrot.slane %v3455, 2
        %v3477 = vrot.slane %v3457, 2
        %v3478 = vsel %vm3475, %v3476, %v3477
        %v3479 = vrot.slane %v3456, 2
        %v3480 = vrot.slane %v3458, 2
        %v3481 = vsel %vm3475, %v3479, %v3480
        %v3482 = vrot.slane %v3459, 2
        %v3483 = vsel %vm3475, %v3477, %v3482
        %v3484 = vrot.slane %v3460, 2
        %v3485 = vsel %vm3475, %v3480, %v3484
        %v3486 = vrot.slane %v3461, 2
        %v3487 = vsel %vm3475, %v3482, %v3486
        %v3488 = vrot.slane %v3462, 2
        %v3489 = vsel %vm3475, %v3484, %v3488
        %v3490 = vrot.slane %v3463, 2
        %v3491 = vsel %vm3475, %v3486, %v3490
        %v3492 = vrot.slane %v3464, 2
        %v3493 = vsel %vm3475, %v3488, %v3492
        %v3504 = vadd.f32 %v3445, %v3478
        %v3505 = vadd.f32 %v3446, %v3481
        %v3506 = vadd.f32 %v3447, %v3483
        %v3507 = vadd.f32 %v3448, %v3485
        %v3508 = vadd.f32 %v3449, %v3487
        %v3509 = vadd.f32 %v3450, %v3489
        %v3510 = vadd.f32 %v3451, %v3491
        %v3511 = vadd.f32 %v3452, %v3493
        %v3512 = vadd.f32 %v3453, %v3490
        %v3513 = vadd.f32 %v3454, %v3492
        %s3514 = sld [smem:[#allocation22 + %s3385]]
        %v3515 = vstv %s3514
        %v3516 = vadd.f32 %v3504, %v3515
        %v3517 = vadd.f32 %v3505, %v3515
        %v3518 = vadd.f32 %v3506, %v3515
        %v3519 = vadd.f32 %v3507, %v3515
        %v3520 = vadd.f32 %v3508, %v3515
        %v3521 = vadd.f32 %v3509, %v3515
        %v3522 = vadd.f32 %v3510, %v3515
        %v3523 = vadd.f32 %v3511, %v3515
        %v3524 = vadd.f32 %v3512, %v3515
        %v3525 = vadd.f32 %v3513, %v3515
        %vm3526 = vcmp.gt.f32.partialorder %v3516, 0.0
        %vm3527 = vcmp.gt.f32.partialorder %v3517, 0.0
        %vm3528 = vcmp.gt.f32.partialorder %v3518, 0.0
        %vm3529 = vcmp.gt.f32.partialorder %v3519, 0.0
        %vm3530 = vcmp.gt.f32.partialorder %v3520, 0.0
        %vm3531 = vcmp.gt.f32.partialorder %v3521, 0.0
        %vm3532 = vcmp.gt.f32.partialorder %v3522, 0.0
        %vm3533 = vcmp.gt.f32.partialorder %v3523, 0.0
        %vm3534 = vcmp.gt.f32.partialorder %v3524, 0.0
        %vm3535 = vcmp.gt.f32.partialorder %v3525, 0.0
        %v3536 = vmul.f32 %v3516, 0.2
        %v3537 = vmul.f32 %v3517, 0.2
        %v3538 = vmul.f32 %v3518, 0.2
        %v3539 = vmul.f32 %v3519, 0.2
        %v3540 = vmul.f32 %v3520, 0.2
        %v3541 = vmul.f32 %v3521, 0.2
        %v3542 = vmul.f32 %v3522, 0.2
        %v3543 = vmul.f32 %v3523, 0.2
        %v3544 = vmul.f32 %v3524, 0.2
        %v3545 = vmul.f32 %v3525, 0.2
        %v3546 = vsel %vm3526, %v3516, %v3536
        %v3547 = vsel %vm3527, %v3517, %v3537
        %v3548 = vsel %vm3528, %v3518, %v3538
        %v3549 = vsel %vm3529, %v3519, %v3539
        %v3550 = vsel %vm3530, %v3520, %v3540
        %v3551 = vsel %vm3531, %v3521, %v3541
        %v3552 = vsel %vm3532, %v3522, %v3542
        %v3553 = vsel %vm3533, %v3523, %v3543
        %v3554 = vsel %vm3534, %v3524, %v3544
        %v3555 = vsel %vm3535, %v3525, %v3545
        %3556 = vst [vmem:[#allocation5] sm:$0xff] %v3546
        %3557 = vst [vmem:[#allocation5 + $0x8] sm:$0xff] %v3547
        %3558 = vst [vmem:[#allocation5 + $0x10] sm:$0xff] %v3548
        %3559 = vst [vmem:[#allocation5 + $0x18] sm:$0xff] %v3549
        %3560 = vst [vmem:[#allocation5 + $0x20] sm:$0xff] %v3550
        %3561 = vst [vmem:[#allocation5 + $0x28] sm:$0xff] %v3551
        %3562 = vst [vmem:[#allocation5 + $0x30] sm:$0xff] %v3552
        %3563 = vst [vmem:[#allocation5 + $0x38] sm:$0xff] %v3553
        %3564 = vst [vmem:[#allocation5 + $0x40] sm:$0x3] %v3554
        %3565 = vst [vmem:[#allocation5 + $0x48] sm:$0x3] %v3555
        %v3566 = vld [vmem:[#allocation5] sm:$0xff]
        %v3567 = vld [vmem:[#allocation5 + $0x8] sm:$0xff]
        %v3568 = vld [vmem:[#allocation5 + $0x10] sm:$0xff]
        %v3569 = vld [vmem:[#allocation5 + $0x18] sm:$0xff]
        %v3570 = vld [vmem:[#allocation5 + $0x20] sm:$0xff]
        %v3571 = vld [vmem:[#allocation5 + $0x28] sm:$0xff]
        %v3572 = vld [vmem:[#allocation5 + $0x30] sm:$0xff]
        %v3573 = vld [vmem:[#allocation5 + $0x38] sm:$0xff]
        %s3574 = smul.u32 %s31, 36
        %s3575 = sld [smem:[#allocation23 + %s3574]]
        %v3576 = vstv %s3575
        %v3577 = vmul.f32 %v3576, %v3566
        %v3578 = vmul.f32 %v3576, %v3567
        %v3579 = vmul.f32 %v3576, %v3568
        %v3580 = vmul.f32 %v3576, %v3569
        %v3581 = vmul.f32 %v3576, %v3570
        %v3582 = vmul.f32 %v3576, %v3571
        %v3583 = vmul.f32 %v3576, %v3572
        %v3584 = vmul.f32 %v3576, %v3573
        %v3585 = vadd.f32 %v3361, %v3577
        %v3586 = vadd.f32 %v3362, %v3578
        %v3587 = vadd.f32 %v3363, %v3579
        %v3588 = vadd.f32 %v3364, %v3580
        %v3589 = vadd.f32 %v3365, %v3581
        %v3590 = vadd.f32 %v3366, %v3582
        %v3591 = vadd.f32 %v3367, %v3583
        %v3592 = vadd.f32 %v3368, %v3584
        %s3593 = sadd.s32 %s3574, 1
        %s3594 = sld [smem:[#allocation23 + %s3593]]
        %v3595 = vstv %s3594
        %v3596 = vmul.f32 %v3595, %v3566
        %v3597 = vmul.f32 %v3595, %v3567
        %v3598 = vmul.f32 %v3595, %v3568
        %v3599 = vmul.f32 %v3595, %v3569
        %v3600 = vmul.f32 %v3595, %v3570
        %v3601 = vmul.f32 %v3595, %v3571
        %v3602 = vmul.f32 %v3595, %v3572
        %v3603 = vmul.f32 %v3595, %v3573
        %v3604 = vadd.f32 %v3369, %v3596
        %v3605 = vadd.f32 %v3370, %v3597
        %v3606 = vadd.f32 %v3371, %v3598
        %v3607 = vadd.f32 %v3372, %v3599
        %v3608 = vadd.f32 %v3373, %v3600
        %v3609 = vadd.f32 %v3374, %v3601
        %v3610 = vadd.f32 %v3375, %v3602
        %v3611 = vadd.f32 %v3376, %v3603
        %s3612 = sadd.s32 %s3574, 2
        %s3613 = sld [smem:[#allocation23 + %s3612]]
        %v3614 = vstv %s3613
        %v3615 = vmul.f32 %v3614, %v3566
        %v3616 = vmul.f32 %v3614, %v3567
        %v3617 = vmul.f32 %v3614, %v3568
        %v3618 = vmul.f32 %v3614, %v3569
        %v3619 = vmul.f32 %v3614, %v3570
        %v3620 = vmul.f32 %v3614, %v3571
        %v3621 = vmul.f32 %v3614, %v3572
        %v3622 = vmul.f32 %v3614, %v3573
        %v3623 = vadd.f32 %v3377, %v3615
        %v3624 = vadd.f32 %v3378, %v3616
        %v3625 = vadd.f32 %v3379, %v3617
        %v3626 = vadd.f32 %v3380, %v3618
        %v3627 = vadd.f32 %v3381, %v3619
        %v3628 = vadd.f32 %v3382, %v3620
        %v3629 = vadd.f32 %v3383, %v3621
        %v3630 = vadd.f32 %v3384, %v3622
        %v3631 = vld [vmem:[#allocation5] sm:$0xfe]
        %v3632 = vld [vmem:[#allocation5 + $0x8] sm:$0xfe]
        %v3633 = vld [vmem:[#allocation5 + $0x10] sm:$0xff]
        %v3634 = vld [vmem:[#allocation5 + $0x18] sm:$0xff]
        %v3635 = vld [vmem:[#allocation5 + $0x20] sm:$0xff]
        %v3636 = vld [vmem:[#allocation5 + $0x28] sm:$0xff]
        %v3637 = vld [vmem:[#allocation5 + $0x30] sm:$0xff]
        %v3638 = vld [vmem:[#allocation5 + $0x38] sm:$0xff]
        %v3639 = vld [vmem:[#allocation5 + $0x40] sm:$0x1]
        %v3640 = vld [vmem:[#allocation5 + $0x48] sm:$0x1]
        %s3641 = sadd.s32 %s3574, 3
        %s3642 = sld [smem:[#allocation23 + %s3641]]
        %v3643 = vstv %s3642
        %v3644 = vmul.f32 %v3643, %v3631
        %v3645 = vmul.f32 %v3643, %v3632
        %v3646 = vmul.f32 %v3643, %v3633
        %v3647 = vmul.f32 %v3643, %v3634
        %v3648 = vmul.f32 %v3643, %v3635
        %v3649 = vmul.f32 %v3643, %v3636
        %v3650 = vmul.f32 %v3643, %v3637
        %v3651 = vmul.f32 %v3643, %v3638
        %v3652 = vmul.f32 %v3643, %v3639
        %v3653 = vmul.f32 %v3643, %v3640
        %v3664 = vrot.slane %v3644, 1
        %v3665 = vrot.slane %v3646, 1
        %v3666 = vsel %vm3416, %v3664, %v3665
        %v3667 = vrot.slane %v3645, 1
        %v3668 = vrot.slane %v3647, 1
        %v3669 = vsel %vm3416, %v3667, %v3668
        %v3670 = vrot.slane %v3648, 1
        %v3671 = vsel %vm3416, %v3665, %v3670
        %v3672 = vrot.slane %v3649, 1
        %v3673 = vsel %vm3416, %v3668, %v3672
        %v3674 = vrot.slane %v3650, 1
        %v3675 = vsel %vm3416, %v3670, %v3674
        %v3676 = vrot.slane %v3651, 1
        %v3677 = vsel %vm3416, %v3672, %v3676
        %v3678 = vrot.slane %v3652, 1
        %v3679 = vsel %vm3416, %v3674, %v3678
        %v3680 = vrot.slane %v3653, 1
        %v3681 = vsel %vm3416, %v3676, %v3680
        %v3690 = vadd.f32 %v3585, %v3666
        %v3691 = vadd.f32 %v3586, %v3669
        %v3692 = vadd.f32 %v3587, %v3671
        %v3693 = vadd.f32 %v3588, %v3673
        %v3694 = vadd.f32 %v3589, %v3675
        %v3695 = vadd.f32 %v3590, %v3677
        %v3696 = vadd.f32 %v3591, %v3679
        %v3697 = vadd.f32 %v3592, %v3681
        %s3698 = sadd.s32 %s3574, 4
        %s3699 = sld [smem:[#allocation23 + %s3698]]
        %v3700 = vstv %s3699
        %v3701 = vmul.f32 %v3700, %v3631
        %v3702 = vmul.f32 %v3700, %v3632
        %v3703 = vmul.f32 %v3700, %v3633
        %v3704 = vmul.f32 %v3700, %v3634
        %v3705 = vmul.f32 %v3700, %v3635
        %v3706 = vmul.f32 %v3700, %v3636
        %v3707 = vmul.f32 %v3700, %v3637
        %v3708 = vmul.f32 %v3700, %v3638
        %v3709 = vmul.f32 %v3700, %v3639
        %v3710 = vmul.f32 %v3700, %v3640
        %v3721 = vrot.slane %v3701, 1
        %v3722 = vrot.slane %v3703, 1
        %v3723 = vsel %vm3416, %v3721, %v3722
        %v3724 = vrot.slane %v3702, 1
        %v3725 = vrot.slane %v3704, 1
        %v3726 = vsel %vm3416, %v3724, %v3725
        %v3727 = vrot.slane %v3705, 1
        %v3728 = vsel %vm3416, %v3722, %v3727
        %v3729 = vrot.slane %v3706, 1
        %v3730 = vsel %vm3416, %v3725, %v3729
        %v3731 = vrot.slane %v3707, 1
        %v3732 = vsel %vm3416, %v3727, %v3731
        %v3733 = vrot.slane %v3708, 1
        %v3734 = vsel %vm3416, %v3729, %v3733
        %v3735 = vrot.slane %v3709, 1
        %v3736 = vsel %vm3416, %v3731, %v3735
        %v3737 = vrot.slane %v3710, 1
        %v3738 = vsel %vm3416, %v3733, %v3737
        %v3747 = vadd.f32 %v3604, %v3723
        %v3748 = vadd.f32 %v3605, %v3726
        %v3749 = vadd.f32 %v3606, %v3728
        %v3750 = vadd.f32 %v3607, %v3730
        %v3751 = vadd.f32 %v3608, %v3732
        %v3752 = vadd.f32 %v3609, %v3734
        %v3753 = vadd.f32 %v3610, %v3736
        %v3754 = vadd.f32 %v3611, %v3738
        %s3755 = sadd.s32 %s3574, 5
        %s3756 = sld [smem:[#allocation23 + %s3755]]
        %v3757 = vstv %s3756
        %v3758 = vmul.f32 %v3757, %v3631
        %v3759 = vmul.f32 %v3757, %v3632
        %v3760 = vmul.f32 %v3757, %v3633
        %v3761 = vmul.f32 %v3757, %v3634
        %v3762 = vmul.f32 %v3757, %v3635
        %v3763 = vmul.f32 %v3757, %v3636
        %v3764 = vmul.f32 %v3757, %v3637
        %v3765 = vmul.f32 %v3757, %v3638
        %v3766 = vmul.f32 %v3757, %v3639
        %v3767 = vmul.f32 %v3757, %v3640
        %v3778 = vrot.slane %v3758, 1
        %v3779 = vrot.slane %v3760, 1
        %v3780 = vsel %vm3416, %v3778, %v3779
        %v3781 = vrot.slane %v3759, 1
        %v3782 = vrot.slane %v3761, 1
        %v3783 = vsel %vm3416, %v3781, %v3782
        %v3784 = vrot.slane %v3762, 1
        %v3785 = vsel %vm3416, %v3779, %v3784
        %v3786 = vrot.slane %v3763, 1
        %v3787 = vsel %vm3416, %v3782, %v3786
        %v3788 = vrot.slane %v3764, 1
        %v3789 = vsel %vm3416, %v3784, %v3788
        %v3790 = vrot.slane %v3765, 1
        %v3791 = vsel %vm3416, %v3786, %v3790
        %v3792 = vrot.slane %v3766, 1
        %v3793 = vsel %vm3416, %v3788, %v3792
        %v3794 = vrot.slane %v3767, 1
        %v3795 = vsel %vm3416, %v3790, %v3794
        %v3804 = vadd.f32 %v3623, %v3780
        %v3805 = vadd.f32 %v3624, %v3783
        %v3806 = vadd.f32 %v3625, %v3785
        %v3807 = vadd.f32 %v3626, %v3787
        %v3808 = vadd.f32 %v3627, %v3789
        %v3809 = vadd.f32 %v3628, %v3791
        %v3810 = vadd.f32 %v3629, %v3793
        %v3811 = vadd.f32 %v3630, %v3795
        %v3812 = vld [vmem:[#allocation5] sm:$0xfc]
        %v3813 = vld [vmem:[#allocation5 + $0x8] sm:$0xfc]
        %v3814 = vld [vmem:[#allocation5 + $0x40] sm:$0x3]
        %v3815 = vld [vmem:[#allocation5 + $0x48] sm:$0x3]
        %s3816 = sadd.s32 %s3574, 6
        %s3817 = sld [smem:[#allocation23 + %s3816]]
        %v3818 = vstv %s3817
        %v3819 = vmul.f32 %v3818, %v3812
        %v3820 = vmul.f32 %v3818, %v3813
        %v3821 = vmul.f32 %v3818, %v3633
        %v3822 = vmul.f32 %v3818, %v3634
        %v3823 = vmul.f32 %v3818, %v3635
        %v3824 = vmul.f32 %v3818, %v3636
        %v3825 = vmul.f32 %v3818, %v3637
        %v3826 = vmul.f32 %v3818, %v3638
        %v3827 = vmul.f32 %v3818, %v3814
        %v3828 = vmul.f32 %v3818, %v3815
        %v3839 = vrot.slane %v3819, 2
        %v3840 = vrot.slane %v3821, 2
        %v3841 = vsel %vm3475, %v3839, %v3840
        %v3842 = vrot.slane %v3820, 2
        %v3843 = vrot.slane %v3822, 2
        %v3844 = vsel %vm3475, %v3842, %v3843
        %v3845 = vrot.slane %v3823, 2
        %v3846 = vsel %vm3475, %v3840, %v3845
        %v3847 = vrot.slane %v3824, 2
        %v3848 = vsel %vm3475, %v3843, %v3847
        %v3849 = vrot.slane %v3825, 2
        %v3850 = vsel %vm3475, %v3845, %v3849
        %v3851 = vrot.slane %v3826, 2
        %v3852 = vsel %vm3475, %v3847, %v3851
        %v3853 = vrot.slane %v3827, 2
        %v3854 = vsel %vm3475, %v3849, %v3853
        %v3855 = vrot.slane %v3828, 2
        %v3856 = vsel %vm3475, %v3851, %v3855
        %v3865 = vadd.f32 %v3690, %v3841
        %v3866 = vadd.f32 %v3691, %v3844
        %v3867 = vadd.f32 %v3692, %v3846
        %v3868 = vadd.f32 %v3693, %v3848
        %v3869 = vadd.f32 %v3694, %v3850
        %v3870 = vadd.f32 %v3695, %v3852
        %v3871 = vadd.f32 %v3696, %v3854
        %v3872 = vadd.f32 %v3697, %v3856
        %s3873 = sadd.s32 %s3574, 7
        %s3874 = sld [smem:[#allocation23 + %s3873]]
        %v3875 = vstv %s3874
        %v3876 = vmul.f32 %v3875, %v3812
        %v3877 = vmul.f32 %v3875, %v3813
        %v3878 = vmul.f32 %v3875, %v3633
        %v3879 = vmul.f32 %v3875, %v3634
        %v3880 = vmul.f32 %v3875, %v3635
        %v3881 = vmul.f32 %v3875, %v3636
        %v3882 = vmul.f32 %v3875, %v3637
        %v3883 = vmul.f32 %v3875, %v3638
        %v3884 = vmul.f32 %v3875, %v3814
        %v3885 = vmul.f32 %v3875, %v3815
        %v3896 = vrot.slane %v3876, 2
        %v3897 = vrot.slane %v3878, 2
        %v3898 = vsel %vm3475, %v3896, %v3897
        %v3899 = vrot.slane %v3877, 2
        %v3900 = vrot.slane %v3879, 2
        %v3901 = vsel %vm3475, %v3899, %v3900
        %v3902 = vrot.slane %v3880, 2
        %v3903 = vsel %vm3475, %v3897, %v3902
        %v3904 = vrot.slane %v3881, 2
        %v3905 = vsel %vm3475, %v3900, %v3904
        %v3906 = vrot.slane %v3882, 2
        %v3907 = vsel %vm3475, %v3902, %v3906
        %v3908 = vrot.slane %v3883, 2
        %v3909 = vsel %vm3475, %v3904, %v3908
        %v3910 = vrot.slane %v3884, 2
        %v3911 = vsel %vm3475, %v3906, %v3910
        %v3912 = vrot.slane %v3885, 2
        %v3913 = vsel %vm3475, %v3908, %v3912
        %v3922 = vadd.f32 %v3747, %v3898
        %v3923 = vadd.f32 %v3748, %v3901
        %v3924 = vadd.f32 %v3749, %v3903
        %v3925 = vadd.f32 %v3750, %v3905
        %v3926 = vadd.f32 %v3751, %v3907
        %v3927 = vadd.f32 %v3752, %v3909
        %v3928 = vadd.f32 %v3753, %v3911
        %v3929 = vadd.f32 %v3754, %v3913
        %s3930 = sadd.s32 %s3574, 8
        %s3931 = sld [smem:[#allocation23 + %s3930]]
        %v3932 = vstv %s3931
        %v3933 = vmul.f32 %v3932, %v3812
        %v3934 = vmul.f32 %v3932, %v3813
        %v3935 = vmul.f32 %v3932, %v3633
        %v3936 = vmul.f32 %v3932, %v3634
        %v3937 = vmul.f32 %v3932, %v3635
        %v3938 = vmul.f32 %v3932, %v3636
        %v3939 = vmul.f32 %v3932, %v3637
        %v3940 = vmul.f32 %v3932, %v3638
        %v3941 = vmul.f32 %v3932, %v3814
        %v3942 = vmul.f32 %v3932, %v3815
        %v3953 = vrot.slane %v3933, 2
        %v3954 = vrot.slane %v3935, 2
        %v3955 = vsel %vm3475, %v3953, %v3954
        %v3956 = vrot.slane %v3934, 2
        %v3957 = vrot.slane %v3936, 2
        %v3958 = vsel %vm3475, %v3956, %v3957
        %v3959 = vrot.slane %v3937, 2
        %v3960 = vsel %vm3475, %v3954, %v3959
        %v3961 = vrot.slane %v3938, 2
        %v3962 = vsel %vm3475, %v3957, %v3961
        %v3963 = vrot.slane %v3939, 2
        %v3964 = vsel %vm3475, %v3959, %v3963
        %v3965 = vrot.slane %v3940, 2
        %v3966 = vsel %vm3475, %v3961, %v3965
        %v3967 = vrot.slane %v3941, 2
        %v3968 = vsel %vm3475, %v3963, %v3967
        %v3969 = vrot.slane %v3942, 2
        %v3970 = vsel %vm3475, %v3965, %v3969
        %v3979 = vadd.f32 %v3804, %v3955
        %v3980 = vadd.f32 %v3805, %v3958
        %v3981 = vadd.f32 %v3806, %v3960
        %v3982 = vadd.f32 %v3807, %v3962
        %v3983 = vadd.f32 %v3808, %v3964
        %v3984 = vadd.f32 %v3809, %v3966
        %v3985 = vadd.f32 %v3810, %v3968
        %v3986 = vadd.f32 %v3811, %v3970
        %s3987 = sadd.s32 %s3385, 1
        %v3988 = vld [vmem:[#allocation4 + $0x30] sm:$0xff]
        %v3989 = vld [vmem:[#allocation4 + $0x38] sm:$0xff]
        %v3990 = vld [vmem:[#allocation4 + $0xf0] sm:$0xff]
        %v3991 = vld [vmem:[#allocation4 + $0xf8] sm:$0xff]
        %v3992 = vld [vmem:[#allocation4 + $0x1b0] sm:$0xff]
        %v3993 = vld [vmem:[#allocation4 + $0x1b8] sm:$0xff]
        %v3994 = vld [vmem:[#allocation4 + $0x270] sm:$0xff]
        %v3995 = vld [vmem:[#allocation4 + $0x278] sm:$0xff]
        %v3996 = vld [vmem:[#allocation4 + $0x330] sm:$0x3]
        %v3997 = vld [vmem:[#allocation4 + $0x338] sm:$0x3]
        %v3998 = vld [vmem:[#allocation4 + $0x40] sm:$0xfe]
        %v3999 = vld [vmem:[#allocation4 + $0x48] sm:$0xfe]
        %v4000 = vld [vmem:[#allocation4 + $0x100] sm:$0xff]
        %v4001 = vld [vmem:[#allocation4 + $0x108] sm:$0xff]
        %v4002 = vld [vmem:[#allocation4 + $0x1c0] sm:$0xff]
        %v4003 = vld [vmem:[#allocation4 + $0x1c8] sm:$0xff]
        %v4004 = vld [vmem:[#allocation4 + $0x280] sm:$0xff]
        %v4005 = vld [vmem:[#allocation4 + $0x288] sm:$0xff]
        %v4006 = vld [vmem:[#allocation4 + $0x340] sm:$0x7]
        %v4007 = vld [vmem:[#allocation4 + $0x348] sm:$0x7]
        %v4018 = vrot.slane %v3998, 1
        %v4019 = vrot.slane %v4000, 1
        %v4020 = vsel %vm3416, %v4018, %v4019
        %v4021 = vrot.slane %v3999, 1
        %v4022 = vrot.slane %v4001, 1
        %v4023 = vsel %vm3416, %v4021, %v4022
        %v4024 = vrot.slane %v4002, 1
        %v4025 = vsel %vm3416, %v4019, %v4024
        %v4026 = vrot.slane %v4003, 1
        %v4027 = vsel %vm3416, %v4022, %v4026
        %v4028 = vrot.slane %v4004, 1
        %v4029 = vsel %vm3416, %v4024, %v4028
        %v4030 = vrot.slane %v4005, 1
        %v4031 = vsel %vm3416, %v4026, %v4030
        %v4032 = vrot.slane %v4006, 1
        %v4033 = vsel %vm3416, %v4028, %v4032
        %v4034 = vrot.slane %v4007, 1
        %v4035 = vsel %vm3416, %v4030, %v4034
        %v4046 = vadd.f32 %v3988, %v4020
        %v4047 = vadd.f32 %v3989, %v4023
        %v4048 = vadd.f32 %v3990, %v4025
        %v4049 = vadd.f32 %v3991, %v4027
        %v4050 = vadd.f32 %v3992, %v4029
        %v4051 = vadd.f32 %v3993, %v4031
        %v4052 = vadd.f32 %v3994, %v4033
        %v4053 = vadd.f32 %v3995, %v4035
        %v4054 = vadd.f32 %v3996, %v4032
        %v4055 = vadd.f32 %v3997, %v4034
        %v4056 = vld [vmem:[#allocation4 + $0x50] sm:$0xfc]
        %v4057 = vld [vmem:[#allocation4 + $0x58] sm:$0xfc]
        %v4058 = vld [vmem:[#allocation4 + $0x110] sm:$0xff]
        %v4059 = vld [vmem:[#allocation4 + $0x118] sm:$0xff]
        %v4060 = vld [vmem:[#allocation4 + $0x1d0] sm:$0xff]
        %v4061 = vld [vmem:[#allocation4 + $0x1d8] sm:$0xff]
        %v4062 = vld [vmem:[#allocation4 + $0x290] sm:$0xff]
        %v4063 = vld [vmem:[#allocation4 + $0x298] sm:$0xff]
        %v4064 = vld [vmem:[#allocation4 + $0x350] sm:$0xf]
        %v4065 = vld [vmem:[#allocation4 + $0x358] sm:$0xf]
        %v4076 = vrot.slane %v4056, 2
        %v4077 = vrot.slane %v4058, 2
        %v4078 = vsel %vm3475, %v4076, %v4077
        %v4079 = vrot.slane %v4057, 2
        %v4080 = vrot.slane %v4059, 2
        %v4081 = vsel %vm3475, %v4079, %v4080
        %v4082 = vrot.slane %v4060, 2
        %v4083 = vsel %vm3475, %v4077, %v4082
        %v4084 = vrot.slane %v4061, 2
        %v4085 = vsel %vm3475, %v4080, %v4084
        %v4086 = vrot.slane %v4062, 2
        %v4087 = vsel %vm3475, %v4082, %v4086
        %v4088 = vrot.slane %v4063, 2
        %v4089 = vsel %vm3475, %v4084, %v4088
        %v4090 = vrot.slane %v4064, 2
        %v4091 = vsel %vm3475, %v4086, %v4090
        %v4092 = vrot.slane %v4065, 2
        %v4093 = vsel %vm3475, %v4088, %v4092
        %v4104 = vadd.f32 %v4046, %v4078
        %v4105 = vadd.f32 %v4047, %v4081
        %v4106 = vadd.f32 %v4048, %v4083
        %v4107 = vadd.f32 %v4049, %v4085
        %v4108 = vadd.f32 %v4050, %v4087
        %v4109 = vadd.f32 %v4051, %v4089
        %v4110 = vadd.f32 %v4052, %v4091
        %v4111 = vadd.f32 %v4053, %v4093
        %v4112 = vadd.f32 %v4054, %v4090
        %v4113 = vadd.f32 %v4055, %v4092
        %s4114 = sld [smem:[#allocation22 + %s3987]]
        %v4115 = vstv %s4114
        %v4116 = vadd.f32 %v4104, %v4115
        %v4117 = vadd.f32 %v4105, %v4115
        %v4118 = vadd.f32 %v4106, %v4115
        %v4119 = vadd.f32 %v4107, %v4115
        %v4120 = vadd.f32 %v4108, %v4115
        %v4121 = vadd.f32 %v4109, %v4115
        %v4122 = vadd.f32 %v4110, %v4115
        %v4123 = vadd.f32 %v4111, %v4115
        %v4124 = vadd.f32 %v4112, %v4115
        %v4125 = vadd.f32 %v4113, %v4115
        %vm4126 = vcmp.gt.f32.partialorder %v4116, 0.0
        %vm4127 = vcmp.gt.f32.partialorder %v4117, 0.0
        %vm4128 = vcmp.gt.f32.partialorder %v4118, 0.0
        %vm4129 = vcmp.gt.f32.partialorder %v4119, 0.0
        %vm4130 = vcmp.gt.f32.partialorder %v4120, 0.0
        %vm4131 = vcmp.gt.f32.partialorder %v4121, 0.0
        %vm4132 = vcmp.gt.f32.partialorder %v4122, 0.0
        %vm4133 = vcmp.gt.f32.partialorder %v4123, 0.0
        %vm4134 = vcmp.gt.f32.partialorder %v4124, 0.0
        %vm4135 = vcmp.gt.f32.partialorder %v4125, 0.0
        %v4136 = vmul.f32 %v4116, 0.2
        %v4137 = vmul.f32 %v4117, 0.2
        %v4138 = vmul.f32 %v4118, 0.2
        %v4139 = vmul.f32 %v4119, 0.2
        %v4140 = vmul.f32 %v4120, 0.2
        %v4141 = vmul.f32 %v4121, 0.2
        %v4142 = vmul.f32 %v4122, 0.2
        %v4143 = vmul.f32 %v4123, 0.2
        %v4144 = vmul.f32 %v4124, 0.2
        %v4145 = vmul.f32 %v4125, 0.2
        %v4146 = vsel %vm4126, %v4116, %v4136
        %v4147 = vsel %vm4127, %v4117, %v4137
        %v4148 = vsel %vm4128, %v4118, %v4138
        %v4149 = vsel %vm4129, %v4119, %v4139
        %v4150 = vsel %vm4130, %v4120, %v4140
        %v4151 = vsel %vm4131, %v4121, %v4141
        %v4152 = vsel %vm4132, %v4122, %v4142
        %v4153 = vsel %vm4133, %v4123, %v4143
        %v4154 = vsel %vm4134, %v4124, %v4144
        %v4155 = vsel %vm4135, %v4125, %v4145
        %4156 = vst [vmem:[#allocation5] sm:$0xff] %v4146
        %4157 = vst [vmem:[#allocation5 + $0x8] sm:$0xff] %v4147
        %4158 = vst [vmem:[#allocation5 + $0x10] sm:$0xff] %v4148
        %4159 = vst [vmem:[#allocation5 + $0x18] sm:$0xff] %v4149
        %4160 = vst [vmem:[#allocation5 + $0x20] sm:$0xff] %v4150
        %4161 = vst [vmem:[#allocation5 + $0x28] sm:$0xff] %v4151
        %4162 = vst [vmem:[#allocation5 + $0x30] sm:$0xff] %v4152
        %4163 = vst [vmem:[#allocation5 + $0x38] sm:$0xff] %v4153
        %4164 = vst [vmem:[#allocation5 + $0x40] sm:$0x3] %v4154
        %4165 = vst [vmem:[#allocation5 + $0x48] sm:$0x3] %v4155
        %v4166 = vld [vmem:[#allocation5] sm:$0xff]
        %v4167 = vld [vmem:[#allocation5 + $0x8] sm:$0xff]
        %v4168 = vld [vmem:[#allocation5 + $0x10] sm:$0xff]
        %v4169 = vld [vmem:[#allocation5 + $0x18] sm:$0xff]
        %v4170 = vld [vmem:[#allocation5 + $0x20] sm:$0xff]
        %v4171 = vld [vmem:[#allocation5 + $0x28] sm:$0xff]
        %v4172 = vld [vmem:[#allocation5 + $0x30] sm:$0xff]
        %v4173 = vld [vmem:[#allocation5 + $0x38] sm:$0xff]
        %s4174 = smul.u32 %s3987, 9
        %s4175 = sld [smem:[#allocation23 + %s4174]]
        %v4176 = vstv %s4175
        %v4177 = vmul.f32 %v4176, %v4166
        %v4178 = vmul.f32 %v4176, %v4167
        %v4179 = vmul.f32 %v4176, %v4168
        %v4180 = vmul.f32 %v4176, %v4169
        %v4181 = vmul.f32 %v4176, %v4170
        %v4182 = vmul.f32 %v4176, %v4171
        %v4183 = vmul.f32 %v4176, %v4172
        %v4184 = vmul.f32 %v4176, %v4173
        %v4185 = vadd.f32 %v3865, %v4177
        %v4186 = vadd.f32 %v3866, %v4178
        %v4187 = vadd.f32 %v3867, %v4179
        %v4188 = vadd.f32 %v3868, %v4180
        %v4189 = vadd.f32 %v3869, %v4181
        %v4190 = vadd.f32 %v3870, %v4182
        %v4191 = vadd.f32 %v3871, %v4183
        %v4192 = vadd.f32 %v3872, %v4184
        %s4193 = sadd.s32 %s4174, 1
        %s4194 = sld [smem:[#allocation23 + %s4193]]
        %v4195 = vstv %s4194
        %v4196 = vmul.f32 %v4195, %v4166
        %v4197 = vmul.f32 %v4195, %v4167
        %v4198 = vmul.f32 %v4195, %v4168
        %v4199 = vmul.f32 %v4195, %v4169
        %v4200 = vmul.f32 %v4195, %v4170
        %v4201 = vmul.f32 %v4195, %v4171
        %v4202 = vmul.f32 %v4195, %v4172
        %v4203 = vmul.f32 %v4195, %v4173
        %v4204 = vadd.f32 %v3922, %v4196
        %v4205 = vadd.f32 %v3923, %v4197
        %v4206 = vadd.f32 %v3924, %v4198
        %v4207 = vadd.f32 %v3925, %v4199
        %v4208 = vadd.f32 %v3926, %v4200
        %v4209 = vadd.f32 %v3927, %v4201
        %v4210 = vadd.f32 %v3928, %v4202
        %v4211 = vadd.f32 %v3929, %v4203
        %s4212 = sadd.s32 %s4174, 2
        %s4213 = sld [smem:[#allocation23 + %s4212]]
        %v4214 = vstv %s4213
        %v4215 = vmul.f32 %v4214, %v4166
        %v4216 = vmul.f32 %v4214, %v4167
        %v4217 = vmul.f32 %v4214, %v4168
        %v4218 = vmul.f32 %v4214, %v4169
        %v4219 = vmul.f32 %v4214, %v4170
        %v4220 = vmul.f32 %v4214, %v4171
        %v4221 = vmul.f32 %v4214, %v4172
        %v4222 = vmul.f32 %v4214, %v4173
        %v4223 = vadd.f32 %v3979, %v4215
        %v4224 = vadd.f32 %v3980, %v4216
        %v4225 = vadd.f32 %v3981, %v4217
        %v4226 = vadd.f32 %v3982, %v4218
        %v4227 = vadd.f32 %v3983, %v4219
        %v4228 = vadd.f32 %v3984, %v4220
        %v4229 = vadd.f32 %v3985, %v4221
        %v4230 = vadd.f32 %v3986, %v4222
        %v4231 = vld [vmem:[#allocation5] sm:$0xfe]
        %v4232 = vld [vmem:[#allocation5 + $0x8] sm:$0xfe]
        %v4233 = vld [vmem:[#allocation5 + $0x10] sm:$0xff]
        %v4234 = vld [vmem:[#allocation5 + $0x18] sm:$0xff]
        %v4235 = vld [vmem:[#allocation5 + $0x20] sm:$0xff]
        %v4236 = vld [vmem:[#allocation5 + $0x28] sm:$0xff]
        %v4237 = vld [vmem:[#allocation5 + $0x30] sm:$0xff]
        %v4238 = vld [vmem:[#allocation5 + $0x38] sm:$0xff]
        %v4239 = vld [vmem:[#allocation5 + $0x40] sm:$0x1]
        %v4240 = vld [vmem:[#allocation5 + $0x48] sm:$0x1]
        %s4241 = sadd.s32 %s4174, 3
        %s4242 = sld [smem:[#allocation23 + %s4241]]
        %v4243 = vstv %s4242
        %v4244 = vmul.f32 %v4243, %v4231
        %v4245 = vmul.f32 %v4243, %v4232
        %v4246 = vmul.f32 %v4243, %v4233
        %v4247 = vmul.f32 %v4243, %v4234
        %v4248 = vmul.f32 %v4243, %v4235
        %v4249 = vmul.f32 %v4243, %v4236
        %v4250 = vmul.f32 %v4243, %v4237
        %v4251 = vmul.f32 %v4243, %v4238
        %v4252 = vmul.f32 %v4243, %v4239
        %v4253 = vmul.f32 %v4243, %v4240
        %v4264 = vrot.slane %v4244, 1
        %v4265 = vrot.slane %v4246, 1
        %v4266 = vsel %vm3416, %v4264, %v4265
        %v4267 = vrot.slane %v4245, 1
        %v4268 = vrot.slane %v4247, 1
        %v4269 = vsel %vm3416, %v4267, %v4268
        %v4270 = vrot.slane %v4248, 1
        %v4271 = vsel %vm3416, %v4265, %v4270
        %v4272 = vrot.slane %v4249, 1
        %v4273 = vsel %vm3416, %v4268, %v4272
        %v4274 = vrot.slane %v4250, 1
        %v4275 = vsel %vm3416, %v4270, %v4274
        %v4276 = vrot.slane %v4251, 1
        %v4277 = vsel %vm3416, %v4272, %v4276
        %v4278 = vrot.slane %v4252, 1
        %v4279 = vsel %vm3416, %v4274, %v4278
        %v4280 = vrot.slane %v4253, 1
        %v4281 = vsel %vm3416, %v4276, %v4280
        %v4290 = vadd.f32 %v4185, %v4266
        %v4291 = vadd.f32 %v4186, %v4269
        %v4292 = vadd.f32 %v4187, %v4271
        %v4293 = vadd.f32 %v4188, %v4273
        %v4294 = vadd.f32 %v4189, %v4275
        %v4295 = vadd.f32 %v4190, %v4277
        %v4296 = vadd.f32 %v4191, %v4279
        %v4297 = vadd.f32 %v4192, %v4281
        %s4298 = sadd.s32 %s4174, 4
        %s4299 = sld [smem:[#allocation23 + %s4298]]
        %v4300 = vstv %s4299
        %v4301 = vmul.f32 %v4300, %v4231
        %v4302 = vmul.f32 %v4300, %v4232
        %v4303 = vmul.f32 %v4300, %v4233
        %v4304 = vmul.f32 %v4300, %v4234
        %v4305 = vmul.f32 %v4300, %v4235
        %v4306 = vmul.f32 %v4300, %v4236
        %v4307 = vmul.f32 %v4300, %v4237
        %v4308 = vmul.f32 %v4300, %v4238
        %v4309 = vmul.f32 %v4300, %v4239
        %v4310 = vmul.f32 %v4300, %v4240
        %v4321 = vrot.slane %v4301, 1
        %v4322 = vrot.slane %v4303, 1
        %v4323 = vsel %vm3416, %v4321, %v4322
        %v4324 = vrot.slane %v4302, 1
        %v4325 = vrot.slane %v4304, 1
        %v4326 = vsel %vm3416, %v4324, %v4325
        %v4327 = vrot.slane %v4305, 1
        %v4328 = vsel %vm3416, %v4322, %v4327
        %v4329 = vrot.slane %v4306, 1
        %v4330 = vsel %vm3416, %v4325, %v4329
        %v4331 = vrot.slane %v4307, 1
        %v4332 = vsel %vm3416, %v4327, %v4331
        %v4333 = vrot.slane %v4308, 1
        %v4334 = vsel %vm3416, %v4329, %v4333
        %v4335 = vrot.slane %v4309, 1
        %v4336 = vsel %vm3416, %v4331, %v4335
        %v4337 = vrot.slane %v4310, 1
        %v4338 = vsel %vm3416, %v4333, %v4337
        %v4347 = vadd.f32 %v4204, %v4323
        %v4348 = vadd.f32 %v4205, %v4326
        %v4349 = vadd.f32 %v4206, %v4328
        %v4350 = vadd.f32 %v4207, %v4330
        %v4351 = vadd.f32 %v4208, %v4332
        %v4352 = vadd.f32 %v4209, %v4334
        %v4353 = vadd.f32 %v4210, %v4336
        %v4354 = vadd.f32 %v4211, %v4338
        %s4355 = sadd.s32 %s4174, 5
        %s4356 = sld [smem:[#allocation23 + %s4355]]
        %v4357 = vstv %s4356
        %v4358 = vmul.f32 %v4357, %v4231
        %v4359 = vmul.f32 %v4357, %v4232
        %v4360 = vmul.f32 %v4357, %v4233
        %v4361 = vmul.f32 %v4357, %v4234
        %v4362 = vmul.f32 %v4357, %v4235
        %v4363 = vmul.f32 %v4357, %v4236
        %v4364 = vmul.f32 %v4357, %v4237
        %v4365 = vmul.f32 %v4357, %v4238
        %v4366 = vmul.f32 %v4357, %v4239
        %v4367 = vmul.f32 %v4357, %v4240
        %v4378 = vrot.slane %v4358, 1
        %v4379 = vrot.slane %v4360, 1
        %v4380 = vsel %vm3416, %v4378, %v4379
        %v4381 = vrot.slane %v4359, 1
        %v4382 = vrot.slane %v4361, 1
        %v4383 = vsel %vm3416, %v4381, %v4382
        %v4384 = vrot.slane %v4362, 1
        %v4385 = vsel %vm3416, %v4379, %v4384
        %v4386 = vrot.slane %v4363, 1
        %v4387 = vsel %vm3416, %v4382, %v4386
        %v4388 = vrot.slane %v4364, 1
        %v4389 = vsel %vm3416, %v4384, %v4388
        %v4390 = vrot.slane %v4365, 1
        %v4391 = vsel %vm3416, %v4386, %v4390
        %v4392 = vrot.slane %v4366, 1
        %v4393 = vsel %vm3416, %v4388, %v4392
        %v4394 = vrot.slane %v4367, 1
        %v4395 = vsel %vm3416, %v4390, %v4394
        %v4404 = vadd.f32 %v4223, %v4380
        %v4405 = vadd.f32 %v4224, %v4383
        %v4406 = vadd.f32 %v4225, %v4385
        %v4407 = vadd.f32 %v4226, %v4387
        %v4408 = vadd.f32 %v4227, %v4389
        %v4409 = vadd.f32 %v4228, %v4391
        %v4410 = vadd.f32 %v4229, %v4393
        %v4411 = vadd.f32 %v4230, %v4395
        %v4412 = vld [vmem:[#allocation5] sm:$0xfc]
        %v4413 = vld [vmem:[#allocation5 + $0x8] sm:$0xfc]
        %v4414 = vld [vmem:[#allocation5 + $0x40] sm:$0x3]
        %v4415 = vld [vmem:[#allocation5 + $0x48] sm:$0x3]
        %s4416 = sadd.s32 %s4174, 6
        %s4417 = sld [smem:[#allocation23 + %s4416]]
        %v4418 = vstv %s4417
        %v4419 = vmul.f32 %v4418, %v4412
        %v4420 = vmul.f32 %v4418, %v4413
        %v4421 = vmul.f32 %v4418, %v4233
        %v4422 = vmul.f32 %v4418, %v4234
        %v4423 = vmul.f32 %v4418, %v4235
        %v4424 = vmul.f32 %v4418, %v4236
        %v4425 = vmul.f32 %v4418, %v4237
        %v4426 = vmul.f32 %v4418, %v4238
        %v4427 = vmul.f32 %v4418, %v4414
        %v4428 = vmul.f32 %v4418, %v4415
        %v4439 = vrot.slane %v4419, 2
        %v4440 = vrot.slane %v4421, 2
        %v4441 = vsel %vm3475, %v4439, %v4440
        %v4442 = vrot.slane %v4420, 2
        %v4443 = vrot.slane %v4422, 2
        %v4444 = vsel %vm3475, %v4442, %v4443
        %v4445 = vrot.slane %v4423, 2
        %v4446 = vsel %vm3475, %v4440, %v4445
        %v4447 = vrot.slane %v4424, 2
        %v4448 = vsel %vm3475, %v4443, %v4447
        %v4449 = vrot.slane %v4425, 2
        %v4450 = vsel %vm3475, %v4445, %v4449
        %v4451 = vrot.slane %v4426, 2
        %v4452 = vsel %vm3475, %v4447, %v4451
        %v4453 = vrot.slane %v4427, 2
        %v4454 = vsel %vm3475, %v4449, %v4453
        %v4455 = vrot.slane %v4428, 2
        %v4456 = vsel %vm3475, %v4451, %v4455
        %v4465 = vadd.f32 %v4290, %v4441
        %v4466 = vadd.f32 %v4291, %v4444
        %v4467 = vadd.f32 %v4292, %v4446
        %v4468 = vadd.f32 %v4293, %v4448
        %v4469 = vadd.f32 %v4294, %v4450
        %v4470 = vadd.f32 %v4295, %v4452
        %v4471 = vadd.f32 %v4296, %v4454
        %v4472 = vadd.f32 %v4297, %v4456
        %s4473 = sadd.s32 %s4174, 7
        %s4474 = sld [smem:[#allocation23 + %s4473]]
        %v4475 = vstv %s4474
        %v4476 = vmul.f32 %v4475, %v4412
        %v4477 = vmul.f32 %v4475, %v4413
        %v4478 = vmul.f32 %v4475, %v4233
        %v4479 = vmul.f32 %v4475, %v4234
        %v4480 = vmul.f32 %v4475, %v4235
        %v4481 = vmul.f32 %v4475, %v4236
        %v4482 = vmul.f32 %v4475, %v4237
        %v4483 = vmul.f32 %v4475, %v4238
        %v4484 = vmul.f32 %v4475, %v4414
        %v4485 = vmul.f32 %v4475, %v4415
        %v4496 = vrot.slane %v4476, 2
        %v4497 = vrot.slane %v4478, 2
        %v4498 = vsel %vm3475, %v4496, %v4497
        %v4499 = vrot.slane %v4477, 2
        %v4500 = vrot.slane %v4479, 2
        %v4501 = vsel %vm3475, %v4499, %v4500
        %v4502 = vrot.slane %v4480, 2
        %v4503 = vsel %vm3475, %v4497, %v4502
        %v4504 = vrot.slane %v4481, 2
        %v4505 = vsel %vm3475, %v4500, %v4504
        %v4506 = vrot.slane %v4482, 2
        %v4507 = vsel %vm3475, %v4502, %v4506
        %v4508 = vrot.slane %v4483, 2
        %v4509 = vsel %vm3475, %v4504, %v4508
        %v4510 = vrot.slane %v4484, 2
        %v4511 = vsel %vm3475, %v4506, %v4510
        %v4512 = vrot.slane %v4485, 2
        %v4513 = vsel %vm3475, %v4508, %v4512
        %v4522 = vadd.f32 %v4347, %v4498
        %v4523 = vadd.f32 %v4348, %v4501
        %v4524 = vadd.f32 %v4349, %v4503
        %v4525 = vadd.f32 %v4350, %v4505
        %v4526 = vadd.f32 %v4351, %v4507
        %v4527 = vadd.f32 %v4352, %v4509
        %v4528 = vadd.f32 %v4353, %v4511
        %v4529 = vadd.f32 %v4354, %v4513
        %s4530 = sadd.s32 %s4174, 8
        %s4531 = sld [smem:[#allocation23 + %s4530]]
        %v4532 = vstv %s4531
        %v4533 = vmul.f32 %v4532, %v4412
        %v4534 = vmul.f32 %v4532, %v4413
        %v4535 = vmul.f32 %v4532, %v4233
        %v4536 = vmul.f32 %v4532, %v4234
        %v4537 = vmul.f32 %v4532, %v4235
        %v4538 = vmul.f32 %v4532, %v4236
        %v4539 = vmul.f32 %v4532, %v4237
        %v4540 = vmul.f32 %v4532, %v4238
        %v4541 = vmul.f32 %v4532, %v4414
        %v4542 = vmul.f32 %v4532, %v4415
        %v4553 = vrot.slane %v4533, 2
        %v4554 = vrot.slane %v4535, 2
        %v4555 = vsel %vm3475, %v4553, %v4554
        %v4556 = vrot.slane %v4534, 2
        %v4557 = vrot.slane %v4536, 2
        %v4558 = vsel %vm3475, %v4556, %v4557
        %v4559 = vrot.slane %v4537, 2
        %v4560 = vsel %vm3475, %v4554, %v4559
        %v4561 = vrot.slane %v4538, 2
        %v4562 = vsel %vm3475, %v4557, %v4561
        %v4563 = vrot.slane %v4539, 2
        %v4564 = vsel %vm3475, %v4559, %v4563
        %v4565 = vrot.slane %v4540, 2
        %v4566 = vsel %vm3475, %v4561, %v4565
        %v4567 = vrot.slane %v4541, 2
        %v4568 = vsel %vm3475, %v4563, %v4567
        %v4569 = vrot.slane %v4542, 2
        %v4570 = vsel %vm3475, %v4565, %v4569
        %v4579 = vadd.f32 %v4404, %v4555
        %v4580 = vadd.f32 %v4405, %v4558
        %v4581 = vadd.f32 %v4406, %v4560
        %v4582 = vadd.f32 %v4407, %v4562
        %v4583 = vadd.f32 %v4408, %v4564
        %v4584 = vadd.f32 %v4409, %v4566
        %v4585 = vadd.f32 %v4410, %v4568
        %v4586 = vadd.f32 %v4411, %v4570
        %s4587 = sadd.s32 %s3385, 2
        %v4588 = vld [vmem:[#allocation4 + $0x60] sm:$0xff]
        %v4589 = vld [vmem:[#allocation4 + $0x68] sm:$0xff]
        %v4590 = vld [vmem:[#allocation4 + $0x120] sm:$0xff]
        %v4591 = vld [vmem:[#allocation4 + $0x128] sm:$0xff]
        %v4592 = vld [vmem:[#allocation4 + $0x1e0] sm:$0xff]
        %v4593 = vld [vmem:[#allocation4 + $0x1e8] sm:$0xff]
        %v4594 = vld [vmem:[#allocation4 + $0x2a0] sm:$0xff]
        %v4595 = vld [vmem:[#allocation4 + $0x2a8] sm:$0xff]
        %v4596 = vld [vmem:[#allocation4 + $0x360] sm:$0x3]
        %v4597 = vld [vmem:[#allocation4 + $0x368] sm:$0x3]
        %v4598 = vld [vmem:[#allocation4 + $0x70] sm:$0xfe]
        %v4599 = vld [vmem:[#allocation4 + $0x78] sm:$0xfe]
        %v4600 = vld [vmem:[#allocation4 + $0x130] sm:$0xff]
        %v4601 = vld [vmem:[#allocation4 + $0x138] sm:$0xff]
        %v4602 = vld [vmem:[#allocation4 + $0x1f0] sm:$0xff]
        %v4603 = vld [vmem:[#allocation4 + $0x1f8] sm:$0xff]
        %v4604 = vld [vmem:[#allocation4 + $0x2b0] sm:$0xff]
        %v4605 = vld [vmem:[#allocation4 + $0x2b8] sm:$0xff]
        %v4606 = vld [vmem:[#allocation4 + $0x370] sm:$0x7]
        %v4607 = vld [vmem:[#allocation4 + $0x378] sm:$0x7]
        %v4618 = vrot.slane %v4598, 1
        %v4619 = vrot.slane %v4600, 1
        %v4620 = vsel %vm3416, %v4618, %v4619
        %v4621 = vrot.slane %v4599, 1
        %v4622 = vrot.slane %v4601, 1
        %v4623 = vsel %vm3416, %v4621, %v4622
        %v4624 = vrot.slane %v4602, 1
        %v4625 = vsel %vm3416, %v4619, %v4624
        %v4626 = vrot.slane %v4603, 1
        %v4627 = vsel %vm3416, %v4622, %v4626
        %v4628 = vrot.slane %v4604, 1
        %v4629 = vsel %vm3416, %v4624, %v4628
        %v4630 = vrot.slane %v4605, 1
        %v4631 = vsel %vm3416, %v4626, %v4630
        %v4632 = vrot.slane %v4606, 1
        %v4633 = vsel %vm3416, %v4628, %v4632
        %v4634 = vrot.slane %v4607, 1
        %v4635 = vsel %vm3416, %v4630, %v4634
        %v4646 = vadd.f32 %v4588, %v4620
        %v4647 = vadd.f32 %v4589, %v4623
        %v4648 = vadd.f32 %v4590, %v4625
        %v4649 = vadd.f32 %v4591, %v4627
        %v4650 = vadd.f32 %v4592, %v4629
        %v4651 = vadd.f32 %v4593, %v4631
        %v4652 = vadd.f32 %v4594, %v4633
        %v4653 = vadd.f32 %v4595, %v4635
        %v4654 = vadd.f32 %v4596, %v4632
        %v4655 = vadd.f32 %v4597, %v4634
        %v4656 = vld [vmem:[#allocation4 + $0x80] sm:$0xfc]
        %v4657 = vld [vmem:[#allocation4 + $0x88] sm:$0xfc]
        %v4658 = vld [vmem:[#allocation4 + $0x140] sm:$0xff]
        %v4659 = vld [vmem:[#allocation4 + $0x148] sm:$0xff]
        %v4660 = vld [vmem:[#allocation4 + $0x200] sm:$0xff]
        %v4661 = vld [vmem:[#allocation4 + $0x208] sm:$0xff]
        %v4662 = vld [vmem:[#allocation4 + $0x2c0] sm:$0xff]
        %v4663 = vld [vmem:[#allocation4 + $0x2c8] sm:$0xff]
        %v4664 = vld [vmem:[#allocation4 + $0x380] sm:$0xf]
        %v4665 = vld [vmem:[#allocation4 + $0x388] sm:$0xf]
        %v4676 = vrot.slane %v4656, 2
        %v4677 = vrot.slane %v4658, 2
        %v4678 = vsel %vm3475, %v4676, %v4677
        %v4679 = vrot.slane %v4657, 2
        %v4680 = vrot.slane %v4659, 2
        %v4681 = vsel %vm3475, %v4679, %v4680
        %v4682 = vrot.slane %v4660, 2
        %v4683 = vsel %vm3475, %v4677, %v4682
        %v4684 = vrot.slane %v4661, 2
        %v4685 = vsel %vm3475, %v4680, %v4684
        %v4686 = vrot.slane %v4662, 2
        %v4687 = vsel %vm3475, %v4682, %v4686
        %v4688 = vrot.slane %v4663, 2
        %v4689 = vsel %vm3475, %v4684, %v4688
        %v4690 = vrot.slane %v4664, 2
        %v4691 = vsel %vm3475, %v4686, %v4690
        %v4692 = vrot.slane %v4665, 2
        %v4693 = vsel %vm3475, %v4688, %v4692
        %v4704 = vadd.f32 %v4646, %v4678
        %v4705 = vadd.f32 %v4647, %v4681
        %v4706 = vadd.f32 %v4648, %v4683
        %v4707 = vadd.f32 %v4649, %v4685
        %v4708 = vadd.f32 %v4650, %v4687
        %v4709 = vadd.f32 %v4651, %v4689
        %v4710 = vadd.f32 %v4652, %v4691
        %v4711 = vadd.f32 %v4653, %v4693
        %v4712 = vadd.f32 %v4654, %v4690
        %v4713 = vadd.f32 %v4655, %v4692
        %s4714 = sld [smem:[#allocation22 + %s4587]]
        %v4715 = vstv %s4714
        %v4716 = vadd.f32 %v4704, %v4715
        %v4717 = vadd.f32 %v4705, %v4715
        %v4718 = vadd.f32 %v4706, %v4715
        %v4719 = vadd.f32 %v4707, %v4715
        %v4720 = vadd.f32 %v4708, %v4715
        %v4721 = vadd.f32 %v4709, %v4715
        %v4722 = vadd.f32 %v4710, %v4715
        %v4723 = vadd.f32 %v4711, %v4715
        %v4724 = vadd.f32 %v4712, %v4715
        %v4725 = vadd.f32 %v4713, %v4715
        %vm4726 = vcmp.gt.f32.partialorder %v4716, 0.0
        %vm4727 = vcmp.gt.f32.partialorder %v4717, 0.0
        %vm4728 = vcmp.gt.f32.partialorder %v4718, 0.0
        %vm4729 = vcmp.gt.f32.partialorder %v4719, 0.0
        %vm4730 = vcmp.gt.f32.partialorder %v4720, 0.0
        %vm4731 = vcmp.gt.f32.partialorder %v4721, 0.0
        %vm4732 = vcmp.gt.f32.partialorder %v4722, 0.0
        %vm4733 = vcmp.gt.f32.partialorder %v4723, 0.0
        %vm4734 = vcmp.gt.f32.partialorder %v4724, 0.0
        %vm4735 = vcmp.gt.f32.partialorder %v4725, 0.0
        %v4736 = vmul.f32 %v4716, 0.2
        %v4737 = vmul.f32 %v4717, 0.2
        %v4738 = vmul.f32 %v4718, 0.2
        %v4739 = vmul.f32 %v4719, 0.2
        %v4740 = vmul.f32 %v4720, 0.2
        %v4741 = vmul.f32 %v4721, 0.2
        %v4742 = vmul.f32 %v4722, 0.2
        %v4743 = vmul.f32 %v4723, 0.2
        %v4744 = vmul.f32 %v4724, 0.2
        %v4745 = vmul.f32 %v4725, 0.2
        %v4746 = vsel %vm4726, %v4716, %v4736
        %v4747 = vsel %vm4727, %v4717, %v4737
        %v4748 = vsel %vm4728, %v4718, %v4738
        %v4749 = vsel %vm4729, %v4719, %v4739
        %v4750 = vsel %vm4730, %v4720, %v4740
        %v4751 = vsel %vm4731, %v4721, %v4741
        %v4752 = vsel %vm4732, %v4722, %v4742
        %v4753 = vsel %vm4733, %v4723, %v4743
        %v4754 = vsel %vm4734, %v4724, %v4744
        %v4755 = vsel %vm4735, %v4725, %v4745
        %4756 = vst [vmem:[#allocation5] sm:$0xff] %v4746
        %4757 = vst [vmem:[#allocation5 + $0x8] sm:$0xff] %v4747
        %4758 = vst [vmem:[#allocation5 + $0x10] sm:$0xff] %v4748
        %4759 = vst [vmem:[#allocation5 + $0x18] sm:$0xff] %v4749
        %4760 = vst [vmem:[#allocation5 + $0x20] sm:$0xff] %v4750
        %4761 = vst [vmem:[#allocation5 + $0x28] sm:$0xff] %v4751
        %4762 = vst [vmem:[#allocation5 + $0x30] sm:$0xff] %v4752
        %4763 = vst [vmem:[#allocation5 + $0x38] sm:$0xff] %v4753
        %4764 = vst [vmem:[#allocation5 + $0x40] sm:$0x3] %v4754
        %4765 = vst [vmem:[#allocation5 + $0x48] sm:$0x3] %v4755
        %v4766 = vld [vmem:[#allocation5] sm:$0xff]
        %v4767 = vld [vmem:[#allocation5 + $0x8] sm:$0xff]
        %v4768 = vld [vmem:[#allocation5 + $0x10] sm:$0xff]
        %v4769 = vld [vmem:[#allocation5 + $0x18] sm:$0xff]
        %v4770 = vld [vmem:[#allocation5 + $0x20] sm:$0xff]
        %v4771 = vld [vmem:[#allocation5 + $0x28] sm:$0xff]
        %v4772 = vld [vmem:[#allocation5 + $0x30] sm:$0xff]
        %v4773 = vld [vmem:[#allocation5 + $0x38] sm:$0xff]
        %s4774 = smul.u32 %s4587, 9
        %s4775 = sld [smem:[#allocation23 + %s4774]]
        %v4776 = vstv %s4775
        %v4777 = vmul.f32 %v4776, %v4766
        %v4778 = vmul.f32 %v4776, %v4767
        %v4779 = vmul.f32 %v4776, %v4768
        %v4780 = vmul.f32 %v4776, %v4769
        %v4781 = vmul.f32 %v4776, %v4770
        %v4782 = vmul.f32 %v4776, %v4771
        %v4783 = vmul.f32 %v4776, %v4772
        %v4784 = vmul.f32 %v4776, %v4773
        %v4785 = vadd.f32 %v4465, %v4777
        %v4786 = vadd.f32 %v4466, %v4778
        %v4787 = vadd.f32 %v4467, %v4779
        %v4788 = vadd.f32 %v4468, %v4780
        %v4789 = vadd.f32 %v4469, %v4781
        %v4790 = vadd.f32 %v4470, %v4782
        %v4791 = vadd.f32 %v4471, %v4783
        %v4792 = vadd.f32 %v4472, %v4784
        %s4793 = sadd.s32 %s4774, 1
        %s4794 = sld [smem:[#allocation23 + %s4793]]
        %v4795 = vstv %s4794
        %v4796 = vmul.f32 %v4795, %v4766
        %v4797 = vmul.f32 %v4795, %v4767
        %v4798 = vmul.f32 %v4795, %v4768
        %v4799 = vmul.f32 %v4795, %v4769
        %v4800 = vmul.f32 %v4795, %v4770
        %v4801 = vmul.f32 %v4795, %v4771
        %v4802 = vmul.f32 %v4795, %v4772
        %v4803 = vmul.f32 %v4795, %v4773
        %v4804 = vadd.f32 %v4522, %v4796
        %v4805 = vadd.f32 %v4523, %v4797
        %v4806 = vadd.f32 %v4524, %v4798
        %v4807 = vadd.f32 %v4525, %v4799
        %v4808 = vadd.f32 %v4526, %v4800
        %v4809 = vadd.f32 %v4527, %v4801
        %v4810 = vadd.f32 %v4528, %v4802
        %v4811 = vadd.f32 %v4529, %v4803
        %s4812 = sadd.s32 %s4774, 2
        %s4813 = sld [smem:[#allocation23 + %s4812]]
        %v4814 = vstv %s4813
        %v4815 = vmul.f32 %v4814, %v4766
        %v4816 = vmul.f32 %v4814, %v4767
        %v4817 = vmul.f32 %v4814, %v4768
        %v4818 = vmul.f32 %v4814, %v4769
        %v4819 = vmul.f32 %v4814, %v4770
        %v4820 = vmul.f32 %v4814, %v4771
        %v4821 = vmul.f32 %v4814, %v4772
        %v4822 = vmul.f32 %v4814, %v4773
        %v4823 = vadd.f32 %v4579, %v4815
        %v4824 = vadd.f32 %v4580, %v4816
        %v4825 = vadd.f32 %v4581, %v4817
        %v4826 = vadd.f32 %v4582, %v4818
        %v4827 = vadd.f32 %v4583, %v4819
        %v4828 = vadd.f32 %v4584, %v4820
        %v4829 = vadd.f32 %v4585, %v4821
        %v4830 = vadd.f32 %v4586, %v4822
        %v4831 = vld [vmem:[#allocation5] sm:$0xfe]
        %v4832 = vld [vmem:[#allocation5 + $0x8] sm:$0xfe]
        %v4833 = vld [vmem:[#allocation5 + $0x10] sm:$0xff]
        %v4834 = vld [vmem:[#allocation5 + $0x18] sm:$0xff]
        %v4835 = vld [vmem:[#allocation5 + $0x20] sm:$0xff]
        %v4836 = vld [vmem:[#allocation5 + $0x28] sm:$0xff]
        %v4837 = vld [vmem:[#allocation5 + $0x30] sm:$0xff]
        %v4838 = vld [vmem:[#allocation5 + $0x38] sm:$0xff]
        %v4839 = vld [vmem:[#allocation5 + $0x40] sm:$0x1]
        %v4840 = vld [vmem:[#allocation5 + $0x48] sm:$0x1]
        %s4841 = sadd.s32 %s4774, 3
        %s4842 = sld [smem:[#allocation23 + %s4841]]
        %v4843 = vstv %s4842
        %v4844 = vmul.f32 %v4843, %v4831
        %v4845 = vmul.f32 %v4843, %v4832
        %v4846 = vmul.f32 %v4843, %v4833
        %v4847 = vmul.f32 %v4843, %v4834
        %v4848 = vmul.f32 %v4843, %v4835
        %v4849 = vmul.f32 %v4843, %v4836
        %v4850 = vmul.f32 %v4843, %v4837
        %v4851 = vmul.f32 %v4843, %v4838
        %v4852 = vmul.f32 %v4843, %v4839
        %v4853 = vmul.f32 %v4843, %v4840
        %v4864 = vrot.slane %v4844, 1
        %v4865 = vrot.slane %v4846, 1
        %v4866 = vsel %vm3416, %v4864, %v4865
        %v4867 = vrot.slane %v4845, 1
        %v4868 = vrot.slane %v4847, 1
        %v4869 = vsel %vm3416, %v4867, %v4868
        %v4870 = vrot.slane %v4848, 1
        %v4871 = vsel %vm3416, %v4865, %v4870
        %v4872 = vrot.slane %v4849, 1
        %v4873 = vsel %vm3416, %v4868, %v4872
        %v4874 = vrot.slane %v4850, 1
        %v4875 = vsel %vm3416, %v4870, %v4874
        %v4876 = vrot.slane %v4851, 1
        %v4877 = vsel %vm3416, %v4872, %v4876
        %v4878 = vrot.slane %v4852, 1
        %v4879 = vsel %vm3416, %v4874, %v4878
        %v4880 = vrot.slane %v4853, 1
        %v4881 = vsel %vm3416, %v4876, %v4880
        %v4890 = vadd.f32 %v4785, %v4866
        %v4891 = vadd.f32 %v4786, %v4869
        %v4892 = vadd.f32 %v4787, %v4871
        %v4893 = vadd.f32 %v4788, %v4873
        %v4894 = vadd.f32 %v4789, %v4875
        %v4895 = vadd.f32 %v4790, %v4877
        %v4896 = vadd.f32 %v4791, %v4879
        %v4897 = vadd.f32 %v4792, %v4881
        %s4898 = sadd.s32 %s4774, 4
        %s4899 = sld [smem:[#allocation23 + %s4898]]
        %v4900 = vstv %s4899
        %v4901 = vmul.f32 %v4900, %v4831
        %v4902 = vmul.f32 %v4900, %v4832
        %v4903 = vmul.f32 %v4900, %v4833
        %v4904 = vmul.f32 %v4900, %v4834
        %v4905 = vmul.f32 %v4900, %v4835
        %v4906 = vmul.f32 %v4900, %v4836
        %v4907 = vmul.f32 %v4900, %v4837
        %v4908 = vmul.f32 %v4900, %v4838
        %v4909 = vmul.f32 %v4900, %v4839
        %v4910 = vmul.f32 %v4900, %v4840
        %v4921 = vrot.slane %v4901, 1
        %v4922 = vrot.slane %v4903, 1
        %v4923 = vsel %vm3416, %v4921, %v4922
        %v4924 = vrot.slane %v4902, 1
        %v4925 = vrot.slane %v4904, 1
        %v4926 = vsel %vm3416, %v4924, %v4925
        %v4927 = vrot.slane %v4905, 1
        %v4928 = vsel %vm3416, %v4922, %v4927
        %v4929 = vrot.slane %v4906, 1
        %v4930 = vsel %vm3416, %v4925, %v4929
        %v4931 = vrot.slane %v4907, 1
        %v4932 = vsel %vm3416, %v4927, %v4931
        %v4933 = vrot.slane %v4908, 1
        %v4934 = vsel %vm3416, %v4929, %v4933
        %v4935 = vrot.slane %v4909, 1
        %v4936 = vsel %vm3416, %v4931, %v4935
        %v4937 = vrot.slane %v4910, 1
        %v4938 = vsel %vm3416, %v4933, %v4937
        %v4947 = vadd.f32 %v4804, %v4923
        %v4948 = vadd.f32 %v4805, %v4926
        %v4949 = vadd.f32 %v4806, %v4928
        %v4950 = vadd.f32 %v4807, %v4930
        %v4951 = vadd.f32 %v4808, %v4932
        %v4952 = vadd.f32 %v4809, %v4934
        %v4953 = vadd.f32 %v4810, %v4936
        %v4954 = vadd.f32 %v4811, %v4938
        %s4955 = sadd.s32 %s4774, 5
        %s4956 = sld [smem:[#allocation23 + %s4955]]
        %v4957 = vstv %s4956
        %v4958 = vmul.f32 %v4957, %v4831
        %v4959 = vmul.f32 %v4957, %v4832
        %v4960 = vmul.f32 %v4957, %v4833
        %v4961 = vmul.f32 %v4957, %v4834
        %v4962 = vmul.f32 %v4957, %v4835
        %v4963 = vmul.f32 %v4957, %v4836
        %v4964 = vmul.f32 %v4957, %v4837
        %v4965 = vmul.f32 %v4957, %v4838
        %v4966 = vmul.f32 %v4957, %v4839
        %v4967 = vmul.f32 %v4957, %v4840
        %v4978 = vrot.slane %v4958, 1
        %v4979 = vrot.slane %v4960, 1
        %v4980 = vsel %vm3416, %v4978, %v4979
        %v4981 = vrot.slane %v4959, 1
        %v4982 = vrot.slane %v4961, 1
        %v4983 = vsel %vm3416, %v4981, %v4982
        %v4984 = vrot.slane %v4962, 1
        %v4985 = vsel %vm3416, %v4979, %v4984
        %v4986 = vrot.slane %v4963, 1
        %v4987 = vsel %vm3416, %v4982, %v4986
        %v4988 = vrot.slane %v4964, 1
        %v4989 = vsel %vm3416, %v4984, %v4988
        %v4990 = vrot.slane %v4965, 1
        %v4991 = vsel %vm3416, %v4986, %v4990
        %v4992 = vrot.slane %v4966, 1
        %v4993 = vsel %vm3416, %v4988, %v4992
        %v4994 = vrot.slane %v4967, 1
        %v4995 = vsel %vm3416, %v4990, %v4994
        %v5004 = vadd.f32 %v4823, %v4980
        %v5005 = vadd.f32 %v4824, %v4983
        %v5006 = vadd.f32 %v4825, %v4985
        %v5007 = vadd.f32 %v4826, %v4987
        %v5008 = vadd.f32 %v4827, %v4989
        %v5009 = vadd.f32 %v4828, %v4991
        %v5010 = vadd.f32 %v4829, %v4993
        %v5011 = vadd.f32 %v4830, %v4995
        %v5012 = vld [vmem:[#allocation5] sm:$0xfc]
        %v5013 = vld [vmem:[#allocation5 + $0x8] sm:$0xfc]
        %v5014 = vld [vmem:[#allocation5 + $0x40] sm:$0x3]
        %v5015 = vld [vmem:[#allocation5 + $0x48] sm:$0x3]
        %s5016 = sadd.s32 %s4774, 6
        %s5017 = sld [smem:[#allocation23 + %s5016]]
        %v5018 = vstv %s5017
        %v5019 = vmul.f32 %v5018, %v5012
        %v5020 = vmul.f32 %v5018, %v5013
        %v5021 = vmul.f32 %v5018, %v4833
        %v5022 = vmul.f32 %v5018, %v4834
        %v5023 = vmul.f32 %v5018, %v4835
        %v5024 = vmul.f32 %v5018, %v4836
        %v5025 = vmul.f32 %v5018, %v4837
        %v5026 = vmul.f32 %v5018, %v4838
        %v5027 = vmul.f32 %v5018, %v5014
        %v5028 = vmul.f32 %v5018, %v5015
        %v5039 = vrot.slane %v5019, 2
        %v5040 = vrot.slane %v5021, 2
        %v5041 = vsel %vm3475, %v5039, %v5040
        %v5042 = vrot.slane %v5020, 2
        %v5043 = vrot.slane %v5022, 2
        %v5044 = vsel %vm3475, %v5042, %v5043
        %v5045 = vrot.slane %v5023, 2
        %v5046 = vsel %vm3475, %v5040, %v5045
        %v5047 = vrot.slane %v5024, 2
        %v5048 = vsel %vm3475, %v5043, %v5047
        %v5049 = vrot.slane %v5025, 2
        %v5050 = vsel %vm3475, %v5045, %v5049
        %v5051 = vrot.slane %v5026, 2
        %v5052 = vsel %vm3475, %v5047, %v5051
        %v5053 = vrot.slane %v5027, 2
        %v5054 = vsel %vm3475, %v5049, %v5053
        %v5055 = vrot.slane %v5028, 2
        %v5056 = vsel %vm3475, %v5051, %v5055
        %v5065 = vadd.f32 %v4890, %v5041
        %v5066 = vadd.f32 %v4891, %v5044
        %v5067 = vadd.f32 %v4892, %v5046
        %v5068 = vadd.f32 %v4893, %v5048
        %v5069 = vadd.f32 %v4894, %v5050
        %v5070 = vadd.f32 %v4895, %v5052
        %v5071 = vadd.f32 %v4896, %v5054
        %v5072 = vadd.f32 %v4897, %v5056
        %s5073 = sadd.s32 %s4774, 7
        %s5074 = sld [smem:[#allocation23 + %s5073]]
        %v5075 = vstv %s5074
        %v5076 = vmul.f32 %v5075, %v5012
        %v5077 = vmul.f32 %v5075, %v5013
        %v5078 = vmul.f32 %v5075, %v4833
        %v5079 = vmul.f32 %v5075, %v4834
        %v5080 = vmul.f32 %v5075, %v4835
        %v5081 = vmul.f32 %v5075, %v4836
        %v5082 = vmul.f32 %v5075, %v4837
        %v5083 = vmul.f32 %v5075, %v4838
        %v5084 = vmul.f32 %v5075, %v5014
        %v5085 = vmul.f32 %v5075, %v5015
        %v5096 = vrot.slane %v5076, 2
        %v5097 = vrot.slane %v5078, 2
        %v5098 = vsel %vm3475, %v5096, %v5097
        %v5099 = vrot.slane %v5077, 2
        %v5100 = vrot.slane %v5079, 2
        %v5101 = vsel %vm3475, %v5099, %v5100
        %v5102 = vrot.slane %v5080, 2
        %v5103 = vsel %vm3475, %v5097, %v5102
        %v5104 = vrot.slane %v5081, 2
        %v5105 = vsel %vm3475, %v5100, %v5104
        %v5106 = vrot.slane %v5082, 2
        %v5107 = vsel %vm3475, %v5102, %v5106
        %v5108 = vrot.slane %v5083, 2
        %v5109 = vsel %vm3475, %v5104, %v5108
        %v5110 = vrot.slane %v5084, 2
        %v5111 = vsel %vm3475, %v5106, %v5110
        %v5112 = vrot.slane %v5085, 2
        %v5113 = vsel %vm3475, %v5108, %v5112
        %v5122 = vadd.f32 %v4947, %v5098
        %v5123 = vadd.f32 %v4948, %v5101
        %v5124 = vadd.f32 %v4949, %v5103
        %v5125 = vadd.f32 %v4950, %v5105
        %v5126 = vadd.f32 %v4951, %v5107
        %v5127 = vadd.f32 %v4952, %v5109
        %v5128 = vadd.f32 %v4953, %v5111
        %v5129 = vadd.f32 %v4954, %v5113
        %s5130 = sadd.s32 %s4774, 8
        %s5131 = sld [smem:[#allocation23 + %s5130]]
        %v5132 = vstv %s5131
        %v5133 = vmul.f32 %v5132, %v5012
        %v5134 = vmul.f32 %v5132, %v5013
        %v5135 = vmul.f32 %v5132, %v4833
        %v5136 = vmul.f32 %v5132, %v4834
        %v5137 = vmul.f32 %v5132, %v4835
        %v5138 = vmul.f32 %v5132, %v4836
        %v5139 = vmul.f32 %v5132, %v4837
        %v5140 = vmul.f32 %v5132, %v4838
        %v5141 = vmul.f32 %v5132, %v5014
        %v5142 = vmul.f32 %v5132, %v5015
        %v5153 = vrot.slane %v5133, 2
        %v5154 = vrot.slane %v5135, 2
        %v5155 = vsel %vm3475, %v5153, %v5154
        %v5156 = vrot.slane %v5134, 2
        %v5157 = vrot.slane %v5136, 2
        %v5158 = vsel %vm3475, %v5156, %v5157
        %v5159 = vrot.slane %v5137, 2
        %v5160 = vsel %vm3475, %v5154, %v5159
        %v5161 = vrot.slane %v5138, 2
        %v5162 = vsel %vm3475, %v5157, %v5161
        %v5163 = vrot.slane %v5139, 2
        %v5164 = vsel %vm3475, %v5159, %v5163
        %v5165 = vrot.slane %v5140, 2
        %v5166 = vsel %vm3475, %v5161, %v5165
        %v5167 = vrot.slane %v5141, 2
        %v5168 = vsel %vm3475, %v5163, %v5167
        %v5169 = vrot.slane %v5142, 2
        %v5170 = vsel %vm3475, %v5165, %v5169
        %v5179 = vadd.f32 %v5004, %v5155
        %v5180 = vadd.f32 %v5005, %v5158
        %v5181 = vadd.f32 %v5006, %v5160
        %v5182 = vadd.f32 %v5007, %v5162
        %v5183 = vadd.f32 %v5008, %v5164
        %v5184 = vadd.f32 %v5009, %v5166
        %v5185 = vadd.f32 %v5010, %v5168
        %v5186 = vadd.f32 %v5011, %v5170
        %s5187 = sadd.s32 %s3385, 3
        %v5188 = vld [vmem:[#allocation4 + $0x90] sm:$0xff]
        %v5189 = vld [vmem:[#allocation4 + $0x98] sm:$0xff]
        %v5190 = vld [vmem:[#allocation4 + $0x150] sm:$0xff]
        %v5191 = vld [vmem:[#allocation4 + $0x158] sm:$0xff]
        %v5192 = vld [vmem:[#allocation4 + $0x210] sm:$0xff]
        %v5193 = vld [vmem:[#allocation4 + $0x218] sm:$0xff]
        %v5194 = vld [vmem:[#allocation4 + $0x2d0] sm:$0xff]
        %v5195 = vld [vmem:[#allocation4 + $0x2d8] sm:$0xff]
        %v5196 = vld [vmem:[#allocation4 + $0x390] sm:$0x3]
        %v5197 = vld [vmem:[#allocation4 + $0x398] sm:$0x3]
        %v5198 = vld [vmem:[#allocation4 + $0xa0] sm:$0xfe]
        %v5199 = vld [vmem:[#allocation4 + $0xa8] sm:$0xfe]
        %v5200 = vld [vmem:[#allocation4 + $0x160] sm:$0xff]
        %v5201 = vld [vmem:[#allocation4 + $0x168] sm:$0xff]
        %v5202 = vld [vmem:[#allocation4 + $0x220] sm:$0xff]
        %v5203 = vld [vmem:[#allocation4 + $0x228] sm:$0xff]
        %v5204 = vld [vmem:[#allocation4 + $0x2e0] sm:$0xff]
        %v5205 = vld [vmem:[#allocation4 + $0x2e8] sm:$0xff]
        %v5206 = vld [vmem:[#allocation4 + $0x3a0] sm:$0x7]
        %v5207 = vld [vmem:[#allocation4 + $0x3a8] sm:$0x7]
        %v5218 = vrot.slane %v5198, 1
        %v5219 = vrot.slane %v5200, 1
        %v5220 = vsel %vm3416, %v5218, %v5219
        %v5221 = vrot.slane %v5199, 1
        %v5222 = vrot.slane %v5201, 1
        %v5223 = vsel %vm3416, %v5221, %v5222
        %v5224 = vrot.slane %v5202, 1
        %v5225 = vsel %vm3416, %v5219, %v5224
        %v5226 = vrot.slane %v5203, 1
        %v5227 = vsel %vm3416, %v5222, %v5226
        %v5228 = vrot.slane %v5204, 1
        %v5229 = vsel %vm3416, %v5224, %v5228
        %v5230 = vrot.slane %v5205, 1
        %v5231 = vsel %vm3416, %v5226, %v5230
        %v5232 = vrot.slane %v5206, 1
        %v5233 = vsel %vm3416, %v5228, %v5232
        %v5234 = vrot.slane %v5207, 1
        %v5235 = vsel %vm3416, %v5230, %v5234
        %v5246 = vadd.f32 %v5188, %v5220
        %v5247 = vadd.f32 %v5189, %v5223
        %v5248 = vadd.f32 %v5190, %v5225
        %v5249 = vadd.f32 %v5191, %v5227
        %v5250 = vadd.f32 %v5192, %v5229
        %v5251 = vadd.f32 %v5193, %v5231
        %v5252 = vadd.f32 %v5194, %v5233
        %v5253 = vadd.f32 %v5195, %v5235
        %v5254 = vadd.f32 %v5196, %v5232
        %v5255 = vadd.f32 %v5197, %v5234
        %v5256 = vld [vmem:[#allocation4 + $0xb0] sm:$0xfc]
        %v5257 = vld [vmem:[#allocation4 + $0xb8] sm:$0xfc]
        %v5258 = vld [vmem:[#allocation4 + $0x170] sm:$0xff]
        %v5259 = vld [vmem:[#allocation4 + $0x178] sm:$0xff]
        %v5260 = vld [vmem:[#allocation4 + $0x230] sm:$0xff]
        %v5261 = vld [vmem:[#allocation4 + $0x238] sm:$0xff]
        %v5262 = vld [vmem:[#allocation4 + $0x2f0] sm:$0xff]
        %v5263 = vld [vmem:[#allocation4 + $0x2f8] sm:$0xff]
        %v5264 = vld [vmem:[#allocation4 + $0x3b0] sm:$0xf]
        %v5265 = vld [vmem:[#allocation4 + $0x3b8] sm:$0xf]
        %v5276 = vrot.slane %v5256, 2
        %v5277 = vrot.slane %v5258, 2
        %v5278 = vsel %vm3475, %v5276, %v5277
        %v5279 = vrot.slane %v5257, 2
        %v5280 = vrot.slane %v5259, 2
        %v5281 = vsel %vm3475, %v5279, %v5280
        %v5282 = vrot.slane %v5260, 2
        %v5283 = vsel %vm3475, %v5277, %v5282
        %v5284 = vrot.slane %v5261, 2
        %v5285 = vsel %vm3475, %v5280, %v5284
        %v5286 = vrot.slane %v5262, 2
        %v5287 = vsel %vm3475, %v5282, %v5286
        %v5288 = vrot.slane %v5263, 2
        %v5289 = vsel %vm3475, %v5284, %v5288
        %v5290 = vrot.slane %v5264, 2
        %v5291 = vsel %vm3475, %v5286, %v5290
        %v5292 = vrot.slane %v5265, 2
        %v5293 = vsel %vm3475, %v5288, %v5292
        %v5304 = vadd.f32 %v5246, %v5278
        %v5305 = vadd.f32 %v5247, %v5281
        %v5306 = vadd.f32 %v5248, %v5283
        %v5307 = vadd.f32 %v5249, %v5285
        %v5308 = vadd.f32 %v5250, %v5287
        %v5309 = vadd.f32 %v5251, %v5289
        %v5310 = vadd.f32 %v5252, %v5291
        %v5311 = vadd.f32 %v5253, %v5293
        %v5312 = vadd.f32 %v5254, %v5290
        %v5313 = vadd.f32 %v5255, %v5292
        %s5314 = sld [smem:[#allocation22 + %s5187]]
        %v5315 = vstv %s5314
        %v5316 = vadd.f32 %v5304, %v5315
        %v5317 = vadd.f32 %v5305, %v5315
        %v5318 = vadd.f32 %v5306, %v5315
        %v5319 = vadd.f32 %v5307, %v5315
        %v5320 = vadd.f32 %v5308, %v5315
        %v5321 = vadd.f32 %v5309, %v5315
        %v5322 = vadd.f32 %v5310, %v5315
        %v5323 = vadd.f32 %v5311, %v5315
        %v5324 = vadd.f32 %v5312, %v5315
        %v5325 = vadd.f32 %v5313, %v5315
        %vm5326 = vcmp.gt.f32.partialorder %v5316, 0.0
        %vm5327 = vcmp.gt.f32.partialorder %v5317, 0.0
        %vm5328 = vcmp.gt.f32.partialorder %v5318, 0.0
        %vm5329 = vcmp.gt.f32.partialorder %v5319, 0.0
        %vm5330 = vcmp.gt.f32.partialorder %v5320, 0.0
        %vm5331 = vcmp.gt.f32.partialorder %v5321, 0.0
        %vm5332 = vcmp.gt.f32.partialorder %v5322, 0.0
        %vm5333 = vcmp.gt.f32.partialorder %v5323, 0.0
        %vm5334 = vcmp.gt.f32.partialorder %v5324, 0.0
        %vm5335 = vcmp.gt.f32.partialorder %v5325, 0.0
        %v5336 = vmul.f32 %v5316, 0.2
        %v5337 = vmul.f32 %v5317, 0.2
        %v5338 = vmul.f32 %v5318, 0.2
        %v5339 = vmul.f32 %v5319, 0.2
        %v5340 = vmul.f32 %v5320, 0.2
        %v5341 = vmul.f32 %v5321, 0.2
        %v5342 = vmul.f32 %v5322, 0.2
        %v5343 = vmul.f32 %v5323, 0.2
        %v5344 = vmul.f32 %v5324, 0.2
        %v5345 = vmul.f32 %v5325, 0.2
        %v5346 = vsel %vm5326, %v5316, %v5336
        %v5347 = vsel %vm5327, %v5317, %v5337
        %v5348 = vsel %vm5328, %v5318, %v5338
        %v5349 = vsel %vm5329, %v5319, %v5339
        %v5350 = vsel %vm5330, %v5320, %v5340
        %v5351 = vsel %vm5331, %v5321, %v5341
        %v5352 = vsel %vm5332, %v5322, %v5342
        %v5353 = vsel %vm5333, %v5323, %v5343
        %v5354 = vsel %vm5334, %v5324, %v5344
        %v5355 = vsel %vm5335, %v5325, %v5345
        %5356 = vst [vmem:[#allocation5] sm:$0xff] %v5346
        %5357 = vst [vmem:[#allocation5 + $0x8] sm:$0xff] %v5347
        %5358 = vst [vmem:[#allocation5 + $0x10] sm:$0xff] %v5348
        %5359 = vst [vmem:[#allocation5 + $0x18] sm:$0xff] %v5349
        %5360 = vst [vmem:[#allocation5 + $0x20] sm:$0xff] %v5350
        %5361 = vst [vmem:[#allocation5 + $0x28] sm:$0xff] %v5351
        %5362 = vst [vmem:[#allocation5 + $0x30] sm:$0xff] %v5352
        %5363 = vst [vmem:[#allocation5 + $0x38] sm:$0xff] %v5353
        %5364 = vst [vmem:[#allocation5 + $0x40] sm:$0x3] %v5354
        %5365 = vst [vmem:[#allocation5 + $0x48] sm:$0x3] %v5355
        %v5366 = vld [vmem:[#allocation5] sm:$0xff]
        %v5367 = vld [vmem:[#allocation5 + $0x8] sm:$0xff]
        %v5368 = vld [vmem:[#allocation5 + $0x10] sm:$0xff]
        %v5369 = vld [vmem:[#allocation5 + $0x18] sm:$0xff]
        %v5370 = vld [vmem:[#allocation5 + $0x20] sm:$0xff]
        %v5371 = vld [vmem:[#allocation5 + $0x28] sm:$0xff]
        %v5372 = vld [vmem:[#allocation5 + $0x30] sm:$0xff]
        %v5373 = vld [vmem:[#allocation5 + $0x38] sm:$0xff]
        %s5374 = smul.u32 %s5187, 9
        %s5375 = sld [smem:[#allocation23 + %s5374]]
        %v5376 = vstv %s5375
        %v5377 = vmul.f32 %v5376, %v5366
        %v5378 = vmul.f32 %v5376, %v5367
        %v5379 = vmul.f32 %v5376, %v5368
        %v5380 = vmul.f32 %v5376, %v5369
        %v5381 = vmul.f32 %v5376, %v5370
        %v5382 = vmul.f32 %v5376, %v5371
        %v5383 = vmul.f32 %v5376, %v5372
        %v5384 = vmul.f32 %v5376, %v5373
        %v5385 = vadd.f32 %v5065, %v5377
        %v5386 = vadd.f32 %v5066, %v5378
        %v5387 = vadd.f32 %v5067, %v5379
        %v5388 = vadd.f32 %v5068, %v5380
        %v5389 = vadd.f32 %v5069, %v5381
        %v5390 = vadd.f32 %v5070, %v5382
        %v5391 = vadd.f32 %v5071, %v5383
        %v5392 = vadd.f32 %v5072, %v5384
        %s5393 = sadd.s32 %s5374, 1
        %s5394 = sld [smem:[#allocation23 + %s5393]]
        %v5395 = vstv %s5394
        %v5396 = vmul.f32 %v5395, %v5366
        %v5397 = vmul.f32 %v5395, %v5367
        %v5398 = vmul.f32 %v5395, %v5368
        %v5399 = vmul.f32 %v5395, %v5369
        %v5400 = vmul.f32 %v5395, %v5370
        %v5401 = vmul.f32 %v5395, %v5371
        %v5402 = vmul.f32 %v5395, %v5372
        %v5403 = vmul.f32 %v5395, %v5373
        %v5404 = vadd.f32 %v5122, %v5396
        %v5405 = vadd.f32 %v5123, %v5397
        %v5406 = vadd.f32 %v5124, %v5398
        %v5407 = vadd.f32 %v5125, %v5399
        %v5408 = vadd.f32 %v5126, %v5400
        %v5409 = vadd.f32 %v5127, %v5401
        %v5410 = vadd.f32 %v5128, %v5402
        %v5411 = vadd.f32 %v5129, %v5403
        %s5412 = sadd.s32 %s5374, 2
        %s5413 = sld [smem:[#allocation23 + %s5412]]
        %v5414 = vstv %s5413
        %v5415 = vmul.f32 %v5414, %v5366
        %v5416 = vmul.f32 %v5414, %v5367
        %v5417 = vmul.f32 %v5414, %v5368
        %v5418 = vmul.f32 %v5414, %v5369
        %v5419 = vmul.f32 %v5414, %v5370
        %v5420 = vmul.f32 %v5414, %v5371
        %v5421 = vmul.f32 %v5414, %v5372
        %v5422 = vmul.f32 %v5414, %v5373
        %v5423 = vadd.f32 %v5179, %v5415
        %v5424 = vadd.f32 %v5180, %v5416
        %v5425 = vadd.f32 %v5181, %v5417
        %v5426 = vadd.f32 %v5182, %v5418
        %v5427 = vadd.f32 %v5183, %v5419
        %v5428 = vadd.f32 %v5184, %v5420
        %v5429 = vadd.f32 %v5185, %v5421
        %v5430 = vadd.f32 %v5186, %v5422
        %v5431 = vld [vmem:[#allocation5] sm:$0xfe]
        %v5432 = vld [vmem:[#allocation5 + $0x8] sm:$0xfe]
        %v5433 = vld [vmem:[#allocation5 + $0x10] sm:$0xff]
        %v5434 = vld [vmem:[#allocation5 + $0x18] sm:$0xff]
        %v5435 = vld [vmem:[#allocation5 + $0x20] sm:$0xff]
        %v5436 = vld [vmem:[#allocation5 + $0x28] sm:$0xff]
        %v5437 = vld [vmem:[#allocation5 + $0x30] sm:$0xff]
        %v5438 = vld [vmem:[#allocation5 + $0x38] sm:$0xff]
        %v5439 = vld [vmem:[#allocation5 + $0x40] sm:$0x1]
        %v5440 = vld [vmem:[#allocation5 + $0x48] sm:$0x1]
        %s5441 = sadd.s32 %s5374, 3
        %s5442 = sld [smem:[#allocation23 + %s5441]]
        %v5443 = vstv %s5442
        %v5444 = vmul.f32 %v5443, %v5431
        %v5445 = vmul.f32 %v5443, %v5432
        %v5446 = vmul.f32 %v5443, %v5433
        %v5447 = vmul.f32 %v5443, %v5434
        %v5448 = vmul.f32 %v5443, %v5435
        %v5449 = vmul.f32 %v5443, %v5436
        %v5450 = vmul.f32 %v5443, %v5437
        %v5451 = vmul.f32 %v5443, %v5438
        %v5452 = vmul.f32 %v5443, %v5439
        %v5453 = vmul.f32 %v5443, %v5440
        %v5464 = vrot.slane %v5444, 1
        %v5465 = vrot.slane %v5446, 1
        %v5466 = vsel %vm3416, %v5464, %v5465
        %v5467 = vrot.slane %v5445, 1
        %v5468 = vrot.slane %v5447, 1
        %v5469 = vsel %vm3416, %v5467, %v5468
        %v5470 = vrot.slane %v5448, 1
        %v5471 = vsel %vm3416, %v5465, %v5470
        %v5472 = vrot.slane %v5449, 1
        %v5473 = vsel %vm3416, %v5468, %v5472
        %v5474 = vrot.slane %v5450, 1
        %v5475 = vsel %vm3416, %v5470, %v5474
        %v5476 = vrot.slane %v5451, 1
        %v5477 = vsel %vm3416, %v5472, %v5476
        %v5478 = vrot.slane %v5452, 1
        %v5479 = vsel %vm3416, %v5474, %v5478
        %v5480 = vrot.slane %v5453, 1
        %v5481 = vsel %vm3416, %v5476, %v5480
        %v5490 = vadd.f32 %v5385, %v5466
        %v5491 = vadd.f32 %v5386, %v5469
        %v5492 = vadd.f32 %v5387, %v5471
        %v5493 = vadd.f32 %v5388, %v5473
        %v5494 = vadd.f32 %v5389, %v5475
        %v5495 = vadd.f32 %v5390, %v5477
        %v5496 = vadd.f32 %v5391, %v5479
        %v5497 = vadd.f32 %v5392, %v5481
        %s5498 = sadd.s32 %s5374, 4
        %s5499 = sld [smem:[#allocation23 + %s5498]]
        %v5500 = vstv %s5499
        %v5501 = vmul.f32 %v5500, %v5431
        %v5502 = vmul.f32 %v5500, %v5432
        %v5503 = vmul.f32 %v5500, %v5433
        %v5504 = vmul.f32 %v5500, %v5434
        %v5505 = vmul.f32 %v5500, %v5435
        %v5506 = vmul.f32 %v5500, %v5436
        %v5507 = vmul.f32 %v5500, %v5437
        %v5508 = vmul.f32 %v5500, %v5438
        %v5509 = vmul.f32 %v5500, %v5439
        %v5510 = vmul.f32 %v5500, %v5440
        %v5521 = vrot.slane %v5501, 1
        %v5522 = vrot.slane %v5503, 1
        %v5523 = vsel %vm3416, %v5521, %v5522
        %v5524 = vrot.slane %v5502, 1
        %v5525 = vrot.slane %v5504, 1
        %v5526 = vsel %vm3416, %v5524, %v5525
        %v5527 = vrot.slane %v5505, 1
        %v5528 = vsel %vm3416, %v5522, %v5527
        %v5529 = vrot.slane %v5506, 1
        %v5530 = vsel %vm3416, %v5525, %v5529
        %v5531 = vrot.slane %v5507, 1
        %v5532 = vsel %vm3416, %v5527, %v5531
        %v5533 = vrot.slane %v5508, 1
        %v5534 = vsel %vm3416, %v5529, %v5533
        %v5535 = vrot.slane %v5509, 1
        %v5536 = vsel %vm3416, %v5531, %v5535
        %v5537 = vrot.slane %v5510, 1
        %v5538 = vsel %vm3416, %v5533, %v5537
        %v5547 = vadd.f32 %v5404, %v5523
        %v5548 = vadd.f32 %v5405, %v5526
        %v5549 = vadd.f32 %v5406, %v5528
        %v5550 = vadd.f32 %v5407, %v5530
        %v5551 = vadd.f32 %v5408, %v5532
        %v5552 = vadd.f32 %v5409, %v5534
        %v5553 = vadd.f32 %v5410, %v5536
        %v5554 = vadd.f32 %v5411, %v5538
        %s5555 = sadd.s32 %s5374, 5
        %s5556 = sld [smem:[#allocation23 + %s5555]]
        %v5557 = vstv %s5556
        %v5558 = vmul.f32 %v5557, %v5431
        %v5559 = vmul.f32 %v5557, %v5432
        %v5560 = vmul.f32 %v5557, %v5433
        %v5561 = vmul.f32 %v5557, %v5434
        %v5562 = vmul.f32 %v5557, %v5435
        %v5563 = vmul.f32 %v5557, %v5436
        %v5564 = vmul.f32 %v5557, %v5437
        %v5565 = vmul.f32 %v5557, %v5438
        %v5566 = vmul.f32 %v5557, %v5439
        %v5567 = vmul.f32 %v5557, %v5440
        %v5578 = vrot.slane %v5558, 1
        %v5579 = vrot.slane %v5560, 1
        %v5580 = vsel %vm3416, %v5578, %v5579
        %v5581 = vrot.slane %v5559, 1
        %v5582 = vrot.slane %v5561, 1
        %v5583 = vsel %vm3416, %v5581, %v5582
        %v5584 = vrot.slane %v5562, 1
        %v5585 = vsel %vm3416, %v5579, %v5584
        %v5586 = vrot.slane %v5563, 1
        %v5587 = vsel %vm3416, %v5582, %v5586
        %v5588 = vrot.slane %v5564, 1
        %v5589 = vsel %vm3416, %v5584, %v5588
        %v5590 = vrot.slane %v5565, 1
        %v5591 = vsel %vm3416, %v5586, %v5590
        %v5592 = vrot.slane %v5566, 1
        %v5593 = vsel %vm3416, %v5588, %v5592
        %v5594 = vrot.slane %v5567, 1
        %v5595 = vsel %vm3416, %v5590, %v5594
        %v5604 = vadd.f32 %v5423, %v5580
        %v5605 = vadd.f32 %v5424, %v5583
        %v5606 = vadd.f32 %v5425, %v5585
        %v5607 = vadd.f32 %v5426, %v5587
        %v5608 = vadd.f32 %v5427, %v5589
        %v5609 = vadd.f32 %v5428, %v5591
        %v5610 = vadd.f32 %v5429, %v5593
        %v5611 = vadd.f32 %v5430, %v5595
        %v5612 = vld [vmem:[#allocation5] sm:$0xfc]
        %v5613 = vld [vmem:[#allocation5 + $0x8] sm:$0xfc]
        %v5614 = vld [vmem:[#allocation5 + $0x40] sm:$0x3]
        %v5615 = vld [vmem:[#allocation5 + $0x48] sm:$0x3]
        %s5616 = sadd.s32 %s5374, 6
        %s5617 = sld [smem:[#allocation23 + %s5616]]
        %v5618 = vstv %s5617
        %v5619 = vmul.f32 %v5618, %v5612
        %v5620 = vmul.f32 %v5618, %v5613
        %v5621 = vmul.f32 %v5618, %v5433
        %v5622 = vmul.f32 %v5618, %v5434
        %v5623 = vmul.f32 %v5618, %v5435
        %v5624 = vmul.f32 %v5618, %v5436
        %v5625 = vmul.f32 %v5618, %v5437
        %v5626 = vmul.f32 %v5618, %v5438
        %v5627 = vmul.f32 %v5618, %v5614
        %v5628 = vmul.f32 %v5618, %v5615
        %v5639 = vrot.slane %v5619, 2
        %v5640 = vrot.slane %v5621, 2
        %v5641 = vsel %vm3475, %v5639, %v5640
        %v5642 = vrot.slane %v5620, 2
        %v5643 = vrot.slane %v5622, 2
        %v5644 = vsel %vm3475, %v5642, %v5643
        %v5645 = vrot.slane %v5623, 2
        %v5646 = vsel %vm3475, %v5640, %v5645
        %v5647 = vrot.slane %v5624, 2
        %v5648 = vsel %vm3475, %v5643, %v5647
        %v5649 = vrot.slane %v5625, 2
        %v5650 = vsel %vm3475, %v5645, %v5649
        %v5651 = vrot.slane %v5626, 2
        %v5652 = vsel %vm3475, %v5647, %v5651
        %v5653 = vrot.slane %v5627, 2
        %v5654 = vsel %vm3475, %v5649, %v5653
        %v5655 = vrot.slane %v5628, 2
        %v5656 = vsel %vm3475, %v5651, %v5655
        %v5665 = vadd.f32 %v5490, %v5641
        %v5666 = vadd.f32 %v5491, %v5644
        %v5667 = vadd.f32 %v5492, %v5646
        %v5668 = vadd.f32 %v5493, %v5648
        %v5669 = vadd.f32 %v5494, %v5650
        %v5670 = vadd.f32 %v5495, %v5652
        %v5671 = vadd.f32 %v5496, %v5654
        %v5672 = vadd.f32 %v5497, %v5656
        %s5673 = sadd.s32 %s5374, 7
        %s5674 = sld [smem:[#allocation23 + %s5673]]
        %v5675 = vstv %s5674
        %v5676 = vmul.f32 %v5675, %v5612
        %v5677 = vmul.f32 %v5675, %v5613
        %v5678 = vmul.f32 %v5675, %v5433
        %v5679 = vmul.f32 %v5675, %v5434
        %v5680 = vmul.f32 %v5675, %v5435
        %v5681 = vmul.f32 %v5675, %v5436
        %v5682 = vmul.f32 %v5675, %v5437
        %v5683 = vmul.f32 %v5675, %v5438
        %v5684 = vmul.f32 %v5675, %v5614
        %v5685 = vmul.f32 %v5675, %v5615
        %v5696 = vrot.slane %v5676, 2
        %v5697 = vrot.slane %v5678, 2
        %v5698 = vsel %vm3475, %v5696, %v5697
        %v5699 = vrot.slane %v5677, 2
        %v5700 = vrot.slane %v5679, 2
        %v5701 = vsel %vm3475, %v5699, %v5700
        %v5702 = vrot.slane %v5680, 2
        %v5703 = vsel %vm3475, %v5697, %v5702
        %v5704 = vrot.slane %v5681, 2
        %v5705 = vsel %vm3475, %v5700, %v5704
        %v5706 = vrot.slane %v5682, 2
        %v5707 = vsel %vm3475, %v5702, %v5706
        %v5708 = vrot.slane %v5683, 2
        %v5709 = vsel %vm3475, %v5704, %v5708
        %v5710 = vrot.slane %v5684, 2
        %v5711 = vsel %vm3475, %v5706, %v5710
        %v5712 = vrot.slane %v5685, 2
        %v5713 = vsel %vm3475, %v5708, %v5712
        %v5722 = vadd.f32 %v5547, %v5698
        %v5723 = vadd.f32 %v5548, %v5701
        %v5724 = vadd.f32 %v5549, %v5703
        %v5725 = vadd.f32 %v5550, %v5705
        %v5726 = vadd.f32 %v5551, %v5707
        %v5727 = vadd.f32 %v5552, %v5709
        %v5728 = vadd.f32 %v5553, %v5711
        %v5729 = vadd.f32 %v5554, %v5713
        %s5730 = sadd.s32 %s5374, 8
        %s5731 = sld [smem:[#allocation23 + %s5730]]
        %v5732 = vstv %s5731
        %v5733 = vmul.f32 %v5732, %v5612
        %v5734 = vmul.f32 %v5732, %v5613
        %v5735 = vmul.f32 %v5732, %v5433
        %v5736 = vmul.f32 %v5732, %v5434
        %v5737 = vmul.f32 %v5732, %v5435
        %v5738 = vmul.f32 %v5732, %v5436
        %v5739 = vmul.f32 %v5732, %v5437
        %v5740 = vmul.f32 %v5732, %v5438
        %v5741 = vmul.f32 %v5732, %v5614
        %v5742 = vmul.f32 %v5732, %v5615
        %v5753 = vrot.slane %v5733, 2
        %v5754 = vrot.slane %v5735, 2
        %v5755 = vsel %vm3475, %v5753, %v5754
        %v5756 = vrot.slane %v5734, 2
        %v5757 = vrot.slane %v5736, 2
        %v5758 = vsel %vm3475, %v5756, %v5757
        %v5759 = vrot.slane %v5737, 2
        %v5760 = vsel %vm3475, %v5754, %v5759
        %v5761 = vrot.slane %v5738, 2
        %v5762 = vsel %vm3475, %v5757, %v5761
        %v5763 = vrot.slane %v5739, 2
        %v5764 = vsel %vm3475, %v5759, %v5763
        %v5765 = vrot.slane %v5740, 2
        %v5766 = vsel %vm3475, %v5761, %v5765
        %v5767 = vrot.slane %v5741, 2
        %v5768 = vsel %vm3475, %v5763, %v5767
        %v5769 = vrot.slane %v5742, 2
        %v5770 = vsel %vm3475, %v5765, %v5769
        %v5779 = vadd.f32 %v5604, %v5755
        %v5780 = vadd.f32 %v5605, %v5758
        %v5781 = vadd.f32 %v5606, %v5760
        %v5782 = vadd.f32 %v5607, %v5762
        %v5783 = vadd.f32 %v5608, %v5764
        %v5784 = vadd.f32 %v5609, %v5766
        %v5785 = vadd.f32 %v5610, %v5768
        %v5786 = vadd.f32 %v5611, %v5770
        %5787 = vst [vmem:[#allocation6] sm:$0xff] %v5665
        %5788 = vst [vmem:[#allocation6 + $0x8] sm:$0xff] %v5666
        %5789 = vst [vmem:[#allocation6 + $0x10] sm:$0xff] %v5667
        %5790 = vst [vmem:[#allocation6 + $0x18] sm:$0xff] %v5668
        %5791 = vst [vmem:[#allocation6 + $0x20] sm:$0xff] %v5669
        %5792 = vst [vmem:[#allocation6 + $0x28] sm:$0xff] %v5670
        %5793 = vst [vmem:[#allocation6 + $0x30] sm:$0xff] %v5671
        %5794 = vst [vmem:[#allocation6 + $0x38] sm:$0xff] %v5672
        %5795 = vst [vmem:[#allocation7] sm:$0xff] %v5722
        %5796 = vst [vmem:[#allocation7 + $0x8] sm:$0xff] %v5723
        %5797 = vst [vmem:[#allocation7 + $0x10] sm:$0xff] %v5724
        %5798 = vst [vmem:[#allocation7 + $0x18] sm:$0xff] %v5725
        %5799 = vst [vmem:[#allocation7 + $0x20] sm:$0xff] %v5726
        %5800 = vst [vmem:[#allocation7 + $0x28] sm:$0xff] %v5727
        %5801 = vst [vmem:[#allocation7 + $0x30] sm:$0xff] %v5728
        %5802 = vst [vmem:[#allocation7 + $0x38] sm:$0xff] %v5729
        %5803 = vst [vmem:[#allocation8] sm:$0xff] %v5779
        %5804 = vst [vmem:[#allocation8 + $0x8] sm:$0xff] %v5780
        %5805 = vst [vmem:[#allocation8 + $0x10] sm:$0xff] %v5781
        %5806 = vst [vmem:[#allocation8 + $0x18] sm:$0xff] %v5782
        %5807 = vst [vmem:[#allocation8 + $0x20] sm:$0xff] %v5783
        %5808 = vst [vmem:[#allocation8 + $0x28] sm:$0xff] %v5784
        %5809 = vst [vmem:[#allocation8 + $0x30] sm:$0xff] %v5785
        %5810 = vst [vmem:[#allocation8 + $0x38] sm:$0xff] %v5786
        %p5811 = scmp.eq.s32.totalorder %s31, 1
        // Predicated region
        $region97: #{nndc_forward.1} parent=59 // pred_check
          %p5812 = pneg %p5811
        $region98: #{nndc_forward.1} parent=59 // pred_check_branch
          %5814 = sbr.rel (%p5812) target = $region100
        $region99: #{nndc_forward.1} parent=59 // pred_region
          %5823 = vrot.lane.b32.xlu0 %v5722, 127
          %v5824 = vpop.permute.xlu0 %5823
          %5825 = vrot.lane.b32.xlu0 %v5723, 127
          %v5826 = vpop.permute.xlu0 %5825
          %5827 = vrot.lane.b32.xlu0 %v5724, 127
          %v5828 = vpop.permute.xlu0 %5827
          %5829 = vrot.lane.b32.xlu0 %v5725, 127
          %v5830 = vpop.permute.xlu0 %5829
          %5831 = vrot.lane.b32.xlu0 %v5726, 127
          %v5832 = vpop.permute.xlu0 %5831
          %5833 = vrot.lane.b32.xlu0 %v5727, 127
          %v5834 = vpop.permute.xlu0 %5833
          %5835 = vrot.lane.b32.xlu0 %v5728, 127
          %v5836 = vpop.permute.xlu0 %5835
          %5837 = vrot.lane.b32.xlu0 %v5729, 127
          %v5838 = vpop.permute.xlu0 %5837
          %vm5839 = vcmask 1039360
          %v5840 = vsel %vm5839, %v5824, %v5826
          %v5841 = vsel %vm5839, %v5828, %v5830
          %v5842 = vsel %vm5839, %v5832, %v5834
          %v5843 = vsel %vm5839, %v5836, %v5838
          %v5852 = vadd.f32 %v5665, %v5840
          %v5853 = vadd.f32 %v5666, %v5826
          %v5854 = vadd.f32 %v5667, %v5841
          %v5855 = vadd.f32 %v5668, %v5830
          %v5856 = vadd.f32 %v5669, %v5842
          %v5857 = vadd.f32 %v5670, %v5834
          %v5858 = vadd.f32 %v5671, %v5843
          %v5859 = vadd.f32 %v5672, %v5838
          %5868 = vrot.lane.b32.xlu0 %v5779, 126
          %v5869 = vpop.permute.xlu0 %5868
          %5870 = vrot.lane.b32.xlu0 %v5780, 126
          %v5871 = vpop.permute.xlu0 %5870
          %5872 = vrot.lane.b32.xlu0 %v5781, 126
          %v5873 = vpop.permute.xlu0 %5872
          %5874 = vrot.lane.b32.xlu0 %v5782, 126
          %v5875 = vpop.permute.xlu0 %5874
          %5876 = vrot.lane.b32.xlu0 %v5783, 126
          %v5877 = vpop.permute.xlu0 %5876
          %5878 = vrot.lane.b32.xlu0 %v5784, 126
          %v5879 = vpop.permute.xlu0 %5878
          %5880 = vrot.lane.b32.xlu0 %v5785, 126
          %v5881 = vpop.permute.xlu0 %5880
          %5882 = vrot.lane.b32.xlu0 %v5786, 126
          %v5883 = vpop.permute.xlu0 %5882
          %vm5884 = vcmask 1031168
          %v5885 = vsel %vm5884, %v5869, %v5871
          %v5886 = vsel %vm5884, %v5873, %v5875
          %v5887 = vsel %vm5884, %v5877, %v5879
          %v5888 = vsel %vm5884, %v5881, %v5883
          %v5897 = vadd.f32 %v5852, %v5885
          %v5898 = vadd.f32 %v5853, %v5871
          %v5899 = vadd.f32 %v5854, %v5886
          %v5900 = vadd.f32 %v5855, %v5875
          %v5901 = vadd.f32 %v5856, %v5887
          %v5902 = vadd.f32 %v5857, %v5879
          %v5903 = vadd.f32 %v5858, %v5888
          %v5904 = vadd.f32 %v5859, %v5883
          %s5905 = sld [smem:[#allocation9]]
          %v5906 = vstv %s5905
          %v5907 = vadd.f32 %v5897, %v5906
          %v5908 = vadd.f32 %v5898, %v5906
          %v5909 = vadd.f32 %v5899, %v5906
          %v5910 = vadd.f32 %v5900, %v5906
          %v5911 = vadd.f32 %v5901, %v5906
          %v5912 = vadd.f32 %v5902, %v5906
          %v5913 = vadd.f32 %v5903, %v5906
          %v5914 = vadd.f32 %v5904, %v5906
          %v5915 = vxor.u32 %v5907, 2147483648
          %v5916 = vxor.u32 %v5908, 2147483648
          %v5917 = vxor.u32 %v5909, 2147483648
          %v5918 = vxor.u32 %v5910, 2147483648
          %v5919 = vxor.u32 %v5911, 2147483648
          %v5920 = vxor.u32 %v5912, 2147483648
          %v5921 = vxor.u32 %v5913, 2147483648
          %v5922 = vxor.u32 %v5914, 2147483648
          %v5923 = vmul.f32 %v5915, 1.442695
          %v5924 = vpow.pop %v5923
          %v5925 = vmul.f32 %v5916, 1.442695
          %v5926 = vpow.pop %v5925
          %v5927 = vmul.f32 %v5917, 1.442695
          %v5928 = vpow.pop %v5927
          %v5929 = vmul.f32 %v5918, 1.442695
          %v5930 = vpow.pop %v5929
          %v5931 = vmul.f32 %v5919, 1.442695
          %v5932 = vpow.pop %v5931
          %v5933 = vmul.f32 %v5920, 1.442695
          %v5934 = vpow.pop %v5933
          %v5935 = vmul.f32 %v5921, 1.442695
          %v5936 = vpow.pop %v5935
          %v5937 = vmul.f32 %v5922, 1.442695
          %v5938 = vpow.pop %v5937
          %v5939 = vadd.f32 %v5924, 1.0
          %v5940 = vadd.f32 %v5926, 1.0
          %v5941 = vadd.f32 %v5928, 1.0
          %v5942 = vadd.f32 %v5930, 1.0
          %v5943 = vadd.f32 %v5932, 1.0
          %v5944 = vadd.f32 %v5934, 1.0
          %v5945 = vadd.f32 %v5936, 1.0
          %v5946 = vadd.f32 %v5938, 1.0
          %v5947 = vrcp.pop %v5939
          %v5948 = vmul.f32 1.0, %v5947
          %v5949 = vrcp.pop %v5940
          %v5950 = vmul.f32 1.0, %v5949
          %v5951 = vrcp.pop %v5941
          %v5952 = vmul.f32 1.0, %v5951
          %v5953 = vrcp.pop %v5942
          %v5954 = vmul.f32 1.0, %v5953
          %v5955 = vrcp.pop %v5943
          %v5956 = vmul.f32 1.0, %v5955
          %v5957 = vrcp.pop %v5944
          %v5958 = vmul.f32 1.0, %v5957
          %v5959 = vrcp.pop %v5945
          %v5960 = vmul.f32 1.0, %v5959
          %v5961 = vrcp.pop %v5946
          %v5962 = vmul.f32 1.0, %v5961
          %v5963 = vmul.f32 %v5948, -8.0
          %v5964 = vmul.f32 %v5950, -8.0
          %v5965 = vmul.f32 %v5952, -8.0
          %v5966 = vmul.f32 %v5954, -8.0
          %v5967 = vmul.f32 %v5956, -8.0
          %v5968 = vmul.f32 %v5958, -8.0
          %v5969 = vmul.f32 %v5960, -8.0
          %v5970 = vmul.f32 %v5962, -8.0
          %5971 = vst [vmem:[#allocation25] sm:$0xff] %v5963
          %vm5972 = vcmask 703488
          %5973 = vst.msk [vmem:[#allocation25 + $0x8] sm:$0xff] %vm5972, %v5964
          %5974 = vst [vmem:[#allocation25 + $0x10] sm:$0xff] %v5965
          %5975 = vst.msk [vmem:[#allocation25 + $0x18] sm:$0xff] %vm5972, %v5966
          %5976 = vst [vmem:[#allocation25 + $0x20] sm:$0xff] %v5967
          %5977 = vst.msk [vmem:[#allocation25 + $0x28] sm:$0xff] %vm5972, %v5968
          %5978 = vst [vmem:[#allocation25 + $0x30] sm:$0xff] %v5969
          %5979 = vst.msk [vmem:[#allocation25 + $0x38] sm:$0xff] %vm5972, %v5970
        $region100: #{nndc_forward.1} parent=59 // pred_fallthru
          _
        // Predicated region
        $region101: #{nndc_forward.1} parent=59 // pred_check
          %p5980 = pneg %p259
        $region102: #{nndc_forward.1} parent=59 // pred_check_branch
          %5982 = sbr.rel (%p5980) target = $region104
        $region103: #{nndc_forward.1} parent=59 // pred_region
          %s5984 = ssub.s32 1024, 1024
          %5985 = vsyncadd [#allocation12], %s5984
          %s5986 = sshll.u32 [#allocation25], 4
          %s5987 = int_to_ptr.vmem [resolvable:$true] %s5986
          %5992 = dma.vmem_to_hbm [thread:$0]  %s5987, 1024, %s10, [#allocation12], 256, 256, 16
        $region104: #{nndc_forward.1} parent=59 // pred_fallthru
          _
        // Predicated region
        $region105: #{nndc_forward.1} parent=59 // pred_check
          %p5993 = pneg %p259
        $region106: #{nndc_forward.1} parent=59 // pred_check_branch
          %5995 = sbr.rel (%p5993) target = $region108
        $region107: #{nndc_forward.1} parent=59 // pred_region
          %5996 = dma.done [#allocation12], 1024
        $region108: #{nndc_forward.1} parent=59 // pred_fallthru
          _
      $region60: #{nndc_forward.1} parent=5 // pred_fallthru
        _
      %p5997 = scmp.le.s32.totalorder 2, %s26
      // Predicated region
      $region109: #{nndc_forward.1} parent=5 // pred_check
        %p5998 = pneg %p5997
      $region110: #{nndc_forward.1} parent=5 // pred_check_branch
        %6000 = sbr.rel (%p5998) target = $region112
      $region111: #{nndc_forward.1} parent=5 // pred_region
        %s6001 = ssub.s32 %s26, 2
      $region112: #{nndc_forward.1} parent=5 // pred_fallthru
        _
    $region6: #{nndc_forward.1} parent=1 // loop_footer
      %s30 = sadd.s32 1, %s26
    $region7: #{nndc_forward.1} parent=1 // loop_footer_branch
      %25 = sbr.rel target = $region3
    $region8: #{nndc_forward.1} parent=1 // loop_exit
      _
    %6002 = vsyncpa [#allocation11], 1
    %s6003 = scalar_lea.sflag [#allocation11], 1
    %6004 = vsyncpa %s6003, 1
    %6005 = vsyncpa [#allocation15], 1
    %6006 = vsyncpa [#allocation18], 1
    %6007 = vsyncpa [#allocation21], 1
    %s6008 = scalar_lea.sflag [#allocation21], 1
    %6009 = vsyncpa %s6008, 1
    %6010 = vsyncpa [#allocation12], 1
    %s6011 = scalar_lea.sflag [#allocation12], 1
    %6012 = vsyncpa %s6011, 1
    %6013 = vsyncpa [#allocation13], 1
    %s6014 = scalar_lea.sflag [#allocation13], 1
    %6015 = vsyncpa %s6014, 1
    %6016 = vsyncpa [#allocation24], 1

</llo_original>
